<compile_context>
chip_gen: v7x
topology: tpu7x:2x2x1
jax: 0.10.0
libtpu: 0.0.40
codegen_flags: <defaults>
</compile_context>

<pallas_src>
import functools
import math

import jax
import jax.numpy as jnp
from jax.experimental import pallas as pl
from jax.experimental.pallas import tpu as pltpu


def _gelu_exact(x):
    # Matches torch.nn.functional.gelu (approximate='none'): 0.5*x*(1+erf(x/sqrt(2)))
    return 0.5 * x * (1.0 + jax.lax.erf(x * (1.0 / math.sqrt(2.0))))


# ----------------------------------------------------------------------------------
# Kernels
# ----------------------------------------------------------------------------------
def star_kernel(x_ref, w1_ref, b1_ref, w2_ref, b2_ref, w3x_ref, w3c_ref, b3_ref,
                w4_ref, b4_ref, out_ref, *, C, C_pad, TB, exact):
    """Vectorised path: per-batch softmax/aggregate done on a (TB, C_pad, K) view."""
    TM, D = out_ref.shape
    xf = x_ref[...]                                               # (TM, D)

    # gen1 + GELU (f32 accumulate / activation).
    h1 = jnp.dot(xf, w1_ref[...], preferred_element_type=jnp.float32) + b1_ref[...]
    h1 = _gelu_exact(h1)

    # gen2 -> core (f32), kept entirely in registers (no scratch round trip).
    core = jnp.dot(h1.astype(w2_ref.dtype), w2_ref[...],
                   preferred_element_type=jnp.float32) + b2_ref[...]   # (TM, K)
    K = core.shape[-1]

    # Per-batch softmax over channels + weighted aggregation.  C_pad % 8 == 0 makes
    # (TM, K) -> (TB, C_pad, K) a layout-preserving leading-dim split.
    g = core.reshape(TB, C_pad, K)
    if C_pad != C:
        chan = jax.lax.broadcasted_iota(jnp.int32, (C_pad, K), 0)
        g = jnp.where((chan < C)[None, :, :], g, -1e30)           # pad channels -> e=0
    m = jnp.max(g, axis=1, keepdims=True)                         # (TB, 1, K)
    e = jnp.exp(g - m)                                            # (TB, C_pad, K)
    num = jnp.sum(g * e, axis=1)                                  # (TB, K)
    den = jnp.sum(e, axis=1)                                      # (TB, K)
    if exact:
        agg = num / den
    else:
        agg = num * pl.reciprocal(den, approx=True)               # EUP slot

    # gen3: d_series part on all rows; d_core part de-duplicated to one row per batch
    # and broadcast-added back to that batch's channel rows.
    h3 = jnp.dot(xf, w3x_ref[...], preferred_element_type=jnp.float32)       # (TM, D)
    core_part = jnp.dot(agg.astype(w3c_ref.dtype), w3c_ref[...],
                        preferred_element_type=jnp.float32)                  # (TB, D)
    h3 = (h3.reshape(TB, C_pad, D) + core_part[:, None, :]).reshape(TM, D)
    h3 = _gelu_exact(h3 + b3_ref[...])

    # gen4
    out = jnp.dot(h3.astype(w4_ref.dtype), w4_ref[...],
                  preferred_element_type=jnp.float32) + b4_ref[...]
    out_ref[...] = out.astype(out_ref.dtype)


def star_kernel_fallback(x_ref, w1_ref, b1_ref, w2_ref, b2_ref, w3x_ref, w3c_ref,
                         b3_ref, w4_ref, b4_ref, out_ref, core_ref, agg_ref, *,
                         C, C_pad, TB, exact):
    """Fallback (previously validated form): per-batch loop through VMEM scratch."""
    xf = x_ref[...]
    h1 = jnp.dot(xf, w1_ref[...], preferred_element_type=jnp.float32) + b1_ref[...]
    h1 = _gelu_exact(h1)
    core_ref[...] = jnp.dot(h1.astype(w2_ref.dtype), w2_ref[...],
                            preferred_element_type=jnp.float32) + b2_ref[...]
    K = core_ref.shape[-1]
    for t in range(TB):                                           # static unroll
        g = core_ref[pl.ds(t * C_pad, C), :]                      # real channels only
        mx = jnp.max(g, axis=0, keepdims=True)
        e = jnp.exp(g - mx)
        num = jnp.sum(g * e, axis=0, keepdims=True)
        den = jnp.sum(e, axis=0, keepdims=True)
        agg_t = num / den if exact else num * pl.reciprocal(den, approx=True)
        agg_ref[pl.ds(t * C_pad, C_pad), :] = jnp.broadcast_to(agg_t, (C_pad, K))
    h3 = jnp.dot(xf, w3x_ref[...], preferred_element_type=jnp.float32)
    h3 = h3 + jnp.dot(agg_ref[...].astype(w3c_ref.dtype), w3c_ref[...],
                      preferred_element_type=jnp.float32)
    h3 = _gelu_exact(h3 + b3_ref[...])
    out = jnp.dot(h3.astype(w4_ref.dtype), w4_ref[...],
                  preferred_element_type=jnp.float32) + b4_ref[...]
    out_ref[...] = out.astype(out_ref.dtype)


# ----------------------------------------------------------------------------------
# Tiling / VMEM budgeting
# ----------------------------------------------------------------------------------
def _vmem_budget():
    """(working-set budget, vmem_limit_bytes) derived from the part's VMEM size."""
    try:
        cap = int(pltpu.get_tpu_info().vmem_capacity_bytes)
    except Exception:
        cap = 0
    if cap <= 0:
        cap = 64 << 20                                   # conservative: v7x per-TC VMEM
    vmem_limit = max(32 << 20, min((cap * 3) // 4, 100 << 20))  # 48 MiB v7x / 96 MiB v6e
    budget = (cap * 11) // 20                            # ~55%: leave compiler headroom
    return budget, vmem_limit


def _pick_tb(B, C_pad, D, d_core, mm_item, out_item, sublane, budget,
             target_rows=1024):
    """Pick the batch tile TB (a divisor of B).

    Targets a flattened row block TM = TB*C_pad of ~target_rows rows (big MXU M,
    few grid steps), sublane aligned, inside the VMEM working-set budget and — when
    possible — with >=2 grid steps so both v7x TensorCores get work."""
    cands = []
    for tb in range(1, B + 1):
        if B % tb:
            continue
        tm = tb * C_pad
        if tm % sublane != 0 and tb != B:                # full-array block is exempt
            continue
        foot = (2 * tm * D * mm_item                     # x block, double buffered
                + 2 * tm * D * out_item                  # out block, double buffered
                + tm * (3 * D + 3 * d_core) * 4)         # f32 intermediates
        cands.append((tb, tm, foot))
    assert cands, "no legal batch tile"
    in_budget = [c for c in cands if c[2] <= budget]
    pool = in_budget if in_budget else cands[:1]         # smallest footprint fallback
    multi = [c for c in pool if B // c[0] >= 2]          # prefer >=2 grid steps (v7x)
    if multi:
        pool = multi
    tb, _, _ = min(pool, key=lambda c: (abs(c[1] - target_rows), -c[1]))
    return tb


# ----------------------------------------------------------------------------------
# Wrapper
# ----------------------------------------------------------------------------------
def star_forward(x, params, *, use_bf16=True):
    B, C, D = x.shape
    d_core = params["w2"].shape[1]
    out_dtype = x.dtype

    mm_dtype = jnp.bfloat16 if use_bf16 else jnp.float32
    mm_item = jnp.dtype(mm_dtype).itemsize
    out_item = jnp.dtype(out_dtype).itemsize
    sublane = 16 if mm_dtype == jnp.bfloat16 else 8

    # Pad channels up to a multiple of 8 so every batch's channel group is a clean
    # sublane-aligned split; padded channels are masked out of the softmax in-kernel
    # and their output rows are sliced away below.
    C_pad = -(-C // 8) * 8
    if C_pad != C:
        x = jnp.pad(x, ((0, 0), (0, C_pad - C), (0, 0)))

    w3 = params["w3"]
    w1 = params["w1"].astype(mm_dtype)
    w2 = params["w2"].astype(mm_dtype)
    w3x = w3[:D].astype(mm_dtype)                        # gen3 weight, d_series rows
    w3c = w3[D:].astype(mm_dtype)                        # gen3 weight, d_core rows
    w4 = params["w4"].astype(mm_dtype)
    b1 = params["b1"].astype(jnp.float32).reshape(1, D)
    b2 = params["b2"].astype(jnp.float32).reshape(1, d_core)
    b3 = params["b3"].astype(jnp.float32).reshape(1, D)
    b4 = params["b4"].astype(jnp.float32).reshape(1, D)

    xf = x.reshape(B * C_pad, D).astype(mm_dtype)        # flatten batch*channels

    weight_bytes = (3 * D * D + 2 * D * d_core) * mm_item + (3 * D + d_core) * 4
    budget, vmem_limit = _vmem_budget()
    TB = _pick_tb(B, C_pad, D, d_core, mm_item, out_item, sublane,
                  budget - weight_bytes)
    TM = TB * C_pad
    grid = (B // TB,)

    M = B * C_pad
    cost = pl.CostEstimate(
        flops=2 * M * D * (3 * D + d_core) + 2 * B * d_core * D,
        transcendentals=M * (2 * D + d_core),
        bytes_accessed=M * D * (mm_item + out_item) + weight_bytes,
    )

    def _call(vectorized, single_buffer_weights):
        kern = functools.partial(
            star_kernel if vectorized else star_kernel_fallback,
            C=C, C_pad=C_pad, TB=TB, exact=not use_bf16)
        scratch = [] if vectorized else [
            pltpu.VMEM((TM, d_core), jnp.float32),       # staged core
            pltpu.VMEM((TM, d_core), jnp.float32),       # redistributed aggregate
        ]

        def const_spec(shape):
            index_map = lambda i: (0,) * len(shape)
            if single_buffer_weights:
                try:   # weights are grid-invariant: fetch once, single buffer
                    return pl.BlockSpec(shape, index_map, pipeline_mode=pl.Buffered(1))
                except Exception:
                    pass
            return pl.BlockSpec(shape, index_map)

        return pl.pallas_call(
            kern,
            out_shape=jax.ShapeDtypeStruct((B * C_pad, D), out_dtype),
            grid=grid,
            in_specs=[
                pl.BlockSpec((TM, D), lambda i: (i, 0)),         # x rows (TB batches)
                const_spec((D, D)), const_spec((1, D)),          # gen1
                const_spec((D, d_core)), const_spec((1, d_core)),  # gen2
                const_spec((D, D)),                              # gen3, d_series part
                const_spec((d_core, D)), const_spec((1, D)),     # gen3, d_core part + b3
                const_spec((D, D)), const_spec((1, D)),          # gen4
            ],
            out_specs=pl.BlockSpec((TM, D), lambda i: (i, 0)),
            scratch_shapes=scratch,
            compiler_params=pltpu.CompilerParams(
                dimension_semantics=("parallel",),
                vmem_limit_bytes=vmem_limit,
            ),
            cost_estimate=cost,
        )(xf, w1, b1, w2, b2, w3x, w3c, b3, w4, b4)

    out2d = None
    err = None
    for vec, sbuf in ((True, True), (True, False), (False, False)):
        try:
            out2d = _call(vec, sbuf)
            break
        except Exception as e:                           # robustness fallback
            err = e
    if out2d is None:
        raise err

    out = out2d.reshape(B, C_pad, D)
    if C_pad != C:
        out = out[:, :C, :]
    return out, None


# ----------------------------------------------------------------------------------
# Reference + test
# ----------------------------------------------------------------------------------
def init_params(key, d_series, d_core):
    ks = jax.random.split(key, 8)
    s = 0.1
    return {
        "w1": s * jax.random.normal(ks[0], (d_series, d_series), jnp.float32),
        "b1": s * jax.random.normal(ks[1], (1, d_series), jnp.float32),
        "w2": s * jax.random.normal(ks[2], (d_series, d_core), jnp.float32),
        "b2": s * jax.random.normal(ks[3], (1, d_core), jnp.float32),
        "w3": s * jax.random.normal(ks[4], (d_series + d_core, d_series), jnp.float32),
        "b3": s * jax.random.normal(ks[5], (1, d_series), jnp.float32),
        "w4": s * jax.random.normal(ks[6], (d_series, d_series), jnp.float32),
        "b4": s * jax.random.normal(ks[7], (1, d_series), jnp.float32),
    }


def star_reference(x, params):
    # Pure-JAX reference of the eval-mode PyTorch forward.
    h = _gelu_exact(x @ params["w1"] + params["b1"])
    core = h @ params["w2"] + params["b2"]
    weight = jax.nn.softmax(core, axis=1)
    agg = jnp.sum(core * weight, axis=1, keepdims=True)
    agg = jnp.broadcast_to(agg, core.shape)
    cat = jnp.concatenate([x, agg], axis=-1)
    h3 = _gelu_exact(cat @ params["w3"] + params["b3"])
    return h3 @ params["w4"] + params["b4"]


if __name__ == "__main__":
    key = jax.random.PRNGKey(0)
    kx1, kp1, kx2, kp2 = jax.random.split(key, 4)

    def check(x, params, use_bf16, rtol, atol, tag):
        ref = star_reference(x, params)
        out, aux = star_forward(x, params, use_bf16=use_bf16)
        out = jax.block_until_ready(out)
        assert aux is None
        assert out.shape == x.shape
        assert jnp.allclose(out, ref, rtol=rtol, atol=atol), f"{tag}: mismatch vs ref"

    # Case 1: channels not a multiple of 8 -> exercises channel padding + softmax mask.
    B, C, d_series, d_core = 2, 4, 16, 8
    x1 = jax.random.normal(kx1, (B, C, d_series), jnp.float32)
    p1 = init_params(kp1, d_series, d_core)
    check(x1, p1, False, 1e-4, 1e-5, "f32/C=4")
    check(x1, p1, True, 5e-2, 5e-2, "bf16/C=4")

    # Case 2: aligned channels and a multi-step grid (>=2 row blocks).
    B, C, d_series, d_core = 4, 8, 16, 8
    x2 = jax.random.normal(kx2, (B, C, d_series), jnp.float32)
    p2 = init_params(kp2, d_series, d_core)
    check(x2, p2, False, 1e-4, 1e-5, "f32/C=8")
    check(x2, p2, True, 5e-2, 5e-2, "bf16/C=8")

    print("KERNEL_OK")
</pallas_src>

<mosaic_0001>
module attributes {stable_mosaic.version = 11 : i64} {
  func.func @star_kernel(%arg0: i32, %arg1: memref<8x16xf32, #tpu.memory_space<vmem>>, %arg2: memref<16x16xf32, #tpu.memory_space<vmem>>, %arg3: memref<1x16xf32, #tpu.memory_space<vmem>>, %arg4: memref<16x8xf32, #tpu.memory_space<vmem>>, %arg5: memref<1x8xf32, #tpu.memory_space<vmem>>, %arg6: memref<16x16xf32, #tpu.memory_space<vmem>>, %arg7: memref<8x16xf32, #tpu.memory_space<vmem>>, %arg8: memref<1x16xf32, #tpu.memory_space<vmem>>, %arg9: memref<16x16xf32, #tpu.memory_space<vmem>>, %arg10: memref<1x16xf32, #tpu.memory_space<vmem>>, %arg11: memref<8x16xf32, #tpu.memory_space<vmem>>) attributes {dimension_semantics = [#tpu.dimension_semantics<parallel>], iteration_bounds = array<i64: 2>, scalar_prefetch = 0 : i64, scratch_operands = 0 : i64, tpu.core_type = #tpu.core_type<tc>, window_params = [{transform_indices = @transform_0, window_bounds = array<i64: 8, 16>}, {pipeline_mode = #tpu.pipeline_mode<synchronous>, transform_indices = @transform_1, window_bounds = array<i64: 16, 16>}, {pipeline_mode = #tpu.pipeline_mode<synchronous>, transform_indices = @transform_2, window_bounds = array<i64: 1, 16>}, {pipeline_mode = #tpu.pipeline_mode<synchronous>, transform_indices = @transform_3, window_bounds = array<i64: 16, 8>}, {pipeline_mode = #tpu.pipeline_mode<synchronous>, transform_indices = @transform_4, window_bounds = array<i64: 1, 8>}, {pipeline_mode = #tpu.pipeline_mode<synchronous>, transform_indices = @transform_5, window_bounds = array<i64: 16, 16>}, {pipeline_mode = #tpu.pipeline_mode<synchronous>, transform_indices = @transform_6, window_bounds = array<i64: 8, 16>}, {pipeline_mode = #tpu.pipeline_mode<synchronous>, transform_indices = @transform_7, window_bounds = array<i64: 1, 16>}, {pipeline_mode = #tpu.pipeline_mode<synchronous>, transform_indices = @transform_8, window_bounds = array<i64: 16, 16>}, {pipeline_mode = #tpu.pipeline_mode<synchronous>, transform_indices = @transform_9, window_bounds = array<i64: 1, 16>}, {transform_indices = @transform_10, window_bounds = array<i64: 8, 16>}]} {
    %c0 = arith.constant 0 : index
    %c0_0 = arith.constant 0 : index
    %0 = vector.load %arg1[%c0, %c0_0] : memref<8x16xf32, #tpu.memory_space<vmem>>, vector<8x16xf32>
    %c0_1 = arith.constant 0 : index
    %c0_2 = arith.constant 0 : index
    %1 = vector.load %arg2[%c0_1, %c0_2] : memref<16x16xf32, #tpu.memory_space<vmem>>, vector<16x16xf32>
    %cst = arith.constant dense<0.000000e+00> : vector<8x16xf32>
    %2 = tpu.matmul %0, %1, %cst {dimension_numbers = #tpu.dot_dimension_numbers<[1], [0], [0], [1], [0, 0, 1, 1], [], []>} : vector<8x16xf32>, vector<16x16xf32>, vector<8x16xf32> -> vector<8x16xf32>
    %c0_3 = arith.constant 0 : index
    %c0_4 = arith.constant 0 : index
    %3 = vector.load %arg3[%c0_3, %c0_4] : memref<1x16xf32, #tpu.memory_space<vmem>>, vector<1x16xf32>
    %4 = vector.broadcast %3 : vector<1x16xf32> to vector<8x16xf32>
    %5 = arith.addf %2, %4 : vector<8x16xf32>
    %cst_5 = arith.constant 5.000000e-01 : f32
    %6 = vector.broadcast %cst_5 : f32 to vector<8x16xf32>
    %7 = arith.mulf %6, %5 : vector<8x16xf32>
    %cst_6 = arith.constant 0.707106769 : f32
    %8 = vector.broadcast %cst_6 : f32 to vector<8x16xf32>
    %9 = arith.mulf %5, %8 : vector<8x16xf32>
    %10 = math.erf %9 : vector<8x16xf32>
    %cst_7 = arith.constant 1.000000e+00 : f32
    %11 = vector.broadcast %cst_7 : f32 to vector<8x16xf32>
    %12 = arith.addf %11, %10 : vector<8x16xf32>
    %13 = arith.mulf %7, %12 : vector<8x16xf32>
    %c0_8 = arith.constant 0 : index
    %c0_9 = arith.constant 0 : index
    %14 = vector.load %arg4[%c0_8, %c0_9] : memref<16x8xf32, #tpu.memory_space<vmem>>, vector<16x8xf32>
    %cst_10 = arith.constant dense<0.000000e+00> : vector<8x8xf32>
    %15 = tpu.matmul %13, %14, %cst_10 {dimension_numbers = #tpu.dot_dimension_numbers<[1], [0], [0], [1], [0, 0, 1, 1], [], []>} : vector<8x16xf32>, vector<16x8xf32>, vector<8x8xf32> -> vector<8x8xf32>
    %c0_11 = arith.constant 0 : index
    %c0_12 = arith.constant 0 : index
    %16 = vector.load %arg5[%c0_11, %c0_12] : memref<1x8xf32, #tpu.memory_space<vmem>>, vector<1x8xf32>
    %17 = vector.broadcast %16 : vector<1x8xf32> to vector<8x8xf32>
    %18 = arith.addf %15, %17 : vector<8x8xf32>
    %19 = vector.shape_cast %18 : vector<8x8xf32> to vector<1x8x8xf32>
    %20 = tpu.iota {dimensions = array<i32: 0>} : vector<8x8xi32>
    %c4_i32 = arith.constant 4 : i32
    %21 = vector.broadcast %c4_i32 : i32 to vector<8x8xi32>
    %22 = arith.cmpi slt, %20, %21 : vector<8x8xi32>
    %23 = vector.shape_cast %22 : vector<8x8xi1> to vector<1x8x8xi1>
    %cst_13 = arith.constant -1.000000e+30 : f32
    %24 = vector.broadcast %cst_13 : f32 to vector<1x8x8xf32>
    %25 = arith.select %23, %19, %24 : vector<1x8x8xi1>, vector<1x8x8xf32>
    %cst_14 = arith.constant dense<0xFF800000> : vector<1x8xf32>
    %26 = vector.multi_reduction <maximumf>, %25, %cst_14 [1] : vector<1x8x8xf32> to vector<1x8xf32>
    %27 = vector.shape_cast %26 : vector<1x8xf32> to vector<1x1x8xf32>
    %28 = vector.broadcast %27 : vector<1x1x8xf32> to vector<1x8x8xf32>
    %29 = arith.subf %25, %28 : vector<1x8x8xf32>
    %30 = math.exp %29 : vector<1x8x8xf32>
    %31 = arith.mulf %25, %30 : vector<1x8x8xf32>
    %cst_15 = arith.constant dense<0.000000e+00> : vector<1x8xf32>
    %32 = vector.multi_reduction <add>, %31, %cst_15 [1] : vector<1x8x8xf32> to vector<1x8xf32>
    %cst_16 = arith.constant dense<0.000000e+00> : vector<1x8xf32>
    %33 = vector.multi_reduction <add>, %30, %cst_16 [1] : vector<1x8x8xf32> to vector<1x8xf32>
    %34 = arith.divf %32, %33 : vector<1x8xf32>
    %c0_17 = arith.constant 0 : index
    %c0_18 = arith.constant 0 : index
    %35 = vector.load %arg6[%c0_17, %c0_18] : memref<16x16xf32, #tpu.memory_space<vmem>>, vector<16x16xf32>
    %cst_19 = arith.constant dense<0.000000e+00> : vector<8x16xf32>
    %36 = tpu.matmul %0, %35, %cst_19 {dimension_numbers = #tpu.dot_dimension_numbers<[1], [0], [0], [1], [0, 0, 1, 1], [], []>} : vector<8x16xf32>, vector<16x16xf32>, vector<8x16xf32> -> vector<8x16xf32>
    %c0_20 = arith.constant 0 : index
    %c0_21 = arith.constant 0 : index
    %37 = vector.load %arg7[%c0_20, %c0_21] : memref<8x16xf32, #tpu.memory_space<vmem>>, vector<8x16xf32>
    %cst_22 = arith.constant dense<0.000000e+00> : vector<1x16xf32>
    %38 = tpu.matmul %34, %37, %cst_22 {dimension_numbers = #tpu.dot_dimension_numbers<[1], [0], [0], [1], [0, 0, 1, 1], [], []>} : vector<1x8xf32>, vector<8x16xf32>, vector<1x16xf32> -> vector<1x16xf32>
    %39 = vector.shape_cast %36 : vector<8x16xf32> to vector<1x8x16xf32>
    %40 = vector.shape_cast %38 : vector<1x16xf32> to vector<1x1x16xf32>
    %41 = vector.broadcast %40 : vector<1x1x16xf32> to vector<1x8x16xf32>
    %42 = arith.addf %39, %41 : vector<1x8x16xf32>
    %43 = vector.shape_cast %42 : vector<1x8x16xf32> to vector<8x16xf32>
    %c0_23 = arith.constant 0 : index
    %c0_24 = arith.constant 0 : index
    %44 = vector.load %arg8[%c0_23, %c0_24] : memref<1x16xf32, #tpu.memory_space<vmem>>, vector<1x16xf32>
    %45 = vector.broadcast %44 : vector<1x16xf32> to vector<8x16xf32>
    %46 = arith.addf %43, %45 : vector<8x16xf32>
    %cst_25 = arith.constant 5.000000e-01 : f32
    %47 = vector.broadcast %cst_25 : f32 to vector<8x16xf32>
    %48 = arith.mulf %47, %46 : vector<8x16xf32>
    %cst_26 = arith.constant 0.707106769 : f32
    %49 = vector.broadcast %cst_26 : f32 to vector<8x16xf32>
    %50 = arith.mulf %46, %49 : vector<8x16xf32>
    %51 = math.erf %50 : vector<8x16xf32>
    %cst_27 = arith.constant 1.000000e+00 : f32
    %52 = vector.broadcast %cst_27 : f32 to vector<8x16xf32>
    %53 = arith.addf %52, %51 : vector<8x16xf32>
    %54 = arith.mulf %48, %53 : vector<8x16xf32>
    %c0_28 = arith.constant 0 : index
    %c0_29 = arith.constant 0 : index
    %55 = vector.load %arg9[%c0_28, %c0_29] : memref<16x16xf32, #tpu.memory_space<vmem>>, vector<16x16xf32>
    %cst_30 = arith.constant dense<0.000000e+00> : vector<8x16xf32>
    %56 = tpu.matmul %54, %55, %cst_30 {dimension_numbers = #tpu.dot_dimension_numbers<[1], [0], [0], [1], [0, 0, 1, 1], [], []>} : vector<8x16xf32>, vector<16x16xf32>, vector<8x16xf32> -> vector<8x16xf32>
    %c0_31 = arith.constant 0 : index
    %c0_32 = arith.constant 0 : index
    %57 = vector.load %arg10[%c0_31, %c0_32] : memref<1x16xf32, #tpu.memory_space<vmem>>, vector<1x16xf32>
    %58 = vector.broadcast %57 : vector<1x16xf32> to vector<8x16xf32>
    %59 = arith.addf %56, %58 : vector<8x16xf32>
    %c0_33 = arith.constant 0 : index
    %c0_34 = arith.constant 0 : index
    %60 = vector.load %arg11[%c0_33, %c0_34] : memref<8x16xf32, #tpu.memory_space<vmem>>, vector<8x16xf32>
    tpu.vector_store %arg11[%c0_33, %c0_34], %59 {strides = array<i32>} : memref<8x16xf32, #tpu.memory_space<vmem>>, vector<8x16xf32>,
    return
  }
  func.func @transform_0(%arg0: i32) -> (i32, i32) {
    %c0_i32 = arith.constant 0 : i32
    %c0_i32_0 = arith.constant 0 : i32
    return %arg0, %c0_i32 : i32, i32
  }
  func.func @transform_1(%arg0: i32) -> (i32, i32) {
    %c0_i32 = arith.constant 0 : i32
    %c0_i32_0 = arith.constant 0 : i32
    %c0_i32_1 = arith.constant 0 : i32
    return %c0_i32, %c0_i32_0 : i32, i32
  }
  func.func @transform_2(%arg0: i32) -> (i32, i32) {
    %c0_i32 = arith.constant 0 : i32
    %c0_i32_0 = arith.constant 0 : i32
    %c0_i32_1 = arith.constant 0 : i32
    return %c0_i32, %c0_i32_0 : i32, i32
  }
  func.func @transform_3(%arg0: i32) -> (i32, i32) {
    %c0_i32 = arith.constant 0 : i32
    %c0_i32_0 = arith.constant 0 : i32
    %c0_i32_1 = arith.constant 0 : i32
    return %c0_i32, %c0_i32_0 : i32, i32
  }
  func.func @transform_4(%arg0: i32) -> (i32, i32) {
    %c0_i32 = arith.constant 0 : i32
    %c0_i32_0 = arith.constant 0 : i32
    %c0_i32_1 = arith.constant 0 : i32
    return %c0_i32, %c0_i32_0 : i32, i32
  }
  func.func @transform_5(%arg0: i32) -> (i32, i32) {
    %c0_i32 = arith.constant 0 : i32
    %c0_i32_0 = arith.constant 0 : i32
    %c0_i32_1 = arith.constant 0 : i32
    return %c0_i32, %c0_i32_0 : i32, i32
  }
  func.func @transform_6(%arg0: i32) -> (i32, i32) {
    %c0_i32 = arith.constant 0 : i32
    %c0_i32_0 = arith.constant 0 : i32
    %c0_i32_1 = arith.constant 0 : i32
    return %c0_i32, %c0_i32_0 : i32, i32
  }
  func.func @transform_7(%arg0: i32) -> (i32, i32) {
    %c0_i32 = arith.constant 0 : i32
    %c0_i32_0 = arith.constant 0 : i32
    %c0_i32_1 = arith.constant 0 : i32
    return %c0_i32, %c0_i32_0 : i32, i32
  }
  func.func @transform_8(%arg0: i32) -> (i32, i32) {
    %c0_i32 = arith.constant 0 : i32
    %c0_i32_0 = arith.constant 0 : i32
    %c0_i32_1 = arith.constant 0 : i32
    return %c0_i32, %c0_i32_0 : i32, i32
  }
  func.func @transform_9(%arg0: i32) -> (i32, i32) {
    %c0_i32 = arith.constant 0 : i32
    %c0_i32_0 = arith.constant 0 : i32
    %c0_i32_1 = arith.constant 0 : i32
    return %c0_i32, %c0_i32_0 : i32, i32
  }
  func.func @transform_10(%arg0: i32) -> (i32, i32) {
    %c0_i32 = arith.constant 0 : i32
    %c0_i32_0 = arith.constant 0 : i32
    return %arg0, %c0_i32 : i32, i32
  }
}

module attributes {stable_mosaic.version = 11 : i64} {
  func.func @star_kernel(%arg0: i32, %arg1: memref<8x16xf32, #tpu.memory_space<vmem>>, %arg2: memref<16x16xf32, #tpu.memory_space<vmem>>, %arg3: memref<1x16xf32, #tpu.memory_space<vmem>>, %arg4: memref<16x8xf32, #tpu.memory_space<vmem>>, %arg5: memref<1x8xf32, #tpu.memory_space<vmem>>, %arg6: memref<16x16xf32, #tpu.memory_space<vmem>>, %arg7: memref<8x16xf32, #tpu.memory_space<vmem>>, %arg8: memref<1x16xf32, #tpu.memory_space<vmem>>, %arg9: memref<16x16xf32, #tpu.memory_space<vmem>>, %arg10: memref<1x16xf32, #tpu.memory_space<vmem>>, %arg11: memref<8x16xf32, #tpu.memory_space<vmem>>) attributes {dimension_semantics = [#tpu.dimension_semantics<parallel>], iteration_bounds = array<i64: 2>, scalar_prefetch = 0 : i64, scratch_operands = 0 : i64, tpu.core_type = #tpu.core_type<tc>, window_params = [{transform_indices = @transform_0, window_bounds = array<i64: 8, 16>}, {pipeline_mode = #tpu.pipeline_mode<synchronous>, transform_indices = @transform_1, window_bounds = array<i64: 16, 16>}, {pipeline_mode = #tpu.pipeline_mode<synchronous>, transform_indices = @transform_2, window_bounds = array<i64: 1, 16>}, {pipeline_mode = #tpu.pipeline_mode<synchronous>, transform_indices = @transform_3, window_bounds = array<i64: 16, 8>}, {pipeline_mode = #tpu.pipeline_mode<synchronous>, transform_indices = @transform_4, window_bounds = array<i64: 1, 8>}, {pipeline_mode = #tpu.pipeline_mode<synchronous>, transform_indices = @transform_5, window_bounds = array<i64: 16, 16>}, {pipeline_mode = #tpu.pipeline_mode<synchronous>, transform_indices = @transform_6, window_bounds = array<i64: 8, 16>}, {pipeline_mode = #tpu.pipeline_mode<synchronous>, transform_indices = @transform_7, window_bounds = array<i64: 1, 16>}, {pipeline_mode = #tpu.pipeline_mode<synchronous>, transform_indices = @transform_8, window_bounds = array<i64: 16, 16>}, {pipeline_mode = #tpu.pipeline_mode<synchronous>, transform_indices = @transform_9, window_bounds = array<i64: 1, 16>}, {transform_indices = @transform_10, window_bounds = array<i64: 8, 16>}]} {
    %c0 = arith.constant 0 : index
    %c0_0 = arith.constant 0 : index
    %0 = vector.load %arg1[%c0, %c0_0] : memref<8x16xf32, #tpu.memory_space<vmem>>, vector<8x16xf32>
    %c0_1 = arith.constant 0 : index
    %c0_2 = arith.constant 0 : index
    %1 = vector.load %arg2[%c0_1, %c0_2] : memref<16x16xf32, #tpu.memory_space<vmem>>, vector<16x16xf32>
    %cst = arith.constant dense<0.000000e+00> : vector<8x16xf32>
    %2 = tpu.matmul %0, %1, %cst {dimension_numbers = #tpu.dot_dimension_numbers<[1], [0], [0], [1], [0, 0, 1, 1], [], []>} : vector<8x16xf32>, vector<16x16xf32>, vector<8x16xf32> -> vector<8x16xf32>
    %c0_3 = arith.constant 0 : index
    %c0_4 = arith.constant 0 : index
    %3 = vector.load %arg3[%c0_3, %c0_4] : memref<1x16xf32, #tpu.memory_space<vmem>>, vector<1x16xf32>
    %4 = vector.broadcast %3 : vector<1x16xf32> to vector<8x16xf32>
    %5 = arith.addf %2, %4 : vector<8x16xf32>
    %cst_5 = arith.constant 5.000000e-01 : f32
    %6 = vector.broadcast %cst_5 : f32 to vector<8x16xf32>
    %7 = arith.mulf %6, %5 : vector<8x16xf32>
    %cst_6 = arith.constant 0.707106769 : f32
    %8 = vector.broadcast %cst_6 : f32 to vector<8x16xf32>
    %9 = arith.mulf %5, %8 : vector<8x16xf32>
    %10 = math.erf %9 : vector<8x16xf32>
    %cst_7 = arith.constant 1.000000e+00 : f32
    %11 = vector.broadcast %cst_7 : f32 to vector<8x16xf32>
    %12 = arith.addf %11, %10 : vector<8x16xf32>
    %13 = arith.mulf %7, %12 : vector<8x16xf32>
    %c0_8 = arith.constant 0 : index
    %c0_9 = arith.constant 0 : index
    %14 = vector.load %arg4[%c0_8, %c0_9] : memref<16x8xf32, #tpu.memory_space<vmem>>, vector<16x8xf32>
    %cst_10 = arith.constant dense<0.000000e+00> : vector<8x8xf32>
    %15 = tpu.matmul %13, %14, %cst_10 {dimension_numbers = #tpu.dot_dimension_numbers<[1], [0], [0], [1], [0, 0, 1, 1], [], []>} : vector<8x16xf32>, vector<16x8xf32>, vector<8x8xf32> -> vector<8x8xf32>
    %c0_11 = arith.constant 0 : index
    %c0_12 = arith.constant 0 : index
    %16 = vector.load %arg5[%c0_11, %c0_12] : memref<1x8xf32, #tpu.memory_space<vmem>>, vector<1x8xf32>
    %17 = vector.broadcast %16 : vector<1x8xf32> to vector<8x8xf32>
    %18 = arith.addf %15, %17 : vector<8x8xf32>
    %19 = vector.shape_cast %18 : vector<8x8xf32> to vector<1x8x8xf32>
    %20 = tpu.iota {dimensions = array<i32: 0>} : vector<8x8xi32>
    %c4_i32 = arith.constant 4 : i32
    %21 = vector.broadcast %c4_i32 : i32 to vector<8x8xi32>
    %22 = arith.cmpi slt, %20, %21 : vector<8x8xi32>
    %23 = vector.shape_cast %22 : vector<8x8xi1> to vector<1x8x8xi1>
    %cst_13 = arith.constant -1.000000e+30 : f32
    %24 = vector.broadcast %cst_13 : f32 to vector<1x8x8xf32>
    %25 = arith.select %23, %19, %24 : vector<1x8x8xi1>, vector<1x8x8xf32>
    %cst_14 = arith.constant dense<0xFF800000> : vector<1x8xf32>
    %26 = vector.multi_reduction <maximumf>, %25, %cst_14 [1] : vector<1x8x8xf32> to vector<1x8xf32>
    %27 = vector.shape_cast %26 : vector<1x8xf32> to vector<1x1x8xf32>
    %28 = vector.broadcast %27 : vector<1x1x8xf32> to vector<1x8x8xf32>
    %29 = arith.subf %25, %28 : vector<1x8x8xf32>
    %30 = math.exp %29 : vector<1x8x8xf32>
    %31 = arith.mulf %25, %30 : vector<1x8x8xf32>
    %cst_15 = arith.constant dense<0.000000e+00> : vector<1x8xf32>
    %32 = vector.multi_reduction <add>, %31, %cst_15 [1] : vector<1x8x8xf32> to vector<1x8xf32>
    %cst_16 = arith.constant dense<0.000000e+00> : vector<1x8xf32>
    %33 = vector.multi_reduction <add>, %30, %cst_16 [1] : vector<1x8x8xf32> to vector<1x8xf32>
    %34 = arith.divf %32, %33 : vector<1x8xf32>
    %c0_17 = arith.constant 0 : index
    %c0_18 = arith.constant 0 : index
    %35 = vector.load %arg6[%c0_17, %c0_18] : memref<16x16xf32, #tpu.memory_space<vmem>>, vector<16x16xf32>
    %cst_19 = arith.constant dense<0.000000e+00> : vector<8x16xf32>
    %36 = tpu.matmul %0, %35, %cst_19 {dimension_numbers = #tpu.dot_dimension_numbers<[1], [0], [0], [1], [0, 0, 1, 1], [], []>} : vector<8x16xf32>, vector<16x16xf32>, vector<8x16xf32> -> vector<8x16xf32>
    %c0_20 = arith.constant 0 : index
    %c0_21 = arith.constant 0 : index
    %37 = vector.load %arg7[%c0_20, %c0_21] : memref<8x16xf32, #tpu.memory_space<vmem>>, vector<8x16xf32>
    %cst_22 = arith.constant dense<0.000000e+00> : vector<1x16xf32>
    %38 = tpu.matmul %34, %37, %cst_22 {dimension_numbers = #tpu.dot_dimension_numbers<[1], [0], [0], [1], [0, 0, 1, 1], [], []>} : vector<1x8xf32>, vector<8x16xf32>, vector<1x16xf32> -> vector<1x16xf32>
    %39 = vector.shape_cast %36 : vector<8x16xf32> to vector<1x8x16xf32>
    %40 = vector.shape_cast %38 : vector<1x16xf32> to vector<1x1x16xf32>
    %41 = vector.broadcast %40 : vector<1x1x16xf32> to vector<1x8x16xf32>
    %42 = arith.addf %39, %41 : vector<1x8x16xf32>
    %43 = vector.shape_cast %42 : vector<1x8x16xf32> to vector<8x16xf32>
    %c0_23 = arith.constant 0 : index
    %c0_24 = arith.constant 0 : index
    %44 = vector.load %arg8[%c0_23, %c0_24] : memref<1x16xf32, #tpu.memory_space<vmem>>, vector<1x16xf32>
    %45 = vector.broadcast %44 : vector<1x16xf32> to vector<8x16xf32>
    %46 = arith.addf %43, %45 : vector<8x16xf32>
    %cst_25 = arith.constant 5.000000e-01 : f32
    %47 = vector.broadcast %cst_25 : f32 to vector<8x16xf32>
    %48 = arith.mulf %47, %46 : vector<8x16xf32>
    %cst_26 = arith.constant 0.707106769 : f32
    %49 = vector.broadcast %cst_26 : f32 to vector<8x16xf32>
    %50 = arith.mulf %46, %49 : vector<8x16xf32>
    %51 = math.erf %50 : vector<8x16xf32>
    %cst_27 = arith.constant 1.000000e+00 : f32
    %52 = vector.broadcast %cst_27 : f32 to vector<8x16xf32>
    %53 = arith.addf %52, %51 : vector<8x16xf32>
    %54 = arith.mulf %48, %53 : vector<8x16xf32>
    %c0_28 = arith.constant 0 : index
    %c0_29 = arith.constant 0 : index
    %55 = vector.load %arg9[%c0_28, %c0_29] : memref<16x16xf32, #tpu.memory_space<vmem>>, vector<16x16xf32>
    %cst_30 = arith.constant dense<0.000000e+00> : vector<8x16xf32>
    %56 = tpu.matmul %54, %55, %cst_30 {dimension_numbers = #tpu.dot_dimension_numbers<[1], [0], [0], [1], [0, 0, 1, 1], [], []>} : vector<8x16xf32>, vector<16x16xf32>, vector<8x16xf32> -> vector<8x16xf32>
    %c0_31 = arith.constant 0 : index
    %c0_32 = arith.constant 0 : index
    %57 = vector.load %arg10[%c0_31, %c0_32] : memref<1x16xf32, #tpu.memory_space<vmem>>, vector<1x16xf32>
    %58 = vector.broadcast %57 : vector<1x16xf32> to vector<8x16xf32>
    %59 = arith.addf %56, %58 : vector<8x16xf32>
    %c0_33 = arith.constant 0 : index
    %c0_34 = arith.constant 0 : index
    %60 = vector.load %arg11[%c0_33, %c0_34] : memref<8x16xf32, #tpu.memory_space<vmem>>, vector<8x16xf32>
    tpu.vector_store %arg11[%c0_33, %c0_34], %59 {strides = array<i32>} : memref<8x16xf32, #tpu.memory_space<vmem>>, vector<8x16xf32>,
    return
  }
  func.func @transform_0(%arg0: i32) -> (i32, i32) {
    %c0_i32 = arith.constant 0 : i32
    %c0_i32_0 = arith.constant 0 : i32
    return %arg0, %c0_i32 : i32, i32
  }
  func.func @transform_1(%arg0: i32) -> (i32, i32) {
    %c0_i32 = arith.constant 0 : i32
    %c0_i32_0 = arith.constant 0 : i32
    %c0_i32_1 = arith.constant 0 : i32
    return %c0_i32, %c0_i32_0 : i32, i32
  }
  func.func @transform_2(%arg0: i32) -> (i32, i32) {
    %c0_i32 = arith.constant 0 : i32
    %c0_i32_0 = arith.constant 0 : i32
    %c0_i32_1 = arith.constant 0 : i32
    return %c0_i32, %c0_i32_0 : i32, i32
  }
  func.func @transform_3(%arg0: i32) -> (i32, i32) {
    %c0_i32 = arith.constant 0 : i32
    %c0_i32_0 = arith.constant 0 : i32
    %c0_i32_1 = arith.constant 0 : i32
    return %c0_i32, %c0_i32_0 : i32, i32
  }
  func.func @transform_4(%arg0: i32) -> (i32, i32) {
    %c0_i32 = arith.constant 0 : i32
    %c0_i32_0 = arith.constant 0 : i32
    %c0_i32_1 = arith.constant 0 : i32
    return %c0_i32, %c0_i32_0 : i32, i32
  }
  func.func @transform_5(%arg0: i32) -> (i32, i32) {
    %c0_i32 = arith.constant 0 : i32
    %c0_i32_0 = arith.constant 0 : i32
    %c0_i32_1 = arith.constant 0 : i32
    return %c0_i32, %c0_i32_0 : i32, i32
  }
  func.func @transform_6(%arg0: i32) -> (i32, i32) {
    %c0_i32 = arith.constant 0 : i32
    %c0_i32_0 = arith.constant 0 : i32
    %c0_i32_1 = arith.constant 0 : i32
    return %c0_i32, %c0_i32_0 : i32, i32
  }
  func.func @transform_7(%arg0: i32) -> (i32, i32) {
    %c0_i32 = arith.constant 0 : i32
    %c0_i32_0 = arith.constant 0 : i32
    %c0_i32_1 = arith.constant 0 : i32
    return %c0_i32, %c0_i32_0 : i32, i32
  }
  func.func @transform_8(%arg0: i32) -> (i32, i32) {
    %c0_i32 = arith.constant 0 : i32
    %c0_i32_0 = arith.constant 0 : i32
    %c0_i32_1 = arith.constant 0 : i32
    return %c0_i32, %c0_i32_0 : i32, i32
  }
  func.func @transform_9(%arg0: i32) -> (i32, i32) {
    %c0_i32 = arith.constant 0 : i32
    %c0_i32_0 = arith.constant 0 : i32
    %c0_i32_1 = arith.constant 0 : i32
    return %c0_i32, %c0_i32_0 : i32, i32
  }
  func.func @transform_10(%arg0: i32) -> (i32, i32) {
    %c0_i32 = arith.constant 0 : i32
    %c0_i32_0 = arith.constant 0 : i32
    return %arg0, %c0_i32 : i32, i32
  }
}

module attributes {stable_mosaic.version = 11 : i64} {
  func.func @star_kernel_fallback(%arg0: i32, %arg1: memref<8x16xf32, #tpu.memory_space<vmem>>, %arg2: memref<16x16xf32, #tpu.memory_space<vmem>>, %arg3: memref<1x16xf32, #tpu.memory_space<vmem>>, %arg4: memref<16x8xf32, #tpu.memory_space<vmem>>, %arg5: memref<1x8xf32, #tpu.memory_space<vmem>>, %arg6: memref<16x16xf32, #tpu.memory_space<vmem>>, %arg7: memref<8x16xf32, #tpu.memory_space<vmem>>, %arg8: memref<1x16xf32, #tpu.memory_space<vmem>>, %arg9: memref<16x16xf32, #tpu.memory_space<vmem>>, %arg10: memref<1x16xf32, #tpu.memory_space<vmem>>, %arg11: memref<8x16xf32, #tpu.memory_space<vmem>>, %arg12: memref<8x8xf32, #tpu.memory_space<vmem>>, %arg13: memref<8x8xf32, #tpu.memory_space<vmem>>) attributes {dimension_semantics = [#tpu.dimension_semantics<parallel>], iteration_bounds = array<i64: 2>, scalar_prefetch = 0 : i64, scratch_operands = 2 : i64, tpu.core_type = #tpu.core_type<tc>, window_params = [{transform_indices = @transform_0, window_bounds = array<i64: 8, 16>}, {pipeline_mode = #tpu.pipeline_mode<synchronous>, transform_indices = @transform_1, window_bounds = array<i64: 16, 16>}, {pipeline_mode = #tpu.pipeline_mode<synchronous>, transform_indices = @transform_2, window_bounds = array<i64: 1, 16>}, {pipeline_mode = #tpu.pipeline_mode<synchronous>, transform_indices = @transform_3, window_bounds = array<i64: 16, 8>}, {pipeline_mode = #tpu.pipeline_mode<synchronous>, transform_indices = @transform_4, window_bounds = array<i64: 1, 8>}, {pipeline_mode = #tpu.pipeline_mode<synchronous>, transform_indices = @transform_5, window_bounds = array<i64: 16, 16>}, {pipeline_mode = #tpu.pipeline_mode<synchronous>, transform_indices = @transform_6, window_bounds = array<i64: 8, 16>}, {pipeline_mode = #tpu.pipeline_mode<synchronous>, transform_indices = @transform_7, window_bounds = array<i64: 1, 16>}, {pipeline_mode = #tpu.pipeline_mode<synchronous>, transform_indices = @transform_8, window_bounds = array<i64: 16, 16>}, {pipeline_mode = #tpu.pipeline_mode<synchronous>, transform_indices = @transform_9, window_bounds = array<i64: 1, 16>}, {transform_indices = @transform_10, window_bounds = array<i64: 8, 16>}]} {
    %c0 = arith.constant 0 : index
    %c0_0 = arith.constant 0 : index
    %0 = vector.load %arg1[%c0, %c0_0] : memref<8x16xf32, #tpu.memory_space<vmem>>, vector<8x16xf32>
    %c0_1 = arith.constant 0 : index
    %c0_2 = arith.constant 0 : index
    %1 = vector.load %arg2[%c0_1, %c0_2] : memref<16x16xf32, #tpu.memory_space<vmem>>, vector<16x16xf32>
    %cst = arith.constant dense<0.000000e+00> : vector<8x16xf32>
    %2 = tpu.matmul %0, %1, %cst {dimension_numbers = #tpu.dot_dimension_numbers<[1], [0], [0], [1], [0, 0, 1, 1], [], []>} : vector<8x16xf32>, vector<16x16xf32>, vector<8x16xf32> -> vector<8x16xf32>
    %c0_3 = arith.constant 0 : index
    %c0_4 = arith.constant 0 : index
    %3 = vector.load %arg3[%c0_3, %c0_4] : memref<1x16xf32, #tpu.memory_space<vmem>>, vector<1x16xf32>
    %4 = vector.broadcast %3 : vector<1x16xf32> to vector<8x16xf32>
    %5 = arith.addf %2, %4 : vector<8x16xf32>
    %cst_5 = arith.constant 5.000000e-01 : f32
    %6 = vector.broadcast %cst_5 : f32 to vector<8x16xf32>
    %7 = arith.mulf %6, %5 : vector<8x16xf32>
    %cst_6 = arith.constant 0.707106769 : f32
    %8 = vector.broadcast %cst_6 : f32 to vector<8x16xf32>
    %9 = arith.mulf %5, %8 : vector<8x16xf32>
    %10 = math.erf %9 : vector<8x16xf32>
    %cst_7 = arith.constant 1.000000e+00 : f32
    %11 = vector.broadcast %cst_7 : f32 to vector<8x16xf32>
    %12 = arith.addf %11, %10 : vector<8x16xf32>
    %13 = arith.mulf %7, %12 : vector<8x16xf32>
    %c0_8 = arith.constant 0 : index
    %c0_9 = arith.constant 0 : index
    %14 = vector.load %arg4[%c0_8, %c0_9] : memref<16x8xf32, #tpu.memory_space<vmem>>, vector<16x8xf32>
    %cst_10 = arith.constant dense<0.000000e+00> : vector<8x8xf32>
    %15 = tpu.matmul %13, %14, %cst_10 {dimension_numbers = #tpu.dot_dimension_numbers<[1], [0], [0], [1], [0, 0, 1, 1], [], []>} : vector<8x16xf32>, vector<16x8xf32>, vector<8x8xf32> -> vector<8x8xf32>
    %c0_11 = arith.constant 0 : index
    %c0_12 = arith.constant 0 : index
    %16 = vector.load %arg5[%c0_11, %c0_12] : memref<1x8xf32, #tpu.memory_space<vmem>>, vector<1x8xf32>
    %17 = vector.broadcast %16 : vector<1x8xf32> to vector<8x8xf32>
    %18 = arith.addf %15, %17 : vector<8x8xf32>
    %c0_13 = arith.constant 0 : index
    %c0_14 = arith.constant 0 : index
    %19 = vector.load %arg12[%c0_13, %c0_14] : memref<8x8xf32, #tpu.memory_space<vmem>>, vector<8x8xf32>
    tpu.vector_store %arg12[%c0_13, %c0_14], %18 {strides = array<i32>} : memref<8x8xf32, #tpu.memory_space<vmem>>, vector<8x8xf32>,
    %c0_15 = arith.constant 0 : index
    %c0_16 = arith.constant 0 : index
    %20 = vector.load %arg12[%c0_15, %c0_16] : memref<8x8xf32, #tpu.memory_space<vmem>>, vector<4x8xf32>
    %cst_17 = arith.constant dense<0xFF800000> : vector<8xf32>
    %21 = vector.multi_reduction <maximumf>, %20, %cst_17 [0] : vector<4x8xf32> to vector<8xf32>
    %22 = vector.shape_cast %21 : vector<8xf32> to vector<1x8xf32>
    %23 = vector.broadcast %22 : vector<1x8xf32> to vector<4x8xf32>
    %24 = arith.subf %20, %23 : vector<4x8xf32>
    %25 = math.exp %24 : vector<4x8xf32>
    %26 = arith.mulf %20, %25 : vector<4x8xf32>
    %cst_18 = arith.constant dense<0.000000e+00> : vector<8xf32>
    %27 = vector.multi_reduction <add>, %26, %cst_18 [0] : vector<4x8xf32> to vector<8xf32>
    %28 = vector.shape_cast %27 : vector<8xf32> to vector<1x8xf32>
    %cst_19 = arith.constant dense<0.000000e+00> : vector<8xf32>
    %29 = vector.multi_reduction <add>, %25, %cst_19 [0] : vector<4x8xf32> to vector<8xf32>
    %30 = vector.shape_cast %29 : vector<8xf32> to vector<1x8xf32>
    %31 = arith.divf %28, %30 : vector<1x8xf32>
    %32 = vector.shape_cast %31 : vector<1x8xf32> to vector<1x8xf32>
    %33 = vector.broadcast %32 : vector<1x8xf32> to vector<8x8xf32>
    %c0_20 = arith.constant 0 : index
    %c0_21 = arith.constant 0 : index
    %34 = vector.load %arg13[%c0_20, %c0_21] : memref<8x8xf32, #tpu.memory_space<vmem>>, vector<8x8xf32>
    tpu.vector_store %arg13[%c0_20, %c0_21], %33 {strides = array<i32>} : memref<8x8xf32, #tpu.memory_space<vmem>>, vector<8x8xf32>,
    %c0_22 = arith.constant 0 : index
    %c0_23 = arith.constant 0 : index
    %35 = vector.load %arg6[%c0_22, %c0_23] : memref<16x16xf32, #tpu.memory_space<vmem>>, vector<16x16xf32>
    %cst_24 = arith.constant dense<0.000000e+00> : vector<8x16xf32>
    %36 = tpu.matmul %0, %35, %cst_24 {dimension_numbers = #tpu.dot_dimension_numbers<[1], [0], [0], [1], [0, 0, 1, 1], [], []>} : vector<8x16xf32>, vector<16x16xf32>, vector<8x16xf32> -> vector<8x16xf32>
    %c0_25 = arith.constant 0 : index
    %c0_26 = arith.constant 0 : index
    %37 = vector.load %arg13[%c0_25, %c0_26] : memref<8x8xf32, #tpu.memory_space<vmem>>, vector<8x8xf32>
    %c0_27 = arith.constant 0 : index
    %c0_28 = arith.constant 0 : index
    %38 = vector.load %arg7[%c0_27, %c0_28] : memref<8x16xf32, #tpu.memory_space<vmem>>, vector<8x16xf32>
    %cst_29 = arith.constant dense<0.000000e+00> : vector<8x16xf32>
    %39 = tpu.matmul %37, %38, %cst_29 {dimension_numbers = #tpu.dot_dimension_numbers<[1], [0], [0], [1], [0, 0, 1, 1], [], []>} : vector<8x8xf32>, vector<8x16xf32>, vector<8x16xf32> -> vector<8x16xf32>
    %40 = arith.addf %36, %39 : vector<8x16xf32>
    %c0_30 = arith.constant 0 : index
    %c0_31 = arith.constant 0 : index
    %41 = vector.load %arg8[%c0_30, %c0_31] : memref<1x16xf32, #tpu.memory_space<vmem>>, vector<1x16xf32>
    %42 = vector.broadcast %41 : vector<1x16xf32> to vector<8x16xf32>
    %43 = arith.addf %40, %42 : vector<8x16xf32>
    %cst_32 = arith.constant 5.000000e-01 : f32
    %44 = vector.broadcast %cst_32 : f32 to vector<8x16xf32>
    %45 = arith.mulf %44, %43 : vector<8x16xf32>
    %cst_33 = arith.constant 0.707106769 : f32
    %46 = vector.broadcast %cst_33 : f32 to vector<8x16xf32>
    %47 = arith.mulf %43, %46 : vector<8x16xf32>
    %48 = math.erf %47 : vector<8x16xf32>
    %cst_34 = arith.constant 1.000000e+00 : f32
    %49 = vector.broadcast %cst_34 : f32 to vector<8x16xf32>
    %50 = arith.addf %49, %48 : vector<8x16xf32>
    %51 = arith.mulf %45, %50 : vector<8x16xf32>
    %c0_35 = arith.constant 0 : index
    %c0_36 = arith.constant 0 : index
    %52 = vector.load %arg9[%c0_35, %c0_36] : memref<16x16xf32, #tpu.memory_space<vmem>>, vector<16x16xf32>
    %cst_37 = arith.constant dense<0.000000e+00> : vector<8x16xf32>
    %53 = tpu.matmul %51, %52, %cst_37 {dimension_numbers = #tpu.dot_dimension_numbers<[1], [0], [0], [1], [0, 0, 1, 1], [], []>} : vector<8x16xf32>, vector<16x16xf32>, vector<8x16xf32> -> vector<8x16xf32>
    %c0_38 = arith.constant 0 : index
    %c0_39 = arith.constant 0 : index
    %54 = vector.load %arg10[%c0_38, %c0_39] : memref<1x16xf32, #tpu.memory_space<vmem>>, vector<1x16xf32>
    %55 = vector.broadcast %54 : vector<1x16xf32> to vector<8x16xf32>
    %56 = arith.addf %53, %55 : vector<8x16xf32>
    %c0_40 = arith.constant 0 : index
    %c0_41 = arith.constant 0 : index
    %57 = vector.load %arg11[%c0_40, %c0_41] : memref<8x16xf32, #tpu.memory_space<vmem>>, vector<8x16xf32>
    tpu.vector_store %arg11[%c0_40, %c0_41], %56 {strides = array<i32>} : memref<8x16xf32, #tpu.memory_space<vmem>>, vector<8x16xf32>,
    return
  }
  func.func @transform_0(%arg0: i32) -> (i32, i32) {
    %c0_i32 = arith.constant 0 : i32
    %c0_i32_0 = arith.constant 0 : i32
    return %arg0, %c0_i32 : i32, i32
  }
  func.func @transform_1(%arg0: i32) -> (i32, i32) {
    %c0_i32 = arith.constant 0 : i32
    %c0_i32_0 = arith.constant 0 : i32
    %c0_i32_1 = arith.constant 0 : i32
    return %c0_i32, %c0_i32_0 : i32, i32
  }
  func.func @transform_2(%arg0: i32) -> (i32, i32) {
    %c0_i32 = arith.constant 0 : i32
    %c0_i32_0 = arith.constant 0 : i32
    %c0_i32_1 = arith.constant 0 : i32
    return %c0_i32, %c0_i32_0 : i32, i32
  }
  func.func @transform_3(%arg0: i32) -> (i32, i32) {
    %c0_i32 = arith.constant 0 : i32
    %c0_i32_0 = arith.constant 0 : i32
    %c0_i32_1 = arith.constant 0 : i32
    return %c0_i32, %c0_i32_0 : i32, i32
  }
  func.func @transform_4(%arg0: i32) -> (i32, i32) {
    %c0_i32 = arith.constant 0 : i32
    %c0_i32_0 = arith.constant 0 : i32
    %c0_i32_1 = arith.constant 0 : i32
    return %c0_i32, %c0_i32_0 : i32, i32
  }
  func.func @transform_5(%arg0: i32) -> (i32, i32) {
    %c0_i32 = arith.constant 0 : i32
    %c0_i32_0 = arith.constant 0 : i32
    %c0_i32_1 = arith.constant 0 : i32
    return %c0_i32, %c0_i32_0 : i32, i32
  }
  func.func @transform_6(%arg0: i32) -> (i32, i32) {
    %c0_i32 = arith.constant 0 : i32
    %c0_i32_0 = arith.constant 0 : i32
    %c0_i32_1 = arith.constant 0 : i32
    return %c0_i32, %c0_i32_0 : i32, i32
  }
  func.func @transform_7(%arg0: i32) -> (i32, i32) {
    %c0_i32 = arith.constant 0 : i32
    %c0_i32_0 = arith.constant 0 : i32
    %c0_i32_1 = arith.constant 0 : i32
    return %c0_i32, %c0_i32_0 : i32, i32
  }
  func.func @transform_8(%arg0: i32) -> (i32, i32) {
    %c0_i32 = arith.constant 0 : i32
    %c0_i32_0 = arith.constant 0 : i32
    %c0_i32_1 = arith.constant 0 : i32
    return %c0_i32, %c0_i32_0 : i32, i32
  }
  func.func @transform_9(%arg0: i32) -> (i32, i32) {
    %c0_i32 = arith.constant 0 : i32
    %c0_i32_0 = arith.constant 0 : i32
    %c0_i32_1 = arith.constant 0 : i32
    return %c0_i32, %c0_i32_0 : i32, i32
  }
  func.func @transform_10(%arg0: i32) -> (i32, i32) {
    %c0_i32 = arith.constant 0 : i32
    %c0_i32_0 = arith.constant 0 : i32
    return %arg0, %c0_i32 : i32, i32
  }
}

</mosaic_0001>

<llo_original>
// kernel: tpu_custom_call.1
$region0: #{tpu_custom_call.1}
  #allocation0 [shape = 'u32[]', space=smem, size = 0x4, offset = 0x4, fixed_abs, tag = 'smem constant byte address 0x4 - core index']
  #allocation1 [shape = 'u32[144,128]{1,0:T(1,128)}', space=vmem, size = 0x12000, scoped, tag = 'internal scratch']
  %s0 = inlined_call_operand.vmem [shape: f32[16,16], index: 0, kind: input, shape index: {}]
  %s1 = inlined_call_operand.hbm [shape: f32[16,16], index: 1, kind: input, shape index: {}]
  %s2 = inlined_call_operand.vmem [shape: f32[1,16], index: 2, kind: input, shape index: {}]
  %s3 = inlined_call_operand.vmem [shape: f32[16,8], index: 3, kind: input, shape index: {}]
  %s4 = inlined_call_operand.vmem [shape: f32[1,8], index: 4, kind: input, shape index: {}]
  %s5 = inlined_call_operand.vmem [shape: f32[16,16], index: 5, kind: input, shape index: {}]
  %s6 = inlined_call_operand.hbm [shape: f32[8,16], index: 6, kind: input, shape index: {}]
  %s7 = inlined_call_operand.hbm [shape: f32[1,16], index: 7, kind: input, shape index: {}]
  %s8 = inlined_call_operand.vmem [shape: f32[16,16], index: 8, kind: input, shape index: {}]
  %s9 = inlined_call_operand.vmem [shape: f32[1,16], index: 9, kind: input, shape index: {}]
  %s10 = inlined_call_operand.hbm [shape: f32[16,16], index: 10, kind: output, shape index: {}]
  %s11 = sld [smem:[#allocation0]]
  $region85: #{tpu_custom_call.1} parent=0
    _
  %s13 = ssub.s32 1, %s11
  %s14 = scalar_select 0, %s13, %s11
  $region1: #{tpu_custom_call.1} parent=0
    #allocation2 [shape = 'u8[8192]{0}', space=vmem, size = 0x2000, scoped, tag = 'input window, operand 1, single buffered']
    #allocation3 [shape = 's32[2]{0}', space=sflag, size = 0x8, scoped, tag = 'scoped memory for tpu_custom_call.1']
    #allocation4 [shape = 's32[2]{0}', space=sflag, size = 0x8, scoped, tag = 'scoped memory for tpu_custom_call.1']
    #allocation5 [shape = 'u8[4096]{0}', space=vmem, size = 0x1000, scoped, tag = 'input window, operand 6, single buffered']
    #allocation6 [shape = 's32[1]{0}', space=sflag, size = 0x4, scoped, tag = 'scoped memory for tpu_custom_call.1']
    #allocation7 [shape = 'u8[512]{0}', space=vmem, size = 0x400, scoped, tag = 'input window, operand 7, single buffered']
    #allocation8 [shape = 'u8[8192]{0}', space=vmem, size = 0x2000, scoped, tag = 'output window, operand 0']
    %15 = vsyncpa [#allocation3], 0
    %16 = vsyncpa [#allocation6], 0
    %17 = vsyncpa [#allocation4], 0
    %s18 = scalar_lea.sflag [#allocation4], 1
    %19 = vsyncpa %s18, 0
    loop: start=0, step=1, limit=4
    $region2: #{tpu_custom_call.1} parent=1 // loop_pre_header
      _
    $region3: #{tpu_custom_call.1} parent=1 // loop_header
      %s21 = sphi 0, %s25
      %p22 = scmp.ge.s32.totalorder %s21, 4
      %s31 = sphi 0, %s33
      %s34 = sphi 0, %s31
      %s35 = sphi 0, %s34
      %s51 = sphi 0, %s35
      %s55 = sphi 0, %s55
      %s57 = sphi 0, %s55
      %s58 = sphi 0, %s57
      %s72 = sphi 0, %s58
      %s76 = sphi 0, %s76
      %s78 = sphi 0, %s76
      %s79 = sphi 0, %s78
      %s93 = sphi 0, %s79
      %s97 = sphi 0, %s97
      %s99 = sphi 0, %s97
      %s100 = sphi 0, %s99
      %s114 = sphi 0, %s100
      %s118 = sphi 0, %s118
      %s120 = sphi 0, %s118
      %s121 = sphi 0, %s120
      %s135 = sphi 0, %s121
      %s139 = sphi 0, %s139
      %s141 = sphi 0, %s139
      %s142 = sphi 0, %s141
      %s156 = sphi 0, %s142
      %s160 = sphi 0, %s160
      %s162 = sphi 0, %s160
      %s163 = sphi 0, %s162
      %s177 = sphi 0, %s163
      %s181 = sphi 0, %s181
      %s183 = sphi 0, %s181
      %s184 = sphi 0, %s183
      %s198 = sphi 0, %s184
      %s202 = sphi 0, %s202
      %s204 = sphi 0, %s202
      %s205 = sphi 0, %s204
      %s219 = sphi 0, %s205
      %s223 = sphi 0, %s223
      %s225 = sphi 0, %s223
      %s226 = sphi 0, %s225
      %s240 = sphi 0, %s226
      %s246 = sphi 0, %s248
      %s249 = sphi 0, %s246
      %s250 = sphi 0, %s249
      %s266 = sphi 0, %s250
    $region4: #{tpu_custom_call.1} parent=1 // loop_header_branch
      %24 = sbr.rel (%p22) target = $region8
    $region5: #{tpu_custom_call.1} parent=1 // loop_body
      %s26 = ssub.s32 %s21, 1
      %s27 = ssub.s32 %s21, 2
      %s28 = sadd.s32 %s21, 1
      %s29 = ssub.s32 %s21, %s28
      %p30 = scmp.eq.s32.totalorder %s29, 0
      %s32 = sadd.s32 %s31, 1
      %s33 = scalar_select %p30, %s31, %s32
      %p36 = pneg %p30
      %p37 = scmp.eq.s32.totalorder %s21, 1
      %p38 = por %p36, %p37
      %p39 = scmp.ne.s32.totalorder %s31, %s34
      %p40 = scmp.eq.s32.totalorder %s21, 0
      %p41 = por %p39, %p40
      %p42 = scmp.ne.s32.totalorder %s31, %s34
      %p43 = scmp.eq.s32.totalorder %s26, 1
      %p44 = por %p42, %p43
      %p45 = scmp.ne.s32.totalorder %s34, %s35
      %p46 = scmp.eq.s32.totalorder %s26, 0
      %p47 = por %p45, %p46
      %p48 = scmp.ne.s32.totalorder %s34, %s35
      %p49 = scmp.eq.s32.totalorder %s27, 1
      %p50 = por %p48, %p49
      %p52 = scmp.ne.s32.totalorder %s35, %s51
      %p53 = scmp.eq.s32.totalorder %s27, 0
      %p54 = por %p52, %p53
      %s56 = sadd.s32 %s55, 1
      %p59 = scmp.eq.s32.totalorder %s21, 1
      %p60 = scmp.ne.s32.totalorder %s55, %s57
      %p61 = scmp.eq.s32.totalorder %s21, 0
      %p62 = por %p60, %p61
      %p63 = scmp.ne.s32.totalorder %s55, %s57
      %p64 = scmp.eq.s32.totalorder %s26, 1
      %p65 = por %p63, %p64
      %p66 = scmp.ne.s32.totalorder %s57, %s58
      %p67 = scmp.eq.s32.totalorder %s26, 0
      %p68 = por %p66, %p67
      %p69 = scmp.ne.s32.totalorder %s57, %s58
      %p70 = scmp.eq.s32.totalorder %s27, 1
      %p71 = por %p69, %p70
      %p73 = scmp.ne.s32.totalorder %s58, %s72
      %p74 = scmp.eq.s32.totalorder %s27, 0
      %p75 = por %p73, %p74
      %s77 = sadd.s32 %s76, 1
      %p80 = scmp.eq.s32.totalorder %s21, 1
      %p81 = scmp.ne.s32.totalorder %s76, %s78
      %p82 = scmp.eq.s32.totalorder %s21, 0
      %p83 = por %p81, %p82
      %p84 = scmp.ne.s32.totalorder %s76, %s78
      %p85 = scmp.eq.s32.totalorder %s26, 1
      %p86 = por %p84, %p85
      %p87 = scmp.ne.s32.totalorder %s78, %s79
      %p88 = scmp.eq.s32.totalorder %s26, 0
      %p89 = por %p87, %p88
      %p90 = scmp.ne.s32.totalorder %s78, %s79
      %p91 = scmp.eq.s32.totalorder %s27, 1
      %p92 = por %p90, %p91
      %p94 = scmp.ne.s32.totalorder %s79, %s93
      %p95 = scmp.eq.s32.totalorder %s27, 0
      %p96 = por %p94, %p95
      %s98 = sadd.s32 %s97, 1
      %p101 = scmp.eq.s32.totalorder %s21, 1
      %p102 = scmp.ne.s32.totalorder %s97, %s99
      %p103 = scmp.eq.s32.totalorder %s21, 0
      %p104 = por %p102, %p103
      %p105 = scmp.ne.s32.totalorder %s97, %s99
      %p106 = scmp.eq.s32.totalorder %s26, 1
      %p107 = por %p105, %p106
      %p108 = scmp.ne.s32.totalorder %s99, %s100
      %p109 = scmp.eq.s32.totalorder %s26, 0
      %p110 = por %p108, %p109
      %p111 = scmp.ne.s32.totalorder %s99, %s100
      %p112 = scmp.eq.s32.totalorder %s27, 1
      %p113 = por %p111, %p112
      %p115 = scmp.ne.s32.totalorder %s100, %s114
      %p116 = scmp.eq.s32.totalorder %s27, 0
      %p117 = por %p115, %p116
      %s119 = sadd.s32 %s118, 1
      %p122 = scmp.eq.s32.totalorder %s21, 1
      %p123 = scmp.ne.s32.totalorder %s118, %s120
      %p124 = scmp.eq.s32.totalorder %s21, 0
      %p125 = por %p123, %p124
      %p126 = scmp.ne.s32.totalorder %s118, %s120
      %p127 = scmp.eq.s32.totalorder %s26, 1
      %p128 = por %p126, %p127
      %p129 = scmp.ne.s32.totalorder %s120, %s121
      %p130 = scmp.eq.s32.totalorder %s26, 0
      %p131 = por %p129, %p130
      %p132 = scmp.ne.s32.totalorder %s120, %s121
      %p133 = scmp.eq.s32.totalorder %s27, 1
      %p134 = por %p132, %p133
      %p136 = scmp.ne.s32.totalorder %s121, %s135
      %p137 = scmp.eq.s32.totalorder %s27, 0
      %p138 = por %p136, %p137
      %s140 = sadd.s32 %s139, 1
      %p143 = scmp.eq.s32.totalorder %s21, 1
      %p144 = scmp.ne.s32.totalorder %s139, %s141
      %p145 = scmp.eq.s32.totalorder %s21, 0
      %p146 = por %p144, %p145
      %p147 = scmp.ne.s32.totalorder %s139, %s141
      %p148 = scmp.eq.s32.totalorder %s26, 1
      %p149 = por %p147, %p148
      %p150 = scmp.ne.s32.totalorder %s141, %s142
      %p151 = scmp.eq.s32.totalorder %s26, 0
      %p152 = por %p150, %p151
      %p153 = scmp.ne.s32.totalorder %s141, %s142
      %p154 = scmp.eq.s32.totalorder %s27, 1
      %p155 = por %p153, %p154
      %p157 = scmp.ne.s32.totalorder %s142, %s156
      %p158 = scmp.eq.s32.totalorder %s27, 0
      %p159 = por %p157, %p158
      %s161 = sadd.s32 %s160, 1
      %p164 = scmp.eq.s32.totalorder %s21, 1
      %p165 = scmp.ne.s32.totalorder %s160, %s162
      %p166 = scmp.eq.s32.totalorder %s21, 0
      %p167 = por %p165, %p166
      %p168 = scmp.ne.s32.totalorder %s160, %s162
      %p169 = scmp.eq.s32.totalorder %s26, 1
      %p170 = por %p168, %p169
      %p171 = scmp.ne.s32.totalorder %s162, %s163
      %p172 = scmp.eq.s32.totalorder %s26, 0
      %p173 = por %p171, %p172
      %p174 = scmp.ne.s32.totalorder %s162, %s163
      %p175 = scmp.eq.s32.totalorder %s27, 1
      %p176 = por %p174, %p175
      %p178 = scmp.ne.s32.totalorder %s163, %s177
      %p179 = scmp.eq.s32.totalorder %s27, 0
      %p180 = por %p178, %p179
      %s182 = sadd.s32 %s181, 1
      %p185 = scmp.eq.s32.totalorder %s21, 1
      %p186 = scmp.ne.s32.totalorder %s181, %s183
      %p187 = scmp.eq.s32.totalorder %s21, 0
      %p188 = por %p186, %p187
      %p189 = scmp.ne.s32.totalorder %s181, %s183
      %p190 = scmp.eq.s32.totalorder %s26, 1
      %p191 = por %p189, %p190
      %p192 = scmp.ne.s32.totalorder %s183, %s184
      %p193 = scmp.eq.s32.totalorder %s26, 0
      %p194 = por %p192, %p193
      %p195 = scmp.ne.s32.totalorder %s183, %s184
      %p196 = scmp.eq.s32.totalorder %s27, 1
      %p197 = por %p195, %p196
      %p199 = scmp.ne.s32.totalorder %s184, %s198
      %p200 = scmp.eq.s32.totalorder %s27, 0
      %p201 = por %p199, %p200
      %s203 = sadd.s32 %s202, 1
      %p206 = scmp.eq.s32.totalorder %s21, 1
      %p207 = scmp.ne.s32.totalorder %s202, %s204
      %p208 = scmp.eq.s32.totalorder %s21, 0
      %p209 = por %p207, %p208
      %p210 = scmp.ne.s32.totalorder %s202, %s204
      %p211 = scmp.eq.s32.totalorder %s26, 1
      %p212 = por %p210, %p211
      %p213 = scmp.ne.s32.totalorder %s204, %s205
      %p214 = scmp.eq.s32.totalorder %s26, 0
      %p215 = por %p213, %p214
      %p216 = scmp.ne.s32.totalorder %s204, %s205
      %p217 = scmp.eq.s32.totalorder %s27, 1
      %p218 = por %p216, %p217
      %p220 = scmp.ne.s32.totalorder %s205, %s219
      %p221 = scmp.eq.s32.totalorder %s27, 0
      %p222 = por %p220, %p221
      %s224 = sadd.s32 %s223, 1
      %p227 = scmp.eq.s32.totalorder %s21, 1
      %p228 = scmp.ne.s32.totalorder %s223, %s225
      %p229 = scmp.eq.s32.totalorder %s21, 0
      %p230 = por %p228, %p229
      %p231 = scmp.ne.s32.totalorder %s223, %s225
      %p232 = scmp.eq.s32.totalorder %s26, 1
      %p233 = por %p231, %p232
      %p234 = scmp.ne.s32.totalorder %s225, %s226
      %p235 = scmp.eq.s32.totalorder %s26, 0
      %p236 = por %p234, %p235
      %p237 = scmp.ne.s32.totalorder %s225, %s226
      %p238 = scmp.eq.s32.totalorder %s27, 1
      %p239 = por %p237, %p238
      %p241 = scmp.ne.s32.totalorder %s226, %s240
      %p242 = scmp.eq.s32.totalorder %s27, 0
      %p243 = por %p241, %p242
      %s244 = ssub.s32 %s21, %s28
      %p245 = scmp.eq.s32.totalorder %s244, 0
      %s247 = sadd.s32 %s246, 1
      %s248 = scalar_select %p245, %s246, %s247
      %p251 = pneg %p245
      %p252 = scmp.eq.s32.totalorder %s21, 1
      %p253 = por %p251, %p252
      %p254 = scmp.ne.s32.totalorder %s246, %s249
      %p255 = scmp.eq.s32.totalorder %s21, 0
      %p256 = por %p254, %p255
      %p257 = scmp.ne.s32.totalorder %s246, %s249
      %p258 = scmp.eq.s32.totalorder %s26, 1
      %p259 = por %p257, %p258
      %p260 = scmp.ne.s32.totalorder %s249, %s250
      %p261 = scmp.eq.s32.totalorder %s26, 0
      %p262 = por %p260, %p261
      %p263 = scmp.ne.s32.totalorder %s249, %s250
      %p264 = scmp.eq.s32.totalorder %s27, 1
      %p265 = por %p263, %p264
      %p267 = scmp.ne.s32.totalorder %s250, %s266
      %p268 = scmp.eq.s32.totalorder %s27, 0
      %p269 = por %p267, %p268
      %p270 = scmp.le.s32.totalorder 1, %s21
      %p271 = scmp.lt.s32.totalorder %s21, 3
      %p272 = pnand %p270, %p271
      %p273 = pneg %p272
      // Predicated region
      $region9: #{tpu_custom_call.1} parent=5 // pred_check
        _
      $region10: #{tpu_custom_call.1} parent=5 // pred_check_branch
        %275 = sbr.rel (%p272) target = $region12
      $region11: #{tpu_custom_call.1} parent=5 // pred_region
        %s276 = ssub.s32 %s21, 1
        // Predicated region
        $region13: #{tpu_custom_call.1} parent=11 // pred_check
          %p277 = pneg %p68
        $region14: #{tpu_custom_call.1} parent=11 // pred_check_branch
          %279 = sbr.rel (%p277) target = $region16
        $region15: #{tpu_custom_call.1} parent=11 // pred_region
          %s281 = ssub.s32 256, 256
          %282 = vsyncadd [#allocation3], %s281
          %s283 = sshll.u32 [#allocation2], 4
          %s284 = int_to_ptr.vmem [resolvable:$true] %s283
          %289 = dma.hbm_to_vmem [thread:$0]  %s1, 256, %s284, [#allocation3], 128, 128, 8
        $region16: #{tpu_custom_call.1} parent=11 // pred_fallthru
          _
        // Predicated region
        $region17: #{tpu_custom_call.1} parent=11 // pred_check
          %p290 = pneg %p89
        $region18: #{tpu_custom_call.1} parent=11 // pred_check_branch
          %292 = sbr.rel (%p290) target = $region20
        $region19: #{tpu_custom_call.1} parent=11 // pred_region
          _
        $region20: #{tpu_custom_call.1} parent=11 // pred_fallthru
          _
        // Predicated region
        $region21: #{tpu_custom_call.1} parent=11 // pred_check
          %p293 = pneg %p110
        $region22: #{tpu_custom_call.1} parent=11 // pred_check_branch
          %295 = sbr.rel (%p293) target = $region24
        $region23: #{tpu_custom_call.1} parent=11 // pred_region
          _
        $region24: #{tpu_custom_call.1} parent=11 // pred_fallthru
          _
        // Predicated region
        $region25: #{tpu_custom_call.1} parent=11 // pred_check
          %p296 = pneg %p131
        $region26: #{tpu_custom_call.1} parent=11 // pred_check_branch
          %298 = sbr.rel (%p296) target = $region28
        $region27: #{tpu_custom_call.1} parent=11 // pred_region
          _
        $region28: #{tpu_custom_call.1} parent=11 // pred_fallthru
          _
        // Predicated region
        $region29: #{tpu_custom_call.1} parent=11 // pred_check
          %p299 = pneg %p152
        $region30: #{tpu_custom_call.1} parent=11 // pred_check_branch
          %301 = sbr.rel (%p299) target = $region32
        $region31: #{tpu_custom_call.1} parent=11 // pred_region
          _
        $region32: #{tpu_custom_call.1} parent=11 // pred_fallthru
          _
        // Predicated region
        $region33: #{tpu_custom_call.1} parent=11 // pred_check
          %p302 = pneg %p173
        $region34: #{tpu_custom_call.1} parent=11 // pred_check_branch
          %304 = sbr.rel (%p302) target = $region36
        $region35: #{tpu_custom_call.1} parent=11 // pred_region
          %s306 = ssub.s32 128, 128
          %307 = vsyncadd [#allocation6], %s306
          %s309 = sshll.u32 [#allocation5], 4
          %s310 = int_to_ptr.vmem [resolvable:$true] %s309
          %312 = dma.hbm_to_vmem [thread:$0]  %s6, 128, %s310, [#allocation6]
        $region36: #{tpu_custom_call.1} parent=11 // pred_fallthru
          _
        // Predicated region
        $region37: #{tpu_custom_call.1} parent=11 // pred_check
          %p313 = pneg %p194
        $region38: #{tpu_custom_call.1} parent=11 // pred_check_branch
          %315 = sbr.rel (%p313) target = $region40
        $region39: #{tpu_custom_call.1} parent=11 // pred_region
          %s317 = ssub.s32 16, 16
          %318 = vsyncadd [#allocation6], %s317
          %s320 = sshll.u32 [#allocation7], 4
          %s321 = int_to_ptr.vmem [resolvable:$true] %s320
          %323 = dma.hbm_to_vmem [thread:$0]  %s7, 16, %s321, [#allocation6]
        $region40: #{tpu_custom_call.1} parent=11 // pred_fallthru
          _
        // Predicated region
        $region41: #{tpu_custom_call.1} parent=11 // pred_check
          %p324 = pneg %p215
        $region42: #{tpu_custom_call.1} parent=11 // pred_check_branch
          %326 = sbr.rel (%p324) target = $region44
        $region43: #{tpu_custom_call.1} parent=11 // pred_region
          _
        $region44: #{tpu_custom_call.1} parent=11 // pred_fallthru
          _
        // Predicated region
        $region45: #{tpu_custom_call.1} parent=11 // pred_check
          %p327 = pneg %p236
        $region46: #{tpu_custom_call.1} parent=11 // pred_check_branch
          %329 = sbr.rel (%p327) target = $region48
        $region47: #{tpu_custom_call.1} parent=11 // pred_region
          _
        $region48: #{tpu_custom_call.1} parent=11 // pred_fallthru
          _
      $region12: #{tpu_custom_call.1} parent=5 // pred_fallthru
        _
      %p330 = scmp.lt.s32.totalorder %s21, 2
      // Predicated region
      $region49: #{tpu_custom_call.1} parent=5 // pred_check
        %p331 = pneg %p330
      $region50: #{tpu_custom_call.1} parent=5 // pred_check_branch
        %333 = sbr.rel (%p331) target = $region52
      $region51: #{tpu_custom_call.1} parent=5 // pred_region
        // Predicated region
        $region53: #{tpu_custom_call.1} parent=51 // pred_check
          %p334 = pneg %p41
        $region54: #{tpu_custom_call.1} parent=51 // pred_check_branch
          %336 = sbr.rel (%p334) target = $region56
        $region55: #{tpu_custom_call.1} parent=51 // pred_region
          %p337 = scmp.lt.s32.totalorder %s21, 1
          %s338 = scalar_select %p337, %s21, 1
          %s339 = smul.addr %s338, 8
          %s340 = scalar_lea.vmem %s0, %s339
        $region56: #{tpu_custom_call.1} parent=51 // pred_fallthru
          _
      $region52: #{tpu_custom_call.1} parent=5 // pred_fallthru
        _
      %p341 = scmp.le.s32.totalorder 1, %s21
      %p342 = scmp.lt.s32.totalorder %s21, 3
      %p343 = pnand %p341, %p342
      %p344 = pneg %p343
      // Predicated region
      $region57: #{tpu_custom_call.1} parent=5 // pred_check
        _
      $region58: #{tpu_custom_call.1} parent=5 // pred_check_branch
        %346 = sbr.rel (%p343) target = $region60
      $region59: #{tpu_custom_call.1} parent=5 // pred_region
        %s347 = ssub.s32 %s21, 1
        // Predicated region
        $region61: #{tpu_custom_call.1} parent=59 // pred_check
          %p348 = pneg %p68
        $region62: #{tpu_custom_call.1} parent=59 // pred_check_branch
          %350 = sbr.rel (%p348) target = $region64
        $region63: #{tpu_custom_call.1} parent=59 // pred_region
          %351 = dma.done [#allocation3], 256
        $region64: #{tpu_custom_call.1} parent=59 // pred_fallthru
          _
        // Predicated region
        $region65: #{tpu_custom_call.1} parent=59 // pred_check
          %p352 = pneg %p173
        $region66: #{tpu_custom_call.1} parent=59 // pred_check_branch
          %354 = sbr.rel (%p352) target = $region68
        $region67: #{tpu_custom_call.1} parent=59 // pred_region
          %355 = dma.done [#allocation6], 128
        $region68: #{tpu_custom_call.1} parent=59 // pred_fallthru
          _
        // Predicated region
        $region69: #{tpu_custom_call.1} parent=59 // pred_check
          %p356 = pneg %p194
        $region70: #{tpu_custom_call.1} parent=59 // pred_check_branch
          %358 = sbr.rel (%p356) target = $region72
        $region71: #{tpu_custom_call.1} parent=59 // pred_region
          %359 = dma.done [#allocation6], 16
        $region72: #{tpu_custom_call.1} parent=59 // pred_fallthru
          _
        %p360 = scmp.lt.s32.totalorder %s26, 1
        %s361 = scalar_select %p360, %s26, 1
        %s362 = smul.addr %s361, 8
        %s363 = scalar_lea.vmem %s0, %s362
        %p364 = pneg %p47
        %p365 = pneg %p44
        %p366 = pneg %p68
        %p367 = pneg %p65
        %p368 = pneg %p89
        %p369 = pneg %p86
        %p370 = pneg %p110
        %p371 = pneg %p107
        %p372 = pneg %p131
        %p373 = pneg %p128
        %p374 = pneg %p152
        %p375 = pneg %p149
        %p376 = pneg %p173
        %p377 = pneg %p170
        %p378 = pneg %p194
        %p379 = pneg %p191
        %p380 = pneg %p215
        %p381 = pneg %p212
        %p382 = pneg %p236
        %p383 = pneg %p233
        %p384 = pneg %p262
        %p385 = pneg %p259
        %s386 = sand.u32 %s249, 1
        %s387 = scalar_lea.sflag [#allocation4], %s386
        %s388 = sand.u32 %s249, 1
        %s389 = smul.addr %s388, 8
        %s390 = scalar_lea.vmem [#allocation8], %s389
        %p391 = scmp.lt.s32.totalorder %s26, 1
        %s392 = scalar_select %p391, %s26, 1
        %s393 = smul.addr %s392, 8
        %s394 = scalar_lea.vmem %s0, %s393
        %v395 = vld [vmem:[%s394] sm:$0xff]
        %v396 = vld [vmem:[#allocation2] sm:$0xff]
        %v397 = vld [vmem:[#allocation2 + $0x8] sm:$0xff]
        %v398 = vld [vmem:[%s2] sm:$0x1]
        %v400 = vlaneseq
        %v401 = vshrl.u32 %v400, 7
        %v402 = vsub.s32 0, %v401
        %v403 = vrot.slane %v398, %v402
        %vm405 = vcmask 130048
        %v407 = vsel %vm405, %v395, 0
        %409 = vmatprep.subr.mxu0 0.0
        %410 = vmatpush1.msra.mxu0 %v396
        %411 = vmatprep.subr.mxu0 0.0
        %412 = vmatpush1.msra.mxu0 %v397
        %413 = vmatprep.subr.mxu0 0.0
        %414 = vmatpush1.msra.mxu0 0.0
        %415 = vmatprep.subr.mxu0 0.0
        %416 = vmatpush1.msra.mxu0 0.0
        %417 = vmatprep.subr.mxu0 0.0
        %418 = vmatpush1.msra.mxu0 0.0
        %419 = vmatprep.subr.mxu0 0.0
        %420 = vmatpush1.msra.mxu0 0.0
        %421 = vmatprep.subr.mxu0 0.0
        %422 = vmatpush1.msra.mxu0 0.0
        %423 = vmatprep.subr.mxu0 0.0
        %424 = vmatpush1.msra.mxu0 0.0
        %425 = vmatprep.subr.mxu0 0.0
        %426 = vmatpush1.msra.mxu0 0.0
        %427 = vmatprep.subr.mxu0 0.0
        %428 = vmatpush1.msra.mxu0 0.0
        %429 = vmatprep.subr.mxu0 0.0
        %430 = vmatpush1.msra.mxu0 0.0
        %431 = vmatprep.subr.mxu0 0.0
        %432 = vmatpush1.msra.mxu0 0.0
        %433 = vmatprep.subr.mxu0 0.0
        %434 = vmatpush1.msra.mxu0 0.0
        %435 = vmatprep.subr.mxu0 0.0
        %436 = vmatpush1.msra.mxu0 0.0
        %437 = vmatprep.subr.mxu0 0.0
        %438 = vmatpush1.msra.mxu0 0.0
        %439 = vmatprep.subr.mxu0 0.0
        %440 = vmatpush1.msra.mxu0 0.0
        %441 = vmatprep.subr.mxu0 0.0
        %442 = vmatpush1.msra.mxu0 0.0
        %443 = vmatprep.subr.mxu0 0.0
        %444 = vmatpush1.msra.mxu0 0.0
        %445 = vmatprep.subr.mxu0 0.0
        %446 = vmatpush1.msra.mxu0 0.0
        %447 = vmatprep.subr.mxu0 0.0
        %448 = vmatpush1.msra.mxu0 0.0
        %449 = vmatprep.subr.mxu0 0.0
        %450 = vmatpush1.msra.mxu0 0.0
        %451 = vmatprep.subr.mxu0 0.0
        %452 = vmatpush1.msra.mxu0 0.0
        %453 = vmatprep.subr.mxu0 0.0
        %454 = vmatpush1.msra.mxu0 0.0
        %455 = vmatprep.subr.mxu0 0.0
        %456 = vmatpush1.msra.mxu0 0.0
        %457 = vmatprep.subr.mxu0 0.0
        %458 = vmatpush1.msra.mxu0 0.0
        %459 = vmatprep.subr.mxu0 0.0
        %460 = vmatpush1.msra.mxu0 0.0
        %461 = vmatprep.subr.mxu0 0.0
        %462 = vmatpush1.msra.mxu0 0.0
        %463 = vmatprep.subr.mxu0 0.0
        %464 = vmatpush1.msra.mxu0 0.0
        %465 = vmatprep.subr.mxu0 0.0
        %466 = vmatpush1.msra.mxu0 0.0
        %467 = vmatprep.subr.mxu0 0.0
        %468 = vmatpush1.msra.mxu0 0.0
        %469 = vmatprep.subr.mxu0 0.0
        %470 = vmatpush1.msra.mxu0 0.0
        %471 = vmatprep.subr.mxu0 0.0
        %472 = vmatpush1.msra.mxu0 0.0
        %473 = vmatprep.mubr.f32.mxu0 0.0
        %474 = vmatmul.mubr.f32.gmra.mrb[0].mxu0 %v407
        %v475 = vpop.f32.mrb[0].mxu0
        %v476 = vadd.f32 %v403, %v475
        %v477 = vpop.f32.mrb[0].mxu0
        %478 = vdwg.mxu0
        %v479 = vmul.f32 %v476, 0.5
        %v480 = vmul.f32 %v476, 0.70710677
        %v481 = verf.f32.pop %v480
        %v482 = vadd.f32 %v481, 1.0
        %v483 = vmul.f32 %v479, %v482
        %v484 = vld [vmem:[%s3] sm:$0xff]
        %v485 = vld [vmem:[%s3 + $0x8] sm:$0xff]
        %v486 = vld [vmem:[%s4] sm:$0x1]
        %v488 = vlaneseq
        %v489 = vshrl.u32 %v488, 7
        %v490 = vsub.s32 0, %v489
        %v491 = vrot.slane %v486, %v490
        %v494 = vsel %vm405, %v483, 0
        %496 = vmatprep.subr.mxu0 0.0
        %497 = vmatpush1.msra.mxu0 %v484
        %498 = vmatprep.subr.mxu0 0.0
        %499 = vmatpush1.msra.mxu0 %v485
        %500 = vmatprep.subr.mxu0 0.0
        %501 = vmatpush1.msra.mxu0 0.0
        %502 = vmatprep.subr.mxu0 0.0
        %503 = vmatpush1.msra.mxu0 0.0
        %504 = vmatprep.subr.mxu0 0.0
        %505 = vmatpush1.msra.mxu0 0.0
        %506 = vmatprep.subr.mxu0 0.0
        %507 = vmatpush1.msra.mxu0 0.0
        %508 = vmatprep.subr.mxu0 0.0
        %509 = vmatpush1.msra.mxu0 0.0
        %510 = vmatprep.subr.mxu0 0.0
        %511 = vmatpush1.msra.mxu0 0.0
        %512 = vmatprep.subr.mxu0 0.0
        %513 = vmatpush1.msra.mxu0 0.0
        %514 = vmatprep.subr.mxu0 0.0
        %515 = vmatpush1.msra.mxu0 0.0
        %516 = vmatprep.subr.mxu0 0.0
        %517 = vmatpush1.msra.mxu0 0.0
        %518 = vmatprep.subr.mxu0 0.0
        %519 = vmatpush1.msra.mxu0 0.0
        %520 = vmatprep.subr.mxu0 0.0
        %521 = vmatpush1.msra.mxu0 0.0
        %522 = vmatprep.subr.mxu0 0.0
        %523 = vmatpush1.msra.mxu0 0.0
        %524 = vmatprep.subr.mxu0 0.0
        %525 = vmatpush1.msra.mxu0 0.0
        %526 = vmatprep.subr.mxu0 0.0
        %527 = vmatpush1.msra.mxu0 0.0
        %528 = vmatprep.subr.mxu0 0.0
        %529 = vmatpush1.msra.mxu0 0.0
        %530 = vmatprep.subr.mxu0 0.0
        %531 = vmatpush1.msra.mxu0 0.0
        %532 = vmatprep.subr.mxu0 0.0
        %533 = vmatpush1.msra.mxu0 0.0
        %534 = vmatprep.subr.mxu0 0.0
        %535 = vmatpush1.msra.mxu0 0.0
        %536 = vmatprep.subr.mxu0 0.0
        %537 = vmatpush1.msra.mxu0 0.0
        %538 = vmatprep.subr.mxu0 0.0
        %539 = vmatpush1.msra.mxu0 0.0
        %540 = vmatprep.subr.mxu0 0.0
        %541 = vmatpush1.msra.mxu0 0.0
        %542 = vmatprep.subr.mxu0 0.0
        %543 = vmatpush1.msra.mxu0 0.0
        %544 = vmatprep.subr.mxu0 0.0
        %545 = vmatpush1.msra.mxu0 0.0
        %546 = vmatprep.subr.mxu0 0.0
        %547 = vmatpush1.msra.mxu0 0.0
        %548 = vmatprep.subr.mxu0 0.0
        %549 = vmatpush1.msra.mxu0 0.0
        %550 = vmatprep.subr.mxu0 0.0
        %551 = vmatpush1.msra.mxu0 0.0
        %552 = vmatprep.subr.mxu0 0.0
        %553 = vmatpush1.msra.mxu0 0.0
        %554 = vmatprep.subr.mxu0 0.0
        %555 = vmatpush1.msra.mxu0 0.0
        %556 = vmatprep.subr.mxu0 0.0
        %557 = vmatpush1.msra.mxu0 0.0
        %558 = vmatprep.subr.mxu0 0.0
        %559 = vmatpush1.msra.mxu0 0.0
        %560 = vmatprep.mubr.f32.mxu0 0.0
        %561 = vmatmul.mubr.f32.gmra.mrb[0].mxu0 %v494
        %v562 = vpop.f32.mrb[0].mxu0
        %v563 = vadd.f32 %v491, %v562
        %v564 = vpop.f32.mrb[0].mxu0
        %565 = vdwg.mxu0
        %v566 = vlaneseq
        %v567 = vshrl.u32 %v566, 7
        %vm568 = vcmp.lt.s32.totalorder %v567, 4
        %v569 = vsel %vm568, %v563, -1e+30
        %vm570 = vcmask 64512
        %v571 = vsel %vm570, %v569, -inf
        %v572 = vrot.slane %v571, 4
        %v573 = vmax.f32 %v571, %v572
        %v574 = vrot.slane %v573, 2
        %v575 = vmax.f32 %v573, %v574
        %v576 = vrot.slane %v575, 1
        %v577 = vmax.f32 %v575, %v576
        %v578 = vsub.f32 %v569, %v577
        %v579 = vmul.f32 %v578, 1.442695
        %v580 = vpow.pop %v579
        %v581 = vmul.f32 %v569, %v580
        %v582 = vsel %vm570, %v581, 0.0
        %v583 = vrot.slane %v582, 4
        %v584 = vadd.f32 %v582, %v583
        %v585 = vrot.slane %v584, 2
        %v586 = vadd.f32 %v584, %v585
        %v587 = vrot.slane %v586, 1
        %v588 = vadd.f32 %v586, %v587
        %v589 = vsel %vm570, %v580, 0.0
        %v590 = vrot.slane %v589, 4
        %v591 = vadd.f32 %v589, %v590
        %v592 = vrot.slane %v591, 2
        %v593 = vadd.f32 %v591, %v592
        %v594 = vrot.slane %v593, 1
        %v595 = vadd.f32 %v593, %v594
        %v596 = vrcp.pop %v595
        %v597 = vmul.f32 %v588, %v596
        %v598 = vld [vmem:[%s5] sm:$0xff]
        %v599 = vld [vmem:[%s5 + $0x8] sm:$0xff]
        %600 = vmatprep.subr.mxu0 0.0
        %601 = vmatpush1.msra.mxu0 %v598
        %602 = vmatprep.subr.mxu0 0.0
        %603 = vmatpush1.msra.mxu0 %v599
        %604 = vmatprep.subr.mxu0 0.0
        %605 = vmatpush1.msra.mxu0 0.0
        %606 = vmatprep.subr.mxu0 0.0
        %607 = vmatpush1.msra.mxu0 0.0
        %608 = vmatprep.subr.mxu0 0.0
        %609 = vmatpush1.msra.mxu0 0.0
        %610 = vmatprep.subr.mxu0 0.0
        %611 = vmatpush1.msra.mxu0 0.0
        %612 = vmatprep.subr.mxu0 0.0
        %613 = vmatpush1.msra.mxu0 0.0
        %614 = vmatprep.subr.mxu0 0.0
        %615 = vmatpush1.msra.mxu0 0.0
        %616 = vmatprep.subr.mxu0 0.0
        %617 = vmatpush1.msra.mxu0 0.0
        %618 = vmatprep.subr.mxu0 0.0
        %619 = vmatpush1.msra.mxu0 0.0
        %620 = vmatprep.subr.mxu0 0.0
        %621 = vmatpush1.msra.mxu0 0.0
        %622 = vmatprep.subr.mxu0 0.0
        %623 = vmatpush1.msra.mxu0 0.0
        %624 = vmatprep.subr.mxu0 0.0
        %625 = vmatpush1.msra.mxu0 0.0
        %626 = vmatprep.subr.mxu0 0.0
        %627 = vmatpush1.msra.mxu0 0.0
        %628 = vmatprep.subr.mxu0 0.0
        %629 = vmatpush1.msra.mxu0 0.0
        %630 = vmatprep.subr.mxu0 0.0
        %631 = vmatpush1.msra.mxu0 0.0
        %632 = vmatprep.subr.mxu0 0.0
        %633 = vmatpush1.msra.mxu0 0.0
        %634 = vmatprep.subr.mxu0 0.0
        %635 = vmatpush1.msra.mxu0 0.0
        %636 = vmatprep.subr.mxu0 0.0
        %637 = vmatpush1.msra.mxu0 0.0
        %638 = vmatprep.subr.mxu0 0.0
        %639 = vmatpush1.msra.mxu0 0.0
        %640 = vmatprep.subr.mxu0 0.0
        %641 = vmatpush1.msra.mxu0 0.0
        %642 = vmatprep.subr.mxu0 0.0
        %643 = vmatpush1.msra.mxu0 0.0
        %644 = vmatprep.subr.mxu0 0.0
        %645 = vmatpush1.msra.mxu0 0.0
        %646 = vmatprep.subr.mxu0 0.0
        %647 = vmatpush1.msra.mxu0 0.0
        %648 = vmatprep.subr.mxu0 0.0
        %649 = vmatpush1.msra.mxu0 0.0
        %650 = vmatprep.subr.mxu0 0.0
        %651 = vmatpush1.msra.mxu0 0.0
        %652 = vmatprep.subr.mxu0 0.0
        %653 = vmatpush1.msra.mxu0 0.0
        %654 = vmatprep.subr.mxu0 0.0
        %655 = vmatpush1.msra.mxu0 0.0
        %656 = vmatprep.subr.mxu0 0.0
        %657 = vmatpush1.msra.mxu0 0.0
        %658 = vmatprep.subr.mxu0 0.0
        %659 = vmatpush1.msra.mxu0 0.0
        %660 = vmatprep.subr.mxu0 0.0
        %661 = vmatpush1.msra.mxu0 0.0
        %662 = vmatprep.subr.mxu0 0.0
        %663 = vmatpush1.msra.mxu0 0.0
        %664 = vmatprep.mubr.f32.mxu0 0.0
        %665 = vmatmul.mubr.f32.gmra.mrb[0].mxu0 %v407
        %v666 = vpop.f32.mrb[0].mxu0
        %v667 = vadd.f32 0.0, %v666
        %v668 = vpop.f32.mrb[0].mxu0
        %669 = vdwg.mxu0
        %v670 = vld [vmem:[#allocation5] sm:$0xff]
        %v672 = vsel %vm570, %v597, 0
        %674 = vmatprep.subr.mxu0 0.0
        %675 = vmatpush1.msra.mxu0 %v670
        %676 = vmatprep.subr.mxu0 0.0
        %677 = vmatpush1.msra.mxu0 0.0
        %678 = vmatprep.subr.mxu0 0.0
        %679 = vmatpush1.msra.mxu0 0.0
        %680 = vmatprep.subr.mxu0 0.0
        %681 = vmatpush1.msra.mxu0 0.0
        %682 = vmatprep.subr.mxu0 0.0
        %683 = vmatpush1.msra.mxu0 0.0
        %684 = vmatprep.subr.mxu0 0.0
        %685 = vmatpush1.msra.mxu0 0.0
        %686 = vmatprep.subr.mxu0 0.0
        %687 = vmatpush1.msra.mxu0 0.0
        %688 = vmatprep.subr.mxu0 0.0
        %689 = vmatpush1.msra.mxu0 0.0
        %690 = vmatprep.subr.mxu0 0.0
        %691 = vmatpush1.msra.mxu0 0.0
        %692 = vmatprep.subr.mxu0 0.0
        %693 = vmatpush1.msra.mxu0 0.0
        %694 = vmatprep.subr.mxu0 0.0
        %695 = vmatpush1.msra.mxu0 0.0
        %696 = vmatprep.subr.mxu0 0.0
        %697 = vmatpush1.msra.mxu0 0.0
        %698 = vmatprep.subr.mxu0 0.0
        %699 = vmatpush1.msra.mxu0 0.0
        %700 = vmatprep.subr.mxu0 0.0
        %701 = vmatpush1.msra.mxu0 0.0
        %702 = vmatprep.subr.mxu0 0.0
        %703 = vmatpush1.msra.mxu0 0.0
        %704 = vmatprep.subr.mxu0 0.0
        %705 = vmatpush1.msra.mxu0 0.0
        %706 = vmatprep.subr.mxu0 0.0
        %707 = vmatpush1.msra.mxu0 0.0
        %708 = vmatprep.subr.mxu0 0.0
        %709 = vmatpush1.msra.mxu0 0.0
        %710 = vmatprep.subr.mxu0 0.0
        %711 = vmatpush1.msra.mxu0 0.0
        %712 = vmatprep.subr.mxu0 0.0
        %713 = vmatpush1.msra.mxu0 0.0
        %714 = vmatprep.subr.mxu0 0.0
        %715 = vmatpush1.msra.mxu0 0.0
        %716 = vmatprep.subr.mxu0 0.0
        %717 = vmatpush1.msra.mxu0 0.0
        %718 = vmatprep.subr.mxu0 0.0
        %719 = vmatpush1.msra.mxu0 0.0
        %720 = vmatprep.subr.mxu0 0.0
        %721 = vmatpush1.msra.mxu0 0.0
        %722 = vmatprep.subr.mxu0 0.0
        %723 = vmatpush1.msra.mxu0 0.0
        %724 = vmatprep.subr.mxu0 0.0
        %725 = vmatpush1.msra.mxu0 0.0
        %726 = vmatprep.subr.mxu0 0.0
        %727 = vmatpush1.msra.mxu0 0.0
        %728 = vmatprep.subr.mxu0 0.0
        %729 = vmatpush1.msra.mxu0 0.0
        %730 = vmatprep.subr.mxu0 0.0
        %731 = vmatpush1.msra.mxu0 0.0
        %732 = vmatprep.subr.mxu0 0.0
        %733 = vmatpush1.msra.mxu0 0.0
        %734 = vmatprep.subr.mxu0 0.0
        %735 = vmatpush1.msra.mxu0 0.0
        %736 = vmatprep.subr.mxu0 0.0
        %737 = vmatpush1.msra.mxu0 0.0
        %738 = vmatprep.mubr.f32.mxu0 0.0
        %739 = vmatmul.mubr.f32.gmra.mrb[0].mxu0 %v672
        %v740 = vpop.f32.mrb[0].mxu0
        %v741 = vadd.f32 0.0, %v740
        %v742 = vpop.f32.mrb[0].mxu0
        %743 = vdwg.mxu0
        %v744 = vlaneseq
        %v745 = vshrl.u32 %v744, 7
        %v746 = vsub.s32 0, %v745
        %v747 = vrot.slane %v741, %v746
        %v748 = vadd.f32 %v667, %v747
        %v749 = vld [vmem:[#allocation7] sm:$0x1]
        %v751 = vlaneseq
        %v752 = vshrl.u32 %v751, 7
        %v753 = vsub.s32 0, %v752
        %v754 = vrot.slane %v749, %v753
        %v756 = vadd.f32 %v748, %v754
        %v757 = vmul.f32 %v756, 0.5
        %v758 = vmul.f32 %v756, 0.70710677
        %v759 = verf.f32.pop %v758
        %v760 = vadd.f32 %v759, 1.0
        %v761 = vmul.f32 %v757, %v760
        %v762 = vld [vmem:[%s8] sm:$0xff]
        %v763 = vld [vmem:[%s8 + $0x8] sm:$0xff]
        %v764 = vld [vmem:[%s9] sm:$0x1]
        %v766 = vlaneseq
        %v767 = vshrl.u32 %v766, 7
        %v768 = vsub.s32 0, %v767
        %v769 = vrot.slane %v764, %v768
        %v772 = vsel %vm405, %v761, 0
        %774 = vmatprep.subr.mxu0 0.0
        %775 = vmatpush1.msra.mxu0 %v762
        %776 = vmatprep.subr.mxu0 0.0
        %777 = vmatpush1.msra.mxu0 %v763
        %778 = vmatprep.subr.mxu0 0.0
        %779 = vmatpush1.msra.mxu0 0.0
        %780 = vmatprep.subr.mxu0 0.0
        %781 = vmatpush1.msra.mxu0 0.0
        %782 = vmatprep.subr.mxu0 0.0
        %783 = vmatpush1.msra.mxu0 0.0
        %784 = vmatprep.subr.mxu0 0.0
        %785 = vmatpush1.msra.mxu0 0.0
        %786 = vmatprep.subr.mxu0 0.0
        %787 = vmatpush1.msra.mxu0 0.0
        %788 = vmatprep.subr.mxu0 0.0
        %789 = vmatpush1.msra.mxu0 0.0
        %790 = vmatprep.subr.mxu0 0.0
        %791 = vmatpush1.msra.mxu0 0.0
        %792 = vmatprep.subr.mxu0 0.0
        %793 = vmatpush1.msra.mxu0 0.0
        %794 = vmatprep.subr.mxu0 0.0
        %795 = vmatpush1.msra.mxu0 0.0
        %796 = vmatprep.subr.mxu0 0.0
        %797 = vmatpush1.msra.mxu0 0.0
        %798 = vmatprep.subr.mxu0 0.0
        %799 = vmatpush1.msra.mxu0 0.0
        %800 = vmatprep.subr.mxu0 0.0
        %801 = vmatpush1.msra.mxu0 0.0
        %802 = vmatprep.subr.mxu0 0.0
        %803 = vmatpush1.msra.mxu0 0.0
        %804 = vmatprep.subr.mxu0 0.0
        %805 = vmatpush1.msra.mxu0 0.0
        %806 = vmatprep.subr.mxu0 0.0
        %807 = vmatpush1.msra.mxu0 0.0
        %808 = vmatprep.subr.mxu0 0.0
        %809 = vmatpush1.msra.mxu0 0.0
        %810 = vmatprep.subr.mxu0 0.0
        %811 = vmatpush1.msra.mxu0 0.0
        %812 = vmatprep.subr.mxu0 0.0
        %813 = vmatpush1.msra.mxu0 0.0
        %814 = vmatprep.subr.mxu0 0.0
        %815 = vmatpush1.msra.mxu0 0.0
        %816 = vmatprep.subr.mxu0 0.0
        %817 = vmatpush1.msra.mxu0 0.0
        %818 = vmatprep.subr.mxu0 0.0
        %819 = vmatpush1.msra.mxu0 0.0
        %820 = vmatprep.subr.mxu0 0.0
        %821 = vmatpush1.msra.mxu0 0.0
        %822 = vmatprep.subr.mxu0 0.0
        %823 = vmatpush1.msra.mxu0 0.0
        %824 = vmatprep.subr.mxu0 0.0
        %825 = vmatpush1.msra.mxu0 0.0
        %826 = vmatprep.subr.mxu0 0.0
        %827 = vmatpush1.msra.mxu0 0.0
        %828 = vmatprep.subr.mxu0 0.0
        %829 = vmatpush1.msra.mxu0 0.0
        %830 = vmatprep.subr.mxu0 0.0
        %831 = vmatpush1.msra.mxu0 0.0
        %832 = vmatprep.subr.mxu0 0.0
        %833 = vmatpush1.msra.mxu0 0.0
        %834 = vmatprep.subr.mxu0 0.0
        %835 = vmatpush1.msra.mxu0 0.0
        %836 = vmatprep.subr.mxu0 0.0
        %837 = vmatpush1.msra.mxu0 0.0
        %838 = vmatprep.mubr.f32.mxu0 0.0
        %839 = vmatmul.mubr.f32.gmra.mrb[0].mxu0 %v772
        %v840 = vpop.f32.mrb[0].mxu0
        %v841 = vadd.f32 %v769, %v840
        %v842 = vpop.f32.mrb[0].mxu0
        %843 = vdwg.mxu0
        %844 = vst.msk [vmem:[%s390] sm:$0xff] %vm405, %v841
        %s845 = sand.u32 %s249, 1
        %s846 = scalar_lea.sflag [#allocation4], %s845
        %s847 = sand.u32 %s249, 1
        %s848 = smul.addr %s847, 8
        %s849 = scalar_lea.vmem [#allocation8], %s848
        // Predicated region
        $region73: #{tpu_custom_call.1} parent=59 // pred_check
          %p850 = pneg %p259
        $region74: #{tpu_custom_call.1} parent=59 // pred_check_branch
          %852 = sbr.rel (%p850) target = $region76
        $region75: #{tpu_custom_call.1} parent=59 // pred_region
          %s854 = ssub.s32 128, 128
          %855 = vsyncadd %s846, %s854
          %s856 = smul.addr %s26, 128
          %s857 = scalar_lea.hbm %s10, %s856
          %s859 = sshll.u32 %s849, 4
          %s860 = int_to_ptr.vmem [resolvable:$true] %s859
          %862 = dma.vmem_to_hbm [thread:$0]  %s860, 128, %s857, %s846
        $region76: #{tpu_custom_call.1} parent=59 // pred_fallthru
          _
      $region60: #{tpu_custom_call.1} parent=5 // pred_fallthru
        _
      %p863 = scmp.le.s32.totalorder 2, %s21
      // Predicated region
      $region77: #{tpu_custom_call.1} parent=5 // pred_check
        %p864 = pneg %p863
      $region78: #{tpu_custom_call.1} parent=5 // pred_check_branch
        %866 = sbr.rel (%p864) target = $region80
      $region79: #{tpu_custom_call.1} parent=5 // pred_region
        %s867 = ssub.s32 %s21, 2
        // Predicated region
        $region81: #{tpu_custom_call.1} parent=79 // pred_check
          %p868 = pneg %p265
        $region82: #{tpu_custom_call.1} parent=79 // pred_check_branch
          %870 = sbr.rel (%p868) target = $region84
        $region83: #{tpu_custom_call.1} parent=79 // pred_region
          %s871 = sand.u32 %s250, 1
          %s872 = scalar_lea.sflag [#allocation4], %s871
          %s873 = sand.u32 %s250, 1
          %s874 = smul.addr %s873, 8
          %s875 = scalar_lea.vmem [#allocation8], %s874
          %876 = dma.done %s872, 128
        $region84: #{tpu_custom_call.1} parent=79 // pred_fallthru
          _
      $region80: #{tpu_custom_call.1} parent=5 // pred_fallthru
        _
    $region6: #{tpu_custom_call.1} parent=1 // loop_footer
      %s25 = sadd.s32 1, %s21
    $region7: #{tpu_custom_call.1} parent=1 // loop_footer_branch
      %20 = sbr.rel target = $region3
    $region8: #{tpu_custom_call.1} parent=1 // loop_exit
      _
    %877 = vsyncpa [#allocation3], 1
    %s878 = scalar_lea.sflag [#allocation3], 1
    %879 = vsyncpa %s878, 1
    %880 = vsyncpa [#allocation6], 1
    %881 = vsyncpa [#allocation4], 1
    %s882 = scalar_lea.sflag [#allocation4], 1
    %883 = vsyncpa %s882, 1

// kernel: tpu_custom_call.1
$region0: #{tpu_custom_call.1}
  #allocation0 [shape = 'u32[]', space=smem, size = 0x4, offset = 0x4, fixed_abs, tag = 'smem constant byte address 0x4 - core index']
  #allocation1 [shape = 'u32[144,128]{1,0:T(1,128)}', space=vmem, size = 0x12000, scoped, tag = 'internal scratch']
  %s0 = inlined_call_operand.vmem [shape: f32[16,16], index: 0, kind: input, shape index: {}]
  %s1 = inlined_call_operand.hbm [shape: f32[16,16], index: 1, kind: input, shape index: {}]
  %s2 = inlined_call_operand.vmem [shape: f32[1,16], index: 2, kind: input, shape index: {}]
  %s3 = inlined_call_operand.vmem [shape: f32[16,8], index: 3, kind: input, shape index: {}]
  %s4 = inlined_call_operand.vmem [shape: f32[1,8], index: 4, kind: input, shape index: {}]
  %s5 = inlined_call_operand.vmem [shape: f32[16,16], index: 5, kind: input, shape index: {}]
  %s6 = inlined_call_operand.hbm [shape: f32[8,16], index: 6, kind: input, shape index: {}]
  %s7 = inlined_call_operand.hbm [shape: f32[1,16], index: 7, kind: input, shape index: {}]
  %s8 = inlined_call_operand.vmem [shape: f32[16,16], index: 8, kind: input, shape index: {}]
  %s9 = inlined_call_operand.vmem [shape: f32[1,16], index: 9, kind: input, shape index: {}]
  %s10 = inlined_call_operand.hbm [shape: f32[16,16], index: 10, kind: output, shape index: {}]
  %s11 = sld [smem:[#allocation0]]
  $region85: #{tpu_custom_call.1} parent=0
    _
  %s13 = ssub.s32 1, %s11
  %s14 = scalar_select 0, %s13, %s11
  $region1: #{tpu_custom_call.1} parent=0
    #allocation2 [shape = 'u8[8192]{0}', space=vmem, size = 0x2000, scoped, tag = 'input window, operand 1, single buffered']
    #allocation3 [shape = 's32[2]{0}', space=sflag, size = 0x8, scoped, tag = 'scoped memory for tpu_custom_call.1']
    #allocation4 [shape = 's32[2]{0}', space=sflag, size = 0x8, scoped, tag = 'scoped memory for tpu_custom_call.1']
    #allocation5 [shape = 'u8[4096]{0}', space=vmem, size = 0x1000, scoped, tag = 'input window, operand 6, single buffered']
    #allocation6 [shape = 's32[1]{0}', space=sflag, size = 0x4, scoped, tag = 'scoped memory for tpu_custom_call.1']
    #allocation7 [shape = 'u8[512]{0}', space=vmem, size = 0x400, scoped, tag = 'input window, operand 7, single buffered']
    #allocation8 [shape = 'u8[8192]{0}', space=vmem, size = 0x2000, scoped, tag = 'output window, operand 0']
    %15 = vsyncpa [#allocation3], 0
    %16 = vsyncpa [#allocation6], 0
    %17 = vsyncpa [#allocation4], 0
    %s18 = scalar_lea.sflag [#allocation4], 1
    %19 = vsyncpa %s18, 0
    loop: start=0, step=1, limit=4
    $region2: #{tpu_custom_call.1} parent=1 // loop_pre_header
      _
    $region3: #{tpu_custom_call.1} parent=1 // loop_header
      %s21 = sphi 0, %s25
      %p22 = scmp.ge.s32.totalorder %s21, 4
      %s31 = sphi 0, %s33
      %s34 = sphi 0, %s31
      %s35 = sphi 0, %s34
      %s51 = sphi 0, %s35
      %s55 = sphi 0, %s55
      %s57 = sphi 0, %s55
      %s58 = sphi 0, %s57
      %s72 = sphi 0, %s58
      %s76 = sphi 0, %s76
      %s78 = sphi 0, %s76
      %s79 = sphi 0, %s78
      %s93 = sphi 0, %s79
      %s97 = sphi 0, %s97
      %s99 = sphi 0, %s97
      %s100 = sphi 0, %s99
      %s114 = sphi 0, %s100
      %s118 = sphi 0, %s118
      %s120 = sphi 0, %s118
      %s121 = sphi 0, %s120
      %s135 = sphi 0, %s121
      %s139 = sphi 0, %s139
      %s141 = sphi 0, %s139
      %s142 = sphi 0, %s141
      %s156 = sphi 0, %s142
      %s160 = sphi 0, %s160
      %s162 = sphi 0, %s160
      %s163 = sphi 0, %s162
      %s177 = sphi 0, %s163
      %s181 = sphi 0, %s181
      %s183 = sphi 0, %s181
      %s184 = sphi 0, %s183
      %s198 = sphi 0, %s184
      %s202 = sphi 0, %s202
      %s204 = sphi 0, %s202
      %s205 = sphi 0, %s204
      %s219 = sphi 0, %s205
      %s223 = sphi 0, %s223
      %s225 = sphi 0, %s223
      %s226 = sphi 0, %s225
      %s240 = sphi 0, %s226
      %s246 = sphi 0, %s248
      %s249 = sphi 0, %s246
      %s250 = sphi 0, %s249
      %s266 = sphi 0, %s250
    $region4: #{tpu_custom_call.1} parent=1 // loop_header_branch
      %24 = sbr.rel (%p22) target = $region8
    $region5: #{tpu_custom_call.1} parent=1 // loop_body
      %s26 = ssub.s32 %s21, 1
      %s27 = ssub.s32 %s21, 2
      %s28 = sadd.s32 %s21, 1
      %s29 = ssub.s32 %s21, %s28
      %p30 = scmp.eq.s32.totalorder %s29, 0
      %s32 = sadd.s32 %s31, 1
      %s33 = scalar_select %p30, %s31, %s32
      %p36 = pneg %p30
      %p37 = scmp.eq.s32.totalorder %s21, 1
      %p38 = por %p36, %p37
      %p39 = scmp.ne.s32.totalorder %s31, %s34
      %p40 = scmp.eq.s32.totalorder %s21, 0
      %p41 = por %p39, %p40
      %p42 = scmp.ne.s32.totalorder %s31, %s34
      %p43 = scmp.eq.s32.totalorder %s26, 1
      %p44 = por %p42, %p43
      %p45 = scmp.ne.s32.totalorder %s34, %s35
      %p46 = scmp.eq.s32.totalorder %s26, 0
      %p47 = por %p45, %p46
      %p48 = scmp.ne.s32.totalorder %s34, %s35
      %p49 = scmp.eq.s32.totalorder %s27, 1
      %p50 = por %p48, %p49
      %p52 = scmp.ne.s32.totalorder %s35, %s51
      %p53 = scmp.eq.s32.totalorder %s27, 0
      %p54 = por %p52, %p53
      %s56 = sadd.s32 %s55, 1
      %p59 = scmp.eq.s32.totalorder %s21, 1
      %p60 = scmp.ne.s32.totalorder %s55, %s57
      %p61 = scmp.eq.s32.totalorder %s21, 0
      %p62 = por %p60, %p61
      %p63 = scmp.ne.s32.totalorder %s55, %s57
      %p64 = scmp.eq.s32.totalorder %s26, 1
      %p65 = por %p63, %p64
      %p66 = scmp.ne.s32.totalorder %s57, %s58
      %p67 = scmp.eq.s32.totalorder %s26, 0
      %p68 = por %p66, %p67
      %p69 = scmp.ne.s32.totalorder %s57, %s58
      %p70 = scmp.eq.s32.totalorder %s27, 1
      %p71 = por %p69, %p70
      %p73 = scmp.ne.s32.totalorder %s58, %s72
      %p74 = scmp.eq.s32.totalorder %s27, 0
      %p75 = por %p73, %p74
      %s77 = sadd.s32 %s76, 1
      %p80 = scmp.eq.s32.totalorder %s21, 1
      %p81 = scmp.ne.s32.totalorder %s76, %s78
      %p82 = scmp.eq.s32.totalorder %s21, 0
      %p83 = por %p81, %p82
      %p84 = scmp.ne.s32.totalorder %s76, %s78
      %p85 = scmp.eq.s32.totalorder %s26, 1
      %p86 = por %p84, %p85
      %p87 = scmp.ne.s32.totalorder %s78, %s79
      %p88 = scmp.eq.s32.totalorder %s26, 0
      %p89 = por %p87, %p88
      %p90 = scmp.ne.s32.totalorder %s78, %s79
      %p91 = scmp.eq.s32.totalorder %s27, 1
      %p92 = por %p90, %p91
      %p94 = scmp.ne.s32.totalorder %s79, %s93
      %p95 = scmp.eq.s32.totalorder %s27, 0
      %p96 = por %p94, %p95
      %s98 = sadd.s32 %s97, 1
      %p101 = scmp.eq.s32.totalorder %s21, 1
      %p102 = scmp.ne.s32.totalorder %s97, %s99
      %p103 = scmp.eq.s32.totalorder %s21, 0
      %p104 = por %p102, %p103
      %p105 = scmp.ne.s32.totalorder %s97, %s99
      %p106 = scmp.eq.s32.totalorder %s26, 1
      %p107 = por %p105, %p106
      %p108 = scmp.ne.s32.totalorder %s99, %s100
      %p109 = scmp.eq.s32.totalorder %s26, 0
      %p110 = por %p108, %p109
      %p111 = scmp.ne.s32.totalorder %s99, %s100
      %p112 = scmp.eq.s32.totalorder %s27, 1
      %p113 = por %p111, %p112
      %p115 = scmp.ne.s32.totalorder %s100, %s114
      %p116 = scmp.eq.s32.totalorder %s27, 0
      %p117 = por %p115, %p116
      %s119 = sadd.s32 %s118, 1
      %p122 = scmp.eq.s32.totalorder %s21, 1
      %p123 = scmp.ne.s32.totalorder %s118, %s120
      %p124 = scmp.eq.s32.totalorder %s21, 0
      %p125 = por %p123, %p124
      %p126 = scmp.ne.s32.totalorder %s118, %s120
      %p127 = scmp.eq.s32.totalorder %s26, 1
      %p128 = por %p126, %p127
      %p129 = scmp.ne.s32.totalorder %s120, %s121
      %p130 = scmp.eq.s32.totalorder %s26, 0
      %p131 = por %p129, %p130
      %p132 = scmp.ne.s32.totalorder %s120, %s121
      %p133 = scmp.eq.s32.totalorder %s27, 1
      %p134 = por %p132, %p133
      %p136 = scmp.ne.s32.totalorder %s121, %s135
      %p137 = scmp.eq.s32.totalorder %s27, 0
      %p138 = por %p136, %p137
      %s140 = sadd.s32 %s139, 1
      %p143 = scmp.eq.s32.totalorder %s21, 1
      %p144 = scmp.ne.s32.totalorder %s139, %s141
      %p145 = scmp.eq.s32.totalorder %s21, 0
      %p146 = por %p144, %p145
      %p147 = scmp.ne.s32.totalorder %s139, %s141
      %p148 = scmp.eq.s32.totalorder %s26, 1
      %p149 = por %p147, %p148
      %p150 = scmp.ne.s32.totalorder %s141, %s142
      %p151 = scmp.eq.s32.totalorder %s26, 0
      %p152 = por %p150, %p151
      %p153 = scmp.ne.s32.totalorder %s141, %s142
      %p154 = scmp.eq.s32.totalorder %s27, 1
      %p155 = por %p153, %p154
      %p157 = scmp.ne.s32.totalorder %s142, %s156
      %p158 = scmp.eq.s32.totalorder %s27, 0
      %p159 = por %p157, %p158
      %s161 = sadd.s32 %s160, 1
      %p164 = scmp.eq.s32.totalorder %s21, 1
      %p165 = scmp.ne.s32.totalorder %s160, %s162
      %p166 = scmp.eq.s32.totalorder %s21, 0
      %p167 = por %p165, %p166
      %p168 = scmp.ne.s32.totalorder %s160, %s162
      %p169 = scmp.eq.s32.totalorder %s26, 1
      %p170 = por %p168, %p169
      %p171 = scmp.ne.s32.totalorder %s162, %s163
      %p172 = scmp.eq.s32.totalorder %s26, 0
      %p173 = por %p171, %p172
      %p174 = scmp.ne.s32.totalorder %s162, %s163
      %p175 = scmp.eq.s32.totalorder %s27, 1
      %p176 = por %p174, %p175
      %p178 = scmp.ne.s32.totalorder %s163, %s177
      %p179 = scmp.eq.s32.totalorder %s27, 0
      %p180 = por %p178, %p179
      %s182 = sadd.s32 %s181, 1
      %p185 = scmp.eq.s32.totalorder %s21, 1
      %p186 = scmp.ne.s32.totalorder %s181, %s183
      %p187 = scmp.eq.s32.totalorder %s21, 0
      %p188 = por %p186, %p187
      %p189 = scmp.ne.s32.totalorder %s181, %s183
      %p190 = scmp.eq.s32.totalorder %s26, 1
      %p191 = por %p189, %p190
      %p192 = scmp.ne.s32.totalorder %s183, %s184
      %p193 = scmp.eq.s32.totalorder %s26, 0
      %p194 = por %p192, %p193
      %p195 = scmp.ne.s32.totalorder %s183, %s184
      %p196 = scmp.eq.s32.totalorder %s27, 1
      %p197 = por %p195, %p196
      %p199 = scmp.ne.s32.totalorder %s184, %s198
      %p200 = scmp.eq.s32.totalorder %s27, 0
      %p201 = por %p199, %p200
      %s203 = sadd.s32 %s202, 1
      %p206 = scmp.eq.s32.totalorder %s21, 1
      %p207 = scmp.ne.s32.totalorder %s202, %s204
      %p208 = scmp.eq.s32.totalorder %s21, 0
      %p209 = por %p207, %p208
      %p210 = scmp.ne.s32.totalorder %s202, %s204
      %p211 = scmp.eq.s32.totalorder %s26, 1
      %p212 = por %p210, %p211
      %p213 = scmp.ne.s32.totalorder %s204, %s205
      %p214 = scmp.eq.s32.totalorder %s26, 0
      %p215 = por %p213, %p214
      %p216 = scmp.ne.s32.totalorder %s204, %s205
      %p217 = scmp.eq.s32.totalorder %s27, 1
      %p218 = por %p216, %p217
      %p220 = scmp.ne.s32.totalorder %s205, %s219
      %p221 = scmp.eq.s32.totalorder %s27, 0
      %p222 = por %p220, %p221
      %s224 = sadd.s32 %s223, 1
      %p227 = scmp.eq.s32.totalorder %s21, 1
      %p228 = scmp.ne.s32.totalorder %s223, %s225
      %p229 = scmp.eq.s32.totalorder %s21, 0
      %p230 = por %p228, %p229
      %p231 = scmp.ne.s32.totalorder %s223, %s225
      %p232 = scmp.eq.s32.totalorder %s26, 1
      %p233 = por %p231, %p232
      %p234 = scmp.ne.s32.totalorder %s225, %s226
      %p235 = scmp.eq.s32.totalorder %s26, 0
      %p236 = por %p234, %p235
      %p237 = scmp.ne.s32.totalorder %s225, %s226
      %p238 = scmp.eq.s32.totalorder %s27, 1
      %p239 = por %p237, %p238
      %p241 = scmp.ne.s32.totalorder %s226, %s240
      %p242 = scmp.eq.s32.totalorder %s27, 0
      %p243 = por %p241, %p242
      %s244 = ssub.s32 %s21, %s28
      %p245 = scmp.eq.s32.totalorder %s244, 0
      %s247 = sadd.s32 %s246, 1
      %s248 = scalar_select %p245, %s246, %s247
      %p251 = pneg %p245
      %p252 = scmp.eq.s32.totalorder %s21, 1
      %p253 = por %p251, %p252
      %p254 = scmp.ne.s32.totalorder %s246, %s249
      %p255 = scmp.eq.s32.totalorder %s21, 0
      %p256 = por %p254, %p255
      %p257 = scmp.ne.s32.totalorder %s246, %s249
      %p258 = scmp.eq.s32.totalorder %s26, 1
      %p259 = por %p257, %p258
      %p260 = scmp.ne.s32.totalorder %s249, %s250
      %p261 = scmp.eq.s32.totalorder %s26, 0
      %p262 = por %p260, %p261
      %p263 = scmp.ne.s32.totalorder %s249, %s250
      %p264 = scmp.eq.s32.totalorder %s27, 1
      %p265 = por %p263, %p264
      %p267 = scmp.ne.s32.totalorder %s250, %s266
      %p268 = scmp.eq.s32.totalorder %s27, 0
      %p269 = por %p267, %p268
      %p270 = scmp.le.s32.totalorder 1, %s21
      %p271 = scmp.lt.s32.totalorder %s21, 3
      %p272 = pnand %p270, %p271
      %p273 = pneg %p272
      // Predicated region
      $region9: #{tpu_custom_call.1} parent=5 // pred_check
        _
      $region10: #{tpu_custom_call.1} parent=5 // pred_check_branch
        %275 = sbr.rel (%p272) target = $region12
      $region11: #{tpu_custom_call.1} parent=5 // pred_region
        %s276 = ssub.s32 %s21, 1
        // Predicated region
        $region13: #{tpu_custom_call.1} parent=11 // pred_check
          %p277 = pneg %p68
        $region14: #{tpu_custom_call.1} parent=11 // pred_check_branch
          %279 = sbr.rel (%p277) target = $region16
        $region15: #{tpu_custom_call.1} parent=11 // pred_region
          %s281 = ssub.s32 256, 256
          %282 = vsyncadd [#allocation3], %s281
          %s283 = sshll.u32 [#allocation2], 4
          %s284 = int_to_ptr.vmem [resolvable:$true] %s283
          %289 = dma.hbm_to_vmem [thread:$0]  %s1, 256, %s284, [#allocation3], 128, 128, 8
        $region16: #{tpu_custom_call.1} parent=11 // pred_fallthru
          _
        // Predicated region
        $region17: #{tpu_custom_call.1} parent=11 // pred_check
          %p290 = pneg %p89
        $region18: #{tpu_custom_call.1} parent=11 // pred_check_branch
          %292 = sbr.rel (%p290) target = $region20
        $region19: #{tpu_custom_call.1} parent=11 // pred_region
          _
        $region20: #{tpu_custom_call.1} parent=11 // pred_fallthru
          _
        // Predicated region
        $region21: #{tpu_custom_call.1} parent=11 // pred_check
          %p293 = pneg %p110
        $region22: #{tpu_custom_call.1} parent=11 // pred_check_branch
          %295 = sbr.rel (%p293) target = $region24
        $region23: #{tpu_custom_call.1} parent=11 // pred_region
          _
        $region24: #{tpu_custom_call.1} parent=11 // pred_fallthru
          _
        // Predicated region
        $region25: #{tpu_custom_call.1} parent=11 // pred_check
          %p296 = pneg %p131
        $region26: #{tpu_custom_call.1} parent=11 // pred_check_branch
          %298 = sbr.rel (%p296) target = $region28
        $region27: #{tpu_custom_call.1} parent=11 // pred_region
          _
        $region28: #{tpu_custom_call.1} parent=11 // pred_fallthru
          _
        // Predicated region
        $region29: #{tpu_custom_call.1} parent=11 // pred_check
          %p299 = pneg %p152
        $region30: #{tpu_custom_call.1} parent=11 // pred_check_branch
          %301 = sbr.rel (%p299) target = $region32
        $region31: #{tpu_custom_call.1} parent=11 // pred_region
          _
        $region32: #{tpu_custom_call.1} parent=11 // pred_fallthru
          _
        // Predicated region
        $region33: #{tpu_custom_call.1} parent=11 // pred_check
          %p302 = pneg %p173
        $region34: #{tpu_custom_call.1} parent=11 // pred_check_branch
          %304 = sbr.rel (%p302) target = $region36
        $region35: #{tpu_custom_call.1} parent=11 // pred_region
          %s306 = ssub.s32 128, 128
          %307 = vsyncadd [#allocation6], %s306
          %s309 = sshll.u32 [#allocation5], 4
          %s310 = int_to_ptr.vmem [resolvable:$true] %s309
          %312 = dma.hbm_to_vmem [thread:$0]  %s6, 128, %s310, [#allocation6]
        $region36: #{tpu_custom_call.1} parent=11 // pred_fallthru
          _
        // Predicated region
        $region37: #{tpu_custom_call.1} parent=11 // pred_check
          %p313 = pneg %p194
        $region38: #{tpu_custom_call.1} parent=11 // pred_check_branch
          %315 = sbr.rel (%p313) target = $region40
        $region39: #{tpu_custom_call.1} parent=11 // pred_region
          %s317 = ssub.s32 16, 16
          %318 = vsyncadd [#allocation6], %s317
          %s320 = sshll.u32 [#allocation7], 4
          %s321 = int_to_ptr.vmem [resolvable:$true] %s320
          %323 = dma.hbm_to_vmem [thread:$0]  %s7, 16, %s321, [#allocation6]
        $region40: #{tpu_custom_call.1} parent=11 // pred_fallthru
          _
        // Predicated region
        $region41: #{tpu_custom_call.1} parent=11 // pred_check
          %p324 = pneg %p215
        $region42: #{tpu_custom_call.1} parent=11 // pred_check_branch
          %326 = sbr.rel (%p324) target = $region44
        $region43: #{tpu_custom_call.1} parent=11 // pred_region
          _
        $region44: #{tpu_custom_call.1} parent=11 // pred_fallthru
          _
        // Predicated region
        $region45: #{tpu_custom_call.1} parent=11 // pred_check
          %p327 = pneg %p236
        $region46: #{tpu_custom_call.1} parent=11 // pred_check_branch
          %329 = sbr.rel (%p327) target = $region48
        $region47: #{tpu_custom_call.1} parent=11 // pred_region
          _
        $region48: #{tpu_custom_call.1} parent=11 // pred_fallthru
          _
      $region12: #{tpu_custom_call.1} parent=5 // pred_fallthru
        _
      %p330 = scmp.lt.s32.totalorder %s21, 2
      // Predicated region
      $region49: #{tpu_custom_call.1} parent=5 // pred_check
        %p331 = pneg %p330
      $region50: #{tpu_custom_call.1} parent=5 // pred_check_branch
        %333 = sbr.rel (%p331) target = $region52
      $region51: #{tpu_custom_call.1} parent=5 // pred_region
        // Predicated region
        $region53: #{tpu_custom_call.1} parent=51 // pred_check
          %p334 = pneg %p41
        $region54: #{tpu_custom_call.1} parent=51 // pred_check_branch
          %336 = sbr.rel (%p334) target = $region56
        $region55: #{tpu_custom_call.1} parent=51 // pred_region
          %p337 = scmp.lt.s32.totalorder %s21, 1
          %s338 = scalar_select %p337, %s21, 1
          %s339 = smul.addr %s338, 8
          %s340 = scalar_lea.vmem %s0, %s339
        $region56: #{tpu_custom_call.1} parent=51 // pred_fallthru
          _
      $region52: #{tpu_custom_call.1} parent=5 // pred_fallthru
        _
      %p341 = scmp.le.s32.totalorder 1, %s21
      %p342 = scmp.lt.s32.totalorder %s21, 3
      %p343 = pnand %p341, %p342
      %p344 = pneg %p343
      // Predicated region
      $region57: #{tpu_custom_call.1} parent=5 // pred_check
        _
      $region58: #{tpu_custom_call.1} parent=5 // pred_check_branch
        %346 = sbr.rel (%p343) target = $region60
      $region59: #{tpu_custom_call.1} parent=5 // pred_region
        %s347 = ssub.s32 %s21, 1
        // Predicated region
        $region61: #{tpu_custom_call.1} parent=59 // pred_check
          %p348 = pneg %p68
        $region62: #{tpu_custom_call.1} parent=59 // pred_check_branch
          %350 = sbr.rel (%p348) target = $region64
        $region63: #{tpu_custom_call.1} parent=59 // pred_region
          %351 = dma.done [#allocation3], 256
        $region64: #{tpu_custom_call.1} parent=59 // pred_fallthru
          _
        // Predicated region
        $region65: #{tpu_custom_call.1} parent=59 // pred_check
          %p352 = pneg %p173
        $region66: #{tpu_custom_call.1} parent=59 // pred_check_branch
          %354 = sbr.rel (%p352) target = $region68
        $region67: #{tpu_custom_call.1} parent=59 // pred_region
          %355 = dma.done [#allocation6], 128
        $region68: #{tpu_custom_call.1} parent=59 // pred_fallthru
          _
        // Predicated region
        $region69: #{tpu_custom_call.1} parent=59 // pred_check
          %p356 = pneg %p194
        $region70: #{tpu_custom_call.1} parent=59 // pred_check_branch
          %358 = sbr.rel (%p356) target = $region72
        $region71: #{tpu_custom_call.1} parent=59 // pred_region
          %359 = dma.done [#allocation6], 16
        $region72: #{tpu_custom_call.1} parent=59 // pred_fallthru
          _
        %p360 = scmp.lt.s32.totalorder %s26, 1
        %s361 = scalar_select %p360, %s26, 1
        %s362 = smul.addr %s361, 8
        %s363 = scalar_lea.vmem %s0, %s362
        %p364 = pneg %p47
        %p365 = pneg %p44
        %p366 = pneg %p68
        %p367 = pneg %p65
        %p368 = pneg %p89
        %p369 = pneg %p86
        %p370 = pneg %p110
        %p371 = pneg %p107
        %p372 = pneg %p131
        %p373 = pneg %p128
        %p374 = pneg %p152
        %p375 = pneg %p149
        %p376 = pneg %p173
        %p377 = pneg %p170
        %p378 = pneg %p194
        %p379 = pneg %p191
        %p380 = pneg %p215
        %p381 = pneg %p212
        %p382 = pneg %p236
        %p383 = pneg %p233
        %p384 = pneg %p262
        %p385 = pneg %p259
        %s386 = sand.u32 %s249, 1
        %s387 = scalar_lea.sflag [#allocation4], %s386
        %s388 = sand.u32 %s249, 1
        %s389 = smul.addr %s388, 8
        %s390 = scalar_lea.vmem [#allocation8], %s389
        %p391 = scmp.lt.s32.totalorder %s26, 1
        %s392 = scalar_select %p391, %s26, 1
        %s393 = smul.addr %s392, 8
        %s394 = scalar_lea.vmem %s0, %s393
        %v395 = vld [vmem:[%s394] sm:$0xff]
        %v396 = vld [vmem:[#allocation2] sm:$0xff]
        %v397 = vld [vmem:[#allocation2 + $0x8] sm:$0xff]
        %v398 = vld [vmem:[%s2] sm:$0x1]
        %v400 = vlaneseq
        %v401 = vshrl.u32 %v400, 7
        %v402 = vsub.s32 0, %v401
        %v403 = vrot.slane %v398, %v402
        %vm405 = vcmask 130048
        %v407 = vsel %vm405, %v395, 0
        %409 = vmatprep.subr.mxu0 0.0
        %410 = vmatpush1.msra.mxu0 %v396
        %411 = vmatprep.subr.mxu0 0.0
        %412 = vmatpush1.msra.mxu0 %v397
        %413 = vmatprep.subr.mxu0 0.0
        %414 = vmatpush1.msra.mxu0 0.0
        %415 = vmatprep.subr.mxu0 0.0
        %416 = vmatpush1.msra.mxu0 0.0
        %417 = vmatprep.subr.mxu0 0.0
        %418 = vmatpush1.msra.mxu0 0.0
        %419 = vmatprep.subr.mxu0 0.0
        %420 = vmatpush1.msra.mxu0 0.0
        %421 = vmatprep.subr.mxu0 0.0
        %422 = vmatpush1.msra.mxu0 0.0
        %423 = vmatprep.subr.mxu0 0.0
        %424 = vmatpush1.msra.mxu0 0.0
        %425 = vmatprep.subr.mxu0 0.0
        %426 = vmatpush1.msra.mxu0 0.0
        %427 = vmatprep.subr.mxu0 0.0
        %428 = vmatpush1.msra.mxu0 0.0
        %429 = vmatprep.subr.mxu0 0.0
        %430 = vmatpush1.msra.mxu0 0.0
        %431 = vmatprep.subr.mxu0 0.0
        %432 = vmatpush1.msra.mxu0 0.0
        %433 = vmatprep.subr.mxu0 0.0
        %434 = vmatpush1.msra.mxu0 0.0
        %435 = vmatprep.subr.mxu0 0.0
        %436 = vmatpush1.msra.mxu0 0.0
        %437 = vmatprep.subr.mxu0 0.0
        %438 = vmatpush1.msra.mxu0 0.0
        %439 = vmatprep.subr.mxu0 0.0
        %440 = vmatpush1.msra.mxu0 0.0
        %441 = vmatprep.subr.mxu0 0.0
        %442 = vmatpush1.msra.mxu0 0.0
        %443 = vmatprep.subr.mxu0 0.0
        %444 = vmatpush1.msra.mxu0 0.0
        %445 = vmatprep.subr.mxu0 0.0
        %446 = vmatpush1.msra.mxu0 0.0
        %447 = vmatprep.subr.mxu0 0.0
        %448 = vmatpush1.msra.mxu0 0.0
        %449 = vmatprep.subr.mxu0 0.0
        %450 = vmatpush1.msra.mxu0 0.0
        %451 = vmatprep.subr.mxu0 0.0
        %452 = vmatpush1.msra.mxu0 0.0
        %453 = vmatprep.subr.mxu0 0.0
        %454 = vmatpush1.msra.mxu0 0.0
        %455 = vmatprep.subr.mxu0 0.0
        %456 = vmatpush1.msra.mxu0 0.0
        %457 = vmatprep.subr.mxu0 0.0
        %458 = vmatpush1.msra.mxu0 0.0
        %459 = vmatprep.subr.mxu0 0.0
        %460 = vmatpush1.msra.mxu0 0.0
        %461 = vmatprep.subr.mxu0 0.0
        %462 = vmatpush1.msra.mxu0 0.0
        %463 = vmatprep.subr.mxu0 0.0
        %464 = vmatpush1.msra.mxu0 0.0
        %465 = vmatprep.subr.mxu0 0.0
        %466 = vmatpush1.msra.mxu0 0.0
        %467 = vmatprep.subr.mxu0 0.0
        %468 = vmatpush1.msra.mxu0 0.0
        %469 = vmatprep.subr.mxu0 0.0
        %470 = vmatpush1.msra.mxu0 0.0
        %471 = vmatprep.subr.mxu0 0.0
        %472 = vmatpush1.msra.mxu0 0.0
        %473 = vmatprep.mubr.f32.mxu0 0.0
        %474 = vmatmul.mubr.f32.gmra.mrb[0].mxu0 %v407
        %v475 = vpop.f32.mrb[0].mxu0
        %v476 = vadd.f32 %v403, %v475
        %v477 = vpop.f32.mrb[0].mxu0
        %478 = vdwg.mxu0
        %v479 = vmul.f32 %v476, 0.5
        %v480 = vmul.f32 %v476, 0.70710677
        %v481 = verf.f32.pop %v480
        %v482 = vadd.f32 %v481, 1.0
        %v483 = vmul.f32 %v479, %v482
        %v484 = vld [vmem:[%s3] sm:$0xff]
        %v485 = vld [vmem:[%s3 + $0x8] sm:$0xff]
        %v486 = vld [vmem:[%s4] sm:$0x1]
        %v488 = vlaneseq
        %v489 = vshrl.u32 %v488, 7
        %v490 = vsub.s32 0, %v489
        %v491 = vrot.slane %v486, %v490
        %v494 = vsel %vm405, %v483, 0
        %496 = vmatprep.subr.mxu0 0.0
        %497 = vmatpush1.msra.mxu0 %v484
        %498 = vmatprep.subr.mxu0 0.0
        %499 = vmatpush1.msra.mxu0 %v485
        %500 = vmatprep.subr.mxu0 0.0
        %501 = vmatpush1.msra.mxu0 0.0
        %502 = vmatprep.subr.mxu0 0.0
        %503 = vmatpush1.msra.mxu0 0.0
        %504 = vmatprep.subr.mxu0 0.0
        %505 = vmatpush1.msra.mxu0 0.0
        %506 = vmatprep.subr.mxu0 0.0
        %507 = vmatpush1.msra.mxu0 0.0
        %508 = vmatprep.subr.mxu0 0.0
        %509 = vmatpush1.msra.mxu0 0.0
        %510 = vmatprep.subr.mxu0 0.0
        %511 = vmatpush1.msra.mxu0 0.0
        %512 = vmatprep.subr.mxu0 0.0
        %513 = vmatpush1.msra.mxu0 0.0
        %514 = vmatprep.subr.mxu0 0.0
        %515 = vmatpush1.msra.mxu0 0.0
        %516 = vmatprep.subr.mxu0 0.0
        %517 = vmatpush1.msra.mxu0 0.0
        %518 = vmatprep.subr.mxu0 0.0
        %519 = vmatpush1.msra.mxu0 0.0
        %520 = vmatprep.subr.mxu0 0.0
        %521 = vmatpush1.msra.mxu0 0.0
        %522 = vmatprep.subr.mxu0 0.0
        %523 = vmatpush1.msra.mxu0 0.0
        %524 = vmatprep.subr.mxu0 0.0
        %525 = vmatpush1.msra.mxu0 0.0
        %526 = vmatprep.subr.mxu0 0.0
        %527 = vmatpush1.msra.mxu0 0.0
        %528 = vmatprep.subr.mxu0 0.0
        %529 = vmatpush1.msra.mxu0 0.0
        %530 = vmatprep.subr.mxu0 0.0
        %531 = vmatpush1.msra.mxu0 0.0
        %532 = vmatprep.subr.mxu0 0.0
        %533 = vmatpush1.msra.mxu0 0.0
        %534 = vmatprep.subr.mxu0 0.0
        %535 = vmatpush1.msra.mxu0 0.0
        %536 = vmatprep.subr.mxu0 0.0
        %537 = vmatpush1.msra.mxu0 0.0
        %538 = vmatprep.subr.mxu0 0.0
        %539 = vmatpush1.msra.mxu0 0.0
        %540 = vmatprep.subr.mxu0 0.0
        %541 = vmatpush1.msra.mxu0 0.0
        %542 = vmatprep.subr.mxu0 0.0
        %543 = vmatpush1.msra.mxu0 0.0
        %544 = vmatprep.subr.mxu0 0.0
        %545 = vmatpush1.msra.mxu0 0.0
        %546 = vmatprep.subr.mxu0 0.0
        %547 = vmatpush1.msra.mxu0 0.0
        %548 = vmatprep.subr.mxu0 0.0
        %549 = vmatpush1.msra.mxu0 0.0
        %550 = vmatprep.subr.mxu0 0.0
        %551 = vmatpush1.msra.mxu0 0.0
        %552 = vmatprep.subr.mxu0 0.0
        %553 = vmatpush1.msra.mxu0 0.0
        %554 = vmatprep.subr.mxu0 0.0
        %555 = vmatpush1.msra.mxu0 0.0
        %556 = vmatprep.subr.mxu0 0.0
        %557 = vmatpush1.msra.mxu0 0.0
        %558 = vmatprep.subr.mxu0 0.0
        %559 = vmatpush1.msra.mxu0 0.0
        %560 = vmatprep.mubr.f32.mxu0 0.0
        %561 = vmatmul.mubr.f32.gmra.mrb[0].mxu0 %v494
        %v562 = vpop.f32.mrb[0].mxu0
        %v563 = vadd.f32 %v491, %v562
        %v564 = vpop.f32.mrb[0].mxu0
        %565 = vdwg.mxu0
        %v566 = vlaneseq
        %v567 = vshrl.u32 %v566, 7
        %vm568 = vcmp.lt.s32.totalorder %v567, 4
        %v569 = vsel %vm568, %v563, -1e+30
        %vm570 = vcmask 64512
        %v571 = vsel %vm570, %v569, -inf
        %v572 = vrot.slane %v571, 4
        %v573 = vmax.f32 %v571, %v572
        %v574 = vrot.slane %v573, 2
        %v575 = vmax.f32 %v573, %v574
        %v576 = vrot.slane %v575, 1
        %v577 = vmax.f32 %v575, %v576
        %v578 = vsub.f32 %v569, %v577
        %v579 = vmul.f32 %v578, 1.442695
        %v580 = vpow.pop %v579
        %v581 = vmul.f32 %v569, %v580
        %v582 = vsel %vm570, %v581, 0.0
        %v583 = vrot.slane %v582, 4
        %v584 = vadd.f32 %v582, %v583
        %v585 = vrot.slane %v584, 2
        %v586 = vadd.f32 %v584, %v585
        %v587 = vrot.slane %v586, 1
        %v588 = vadd.f32 %v586, %v587
        %v589 = vsel %vm570, %v580, 0.0
        %v590 = vrot.slane %v589, 4
        %v591 = vadd.f32 %v589, %v590
        %v592 = vrot.slane %v591, 2
        %v593 = vadd.f32 %v591, %v592
        %v594 = vrot.slane %v593, 1
        %v595 = vadd.f32 %v593, %v594
        %v596 = vrcp.pop %v595
        %v597 = vmul.f32 %v588, %v596
        %v598 = vld [vmem:[%s5] sm:$0xff]
        %v599 = vld [vmem:[%s5 + $0x8] sm:$0xff]
        %600 = vmatprep.subr.mxu0 0.0
        %601 = vmatpush1.msra.mxu0 %v598
        %602 = vmatprep.subr.mxu0 0.0
        %603 = vmatpush1.msra.mxu0 %v599
        %604 = vmatprep.subr.mxu0 0.0
        %605 = vmatpush1.msra.mxu0 0.0
        %606 = vmatprep.subr.mxu0 0.0
        %607 = vmatpush1.msra.mxu0 0.0
        %608 = vmatprep.subr.mxu0 0.0
        %609 = vmatpush1.msra.mxu0 0.0
        %610 = vmatprep.subr.mxu0 0.0
        %611 = vmatpush1.msra.mxu0 0.0
        %612 = vmatprep.subr.mxu0 0.0
        %613 = vmatpush1.msra.mxu0 0.0
        %614 = vmatprep.subr.mxu0 0.0
        %615 = vmatpush1.msra.mxu0 0.0
        %616 = vmatprep.subr.mxu0 0.0
        %617 = vmatpush1.msra.mxu0 0.0
        %618 = vmatprep.subr.mxu0 0.0
        %619 = vmatpush1.msra.mxu0 0.0
        %620 = vmatprep.subr.mxu0 0.0
        %621 = vmatpush1.msra.mxu0 0.0
        %622 = vmatprep.subr.mxu0 0.0
        %623 = vmatpush1.msra.mxu0 0.0
        %624 = vmatprep.subr.mxu0 0.0
        %625 = vmatpush1.msra.mxu0 0.0
        %626 = vmatprep.subr.mxu0 0.0
        %627 = vmatpush1.msra.mxu0 0.0
        %628 = vmatprep.subr.mxu0 0.0
        %629 = vmatpush1.msra.mxu0 0.0
        %630 = vmatprep.subr.mxu0 0.0
        %631 = vmatpush1.msra.mxu0 0.0
        %632 = vmatprep.subr.mxu0 0.0
        %633 = vmatpush1.msra.mxu0 0.0
        %634 = vmatprep.subr.mxu0 0.0
        %635 = vmatpush1.msra.mxu0 0.0
        %636 = vmatprep.subr.mxu0 0.0
        %637 = vmatpush1.msra.mxu0 0.0
        %638 = vmatprep.subr.mxu0 0.0
        %639 = vmatpush1.msra.mxu0 0.0
        %640 = vmatprep.subr.mxu0 0.0
        %641 = vmatpush1.msra.mxu0 0.0
        %642 = vmatprep.subr.mxu0 0.0
        %643 = vmatpush1.msra.mxu0 0.0
        %644 = vmatprep.subr.mxu0 0.0
        %645 = vmatpush1.msra.mxu0 0.0
        %646 = vmatprep.subr.mxu0 0.0
        %647 = vmatpush1.msra.mxu0 0.0
        %648 = vmatprep.subr.mxu0 0.0
        %649 = vmatpush1.msra.mxu0 0.0
        %650 = vmatprep.subr.mxu0 0.0
        %651 = vmatpush1.msra.mxu0 0.0
        %652 = vmatprep.subr.mxu0 0.0
        %653 = vmatpush1.msra.mxu0 0.0
        %654 = vmatprep.subr.mxu0 0.0
        %655 = vmatpush1.msra.mxu0 0.0
        %656 = vmatprep.subr.mxu0 0.0
        %657 = vmatpush1.msra.mxu0 0.0
        %658 = vmatprep.subr.mxu0 0.0
        %659 = vmatpush1.msra.mxu0 0.0
        %660 = vmatprep.subr.mxu0 0.0
        %661 = vmatpush1.msra.mxu0 0.0
        %662 = vmatprep.subr.mxu0 0.0
        %663 = vmatpush1.msra.mxu0 0.0
        %664 = vmatprep.mubr.f32.mxu0 0.0
        %665 = vmatmul.mubr.f32.gmra.mrb[0].mxu0 %v407
        %v666 = vpop.f32.mrb[0].mxu0
        %v667 = vadd.f32 0.0, %v666
        %v668 = vpop.f32.mrb[0].mxu0
        %669 = vdwg.mxu0
        %v670 = vld [vmem:[#allocation5] sm:$0xff]
        %v672 = vsel %vm570, %v597, 0
        %674 = vmatprep.subr.mxu0 0.0
        %675 = vmatpush1.msra.mxu0 %v670
        %676 = vmatprep.subr.mxu0 0.0
        %677 = vmatpush1.msra.mxu0 0.0
        %678 = vmatprep.subr.mxu0 0.0
        %679 = vmatpush1.msra.mxu0 0.0
        %680 = vmatprep.subr.mxu0 0.0
        %681 = vmatpush1.msra.mxu0 0.0
        %682 = vmatprep.subr.mxu0 0.0
        %683 = vmatpush1.msra.mxu0 0.0
        %684 = vmatprep.subr.mxu0 0.0
        %685 = vmatpush1.msra.mxu0 0.0
        %686 = vmatprep.subr.mxu0 0.0
        %687 = vmatpush1.msra.mxu0 0.0
        %688 = vmatprep.subr.mxu0 0.0
        %689 = vmatpush1.msra.mxu0 0.0
        %690 = vmatprep.subr.mxu0 0.0
        %691 = vmatpush1.msra.mxu0 0.0
        %692 = vmatprep.subr.mxu0 0.0
        %693 = vmatpush1.msra.mxu0 0.0
        %694 = vmatprep.subr.mxu0 0.0
        %695 = vmatpush1.msra.mxu0 0.0
        %696 = vmatprep.subr.mxu0 0.0
        %697 = vmatpush1.msra.mxu0 0.0
        %698 = vmatprep.subr.mxu0 0.0
        %699 = vmatpush1.msra.mxu0 0.0
        %700 = vmatprep.subr.mxu0 0.0
        %701 = vmatpush1.msra.mxu0 0.0
        %702 = vmatprep.subr.mxu0 0.0
        %703 = vmatpush1.msra.mxu0 0.0
        %704 = vmatprep.subr.mxu0 0.0
        %705 = vmatpush1.msra.mxu0 0.0
        %706 = vmatprep.subr.mxu0 0.0
        %707 = vmatpush1.msra.mxu0 0.0
        %708 = vmatprep.subr.mxu0 0.0
        %709 = vmatpush1.msra.mxu0 0.0
        %710 = vmatprep.subr.mxu0 0.0
        %711 = vmatpush1.msra.mxu0 0.0
        %712 = vmatprep.subr.mxu0 0.0
        %713 = vmatpush1.msra.mxu0 0.0
        %714 = vmatprep.subr.mxu0 0.0
        %715 = vmatpush1.msra.mxu0 0.0
        %716 = vmatprep.subr.mxu0 0.0
        %717 = vmatpush1.msra.mxu0 0.0
        %718 = vmatprep.subr.mxu0 0.0
        %719 = vmatpush1.msra.mxu0 0.0
        %720 = vmatprep.subr.mxu0 0.0
        %721 = vmatpush1.msra.mxu0 0.0
        %722 = vmatprep.subr.mxu0 0.0
        %723 = vmatpush1.msra.mxu0 0.0
        %724 = vmatprep.subr.mxu0 0.0
        %725 = vmatpush1.msra.mxu0 0.0
        %726 = vmatprep.subr.mxu0 0.0
        %727 = vmatpush1.msra.mxu0 0.0
        %728 = vmatprep.subr.mxu0 0.0
        %729 = vmatpush1.msra.mxu0 0.0
        %730 = vmatprep.subr.mxu0 0.0
        %731 = vmatpush1.msra.mxu0 0.0
        %732 = vmatprep.subr.mxu0 0.0
        %733 = vmatpush1.msra.mxu0 0.0
        %734 = vmatprep.subr.mxu0 0.0
        %735 = vmatpush1.msra.mxu0 0.0
        %736 = vmatprep.subr.mxu0 0.0
        %737 = vmatpush1.msra.mxu0 0.0
        %738 = vmatprep.mubr.f32.mxu0 0.0
        %739 = vmatmul.mubr.f32.gmra.mrb[0].mxu0 %v672
        %v740 = vpop.f32.mrb[0].mxu0
        %v741 = vadd.f32 0.0, %v740
        %v742 = vpop.f32.mrb[0].mxu0
        %743 = vdwg.mxu0
        %v744 = vlaneseq
        %v745 = vshrl.u32 %v744, 7
        %v746 = vsub.s32 0, %v745
        %v747 = vrot.slane %v741, %v746
        %v748 = vadd.f32 %v667, %v747
        %v749 = vld [vmem:[#allocation7] sm:$0x1]
        %v751 = vlaneseq
        %v752 = vshrl.u32 %v751, 7
        %v753 = vsub.s32 0, %v752
        %v754 = vrot.slane %v749, %v753
        %v756 = vadd.f32 %v748, %v754
        %v757 = vmul.f32 %v756, 0.5
        %v758 = vmul.f32 %v756, 0.70710677
        %v759 = verf.f32.pop %v758
        %v760 = vadd.f32 %v759, 1.0
        %v761 = vmul.f32 %v757, %v760
        %v762 = vld [vmem:[%s8] sm:$0xff]
        %v763 = vld [vmem:[%s8 + $0x8] sm:$0xff]
        %v764 = vld [vmem:[%s9] sm:$0x1]
        %v766 = vlaneseq
        %v767 = vshrl.u32 %v766, 7
        %v768 = vsub.s32 0, %v767
        %v769 = vrot.slane %v764, %v768
        %v772 = vsel %vm405, %v761, 0
        %774 = vmatprep.subr.mxu0 0.0
        %775 = vmatpush1.msra.mxu0 %v762
        %776 = vmatprep.subr.mxu0 0.0
        %777 = vmatpush1.msra.mxu0 %v763
        %778 = vmatprep.subr.mxu0 0.0
        %779 = vmatpush1.msra.mxu0 0.0
        %780 = vmatprep.subr.mxu0 0.0
        %781 = vmatpush1.msra.mxu0 0.0
        %782 = vmatprep.subr.mxu0 0.0
        %783 = vmatpush1.msra.mxu0 0.0
        %784 = vmatprep.subr.mxu0 0.0
        %785 = vmatpush1.msra.mxu0 0.0
        %786 = vmatprep.subr.mxu0 0.0
        %787 = vmatpush1.msra.mxu0 0.0
        %788 = vmatprep.subr.mxu0 0.0
        %789 = vmatpush1.msra.mxu0 0.0
        %790 = vmatprep.subr.mxu0 0.0
        %791 = vmatpush1.msra.mxu0 0.0
        %792 = vmatprep.subr.mxu0 0.0
        %793 = vmatpush1.msra.mxu0 0.0
        %794 = vmatprep.subr.mxu0 0.0
        %795 = vmatpush1.msra.mxu0 0.0
        %796 = vmatprep.subr.mxu0 0.0
        %797 = vmatpush1.msra.mxu0 0.0
        %798 = vmatprep.subr.mxu0 0.0
        %799 = vmatpush1.msra.mxu0 0.0
        %800 = vmatprep.subr.mxu0 0.0
        %801 = vmatpush1.msra.mxu0 0.0
        %802 = vmatprep.subr.mxu0 0.0
        %803 = vmatpush1.msra.mxu0 0.0
        %804 = vmatprep.subr.mxu0 0.0
        %805 = vmatpush1.msra.mxu0 0.0
        %806 = vmatprep.subr.mxu0 0.0
        %807 = vmatpush1.msra.mxu0 0.0
        %808 = vmatprep.subr.mxu0 0.0
        %809 = vmatpush1.msra.mxu0 0.0
        %810 = vmatprep.subr.mxu0 0.0
        %811 = vmatpush1.msra.mxu0 0.0
        %812 = vmatprep.subr.mxu0 0.0
        %813 = vmatpush1.msra.mxu0 0.0
        %814 = vmatprep.subr.mxu0 0.0
        %815 = vmatpush1.msra.mxu0 0.0
        %816 = vmatprep.subr.mxu0 0.0
        %817 = vmatpush1.msra.mxu0 0.0
        %818 = vmatprep.subr.mxu0 0.0
        %819 = vmatpush1.msra.mxu0 0.0
        %820 = vmatprep.subr.mxu0 0.0
        %821 = vmatpush1.msra.mxu0 0.0
        %822 = vmatprep.subr.mxu0 0.0
        %823 = vmatpush1.msra.mxu0 0.0
        %824 = vmatprep.subr.mxu0 0.0
        %825 = vmatpush1.msra.mxu0 0.0
        %826 = vmatprep.subr.mxu0 0.0
        %827 = vmatpush1.msra.mxu0 0.0
        %828 = vmatprep.subr.mxu0 0.0
        %829 = vmatpush1.msra.mxu0 0.0
        %830 = vmatprep.subr.mxu0 0.0
        %831 = vmatpush1.msra.mxu0 0.0
        %832 = vmatprep.subr.mxu0 0.0
        %833 = vmatpush1.msra.mxu0 0.0
        %834 = vmatprep.subr.mxu0 0.0
        %835 = vmatpush1.msra.mxu0 0.0
        %836 = vmatprep.subr.mxu0 0.0
        %837 = vmatpush1.msra.mxu0 0.0
        %838 = vmatprep.mubr.f32.mxu0 0.0
        %839 = vmatmul.mubr.f32.gmra.mrb[0].mxu0 %v772
        %v840 = vpop.f32.mrb[0].mxu0
        %v841 = vadd.f32 %v769, %v840
        %v842 = vpop.f32.mrb[0].mxu0
        %843 = vdwg.mxu0
        %844 = vst.msk [vmem:[%s390] sm:$0xff] %vm405, %v841
        %s845 = sand.u32 %s249, 1
        %s846 = scalar_lea.sflag [#allocation4], %s845
        %s847 = sand.u32 %s249, 1
        %s848 = smul.addr %s847, 8
        %s849 = scalar_lea.vmem [#allocation8], %s848
        // Predicated region
        $region73: #{tpu_custom_call.1} parent=59 // pred_check
          %p850 = pneg %p259
        $region74: #{tpu_custom_call.1} parent=59 // pred_check_branch
          %852 = sbr.rel (%p850) target = $region76
        $region75: #{tpu_custom_call.1} parent=59 // pred_region
          %s854 = ssub.s32 128, 128
          %855 = vsyncadd %s846, %s854
          %s856 = smul.addr %s26, 128
          %s857 = scalar_lea.hbm %s10, %s856
          %s859 = sshll.u32 %s849, 4
          %s860 = int_to_ptr.vmem [resolvable:$true] %s859
          %862 = dma.vmem_to_hbm [thread:$0]  %s860, 128, %s857, %s846
        $region76: #{tpu_custom_call.1} parent=59 // pred_fallthru
          _
      $region60: #{tpu_custom_call.1} parent=5 // pred_fallthru
        _
      %p863 = scmp.le.s32.totalorder 2, %s21
      // Predicated region
      $region77: #{tpu_custom_call.1} parent=5 // pred_check
        %p864 = pneg %p863
      $region78: #{tpu_custom_call.1} parent=5 // pred_check_branch
        %866 = sbr.rel (%p864) target = $region80
      $region79: #{tpu_custom_call.1} parent=5 // pred_region
        %s867 = ssub.s32 %s21, 2
        // Predicated region
        $region81: #{tpu_custom_call.1} parent=79 // pred_check
          %p868 = pneg %p265
        $region82: #{tpu_custom_call.1} parent=79 // pred_check_branch
          %870 = sbr.rel (%p868) target = $region84
        $region83: #{tpu_custom_call.1} parent=79 // pred_region
          %s871 = sand.u32 %s250, 1
          %s872 = scalar_lea.sflag [#allocation4], %s871
          %s873 = sand.u32 %s250, 1
          %s874 = smul.addr %s873, 8
          %s875 = scalar_lea.vmem [#allocation8], %s874
          %876 = dma.done %s872, 128
        $region84: #{tpu_custom_call.1} parent=79 // pred_fallthru
          _
      $region80: #{tpu_custom_call.1} parent=5 // pred_fallthru
        _
    $region6: #{tpu_custom_call.1} parent=1 // loop_footer
      %s25 = sadd.s32 1, %s21
    $region7: #{tpu_custom_call.1} parent=1 // loop_footer_branch
      %20 = sbr.rel target = $region3
    $region8: #{tpu_custom_call.1} parent=1 // loop_exit
      _
    %877 = vsyncpa [#allocation3], 1
    %s878 = scalar_lea.sflag [#allocation3], 1
    %879 = vsyncpa %s878, 1
    %880 = vsyncpa [#allocation6], 1
    %881 = vsyncpa [#allocation4], 1
    %s882 = scalar_lea.sflag [#allocation4], 1
    %883 = vsyncpa %s882, 1

// kernel: tpu_custom_call.1
$region0: #{tpu_custom_call.1}
  #allocation0 [shape = 'u32[]', space=smem, size = 0x4, offset = 0x4, fixed_abs, tag = 'smem constant byte address 0x4 - core index']
  #allocation1 [shape = 'u32[144,128]{1,0:T(1,128)}', space=vmem, size = 0x12000, scoped, tag = 'internal scratch']
  #allocation2 [shape = 'f32[8,8]{1,0:T(8,128)}', space=vmem, size = 0x1000, scoped, tag = 'scratch operand']
  #allocation3 [shape = 'f32[8,8]{1,0:T(8,128)}', space=vmem, size = 0x1000, scoped, tag = 'scratch operand']
  %s0 = inlined_call_operand.vmem [shape: f32[16,16], index: 0, kind: input, shape index: {}]
  %s1 = inlined_call_operand.hbm [shape: f32[16,16], index: 1, kind: input, shape index: {}]
  %s2 = inlined_call_operand.vmem [shape: f32[1,16], index: 2, kind: input, shape index: {}]
  %s3 = inlined_call_operand.vmem [shape: f32[16,8], index: 3, kind: input, shape index: {}]
  %s4 = inlined_call_operand.vmem [shape: f32[1,8], index: 4, kind: input, shape index: {}]
  %s5 = inlined_call_operand.vmem [shape: f32[16,16], index: 5, kind: input, shape index: {}]
  %s6 = inlined_call_operand.hbm [shape: f32[8,16], index: 6, kind: input, shape index: {}]
  %s7 = inlined_call_operand.hbm [shape: f32[1,16], index: 7, kind: input, shape index: {}]
  %s8 = inlined_call_operand.vmem [shape: f32[16,16], index: 8, kind: input, shape index: {}]
  %s9 = inlined_call_operand.vmem [shape: f32[1,16], index: 9, kind: input, shape index: {}]
  %s10 = inlined_call_operand.hbm [shape: f32[16,16], index: 10, kind: output, shape index: {}]
  %s11 = sld [smem:[#allocation0]]
  $region85: #{tpu_custom_call.1} parent=0
    _
  %s13 = ssub.s32 1, %s11
  %s14 = scalar_select 0, %s13, %s11
  $region1: #{tpu_custom_call.1} parent=0
    #allocation4 [shape = 'u8[8192]{0}', space=vmem, size = 0x2000, scoped, tag = 'input window, operand 1, single buffered']
    #allocation5 [shape = 's32[2]{0}', space=sflag, size = 0x8, scoped, tag = 'scoped memory for tpu_custom_call.1']
    #allocation6 [shape = 's32[2]{0}', space=sflag, size = 0x8, scoped, tag = 'scoped memory for tpu_custom_call.1']
    #allocation7 [shape = 'u8[4096]{0}', space=vmem, size = 0x1000, scoped, tag = 'input window, operand 6, single buffered']
    #allocation8 [shape = 's32[1]{0}', space=sflag, size = 0x4, scoped, tag = 'scoped memory for tpu_custom_call.1']
    #allocation9 [shape = 'u8[512]{0}', space=vmem, size = 0x400, scoped, tag = 'input window, operand 7, single buffered']
    #allocation10 [shape = 'u8[8192]{0}', space=vmem, size = 0x2000, scoped, tag = 'output window, operand 0']
    %15 = vsyncpa [#allocation5], 0
    %16 = vsyncpa [#allocation8], 0
    %17 = vsyncpa [#allocation6], 0
    %s18 = scalar_lea.sflag [#allocation6], 1
    %19 = vsyncpa %s18, 0
    loop: start=0, step=1, limit=4
    $region2: #{tpu_custom_call.1} parent=1 // loop_pre_header
      _
    $region3: #{tpu_custom_call.1} parent=1 // loop_header
      %s21 = sphi 0, %s25
      %p22 = scmp.ge.s32.totalorder %s21, 4
      %s31 = sphi 0, %s33
      %s34 = sphi 0, %s31
      %s35 = sphi 0, %s34
      %s51 = sphi 0, %s35
      %s55 = sphi 0, %s55
      %s57 = sphi 0, %s55
      %s58 = sphi 0, %s57
      %s72 = sphi 0, %s58
      %s76 = sphi 0, %s76
      %s78 = sphi 0, %s76
      %s79 = sphi 0, %s78
      %s93 = sphi 0, %s79
      %s97 = sphi 0, %s97
      %s99 = sphi 0, %s97
      %s100 = sphi 0, %s99
      %s114 = sphi 0, %s100
      %s118 = sphi 0, %s118
      %s120 = sphi 0, %s118
      %s121 = sphi 0, %s120
      %s135 = sphi 0, %s121
      %s139 = sphi 0, %s139
      %s141 = sphi 0, %s139
      %s142 = sphi 0, %s141
      %s156 = sphi 0, %s142
      %s160 = sphi 0, %s160
      %s162 = sphi 0, %s160
      %s163 = sphi 0, %s162
      %s177 = sphi 0, %s163
      %s181 = sphi 0, %s181
      %s183 = sphi 0, %s181
      %s184 = sphi 0, %s183
      %s198 = sphi 0, %s184
      %s202 = sphi 0, %s202
      %s204 = sphi 0, %s202
      %s205 = sphi 0, %s204
      %s219 = sphi 0, %s205
      %s223 = sphi 0, %s223
      %s225 = sphi 0, %s223
      %s226 = sphi 0, %s225
      %s240 = sphi 0, %s226
      %s246 = sphi 0, %s248
      %s249 = sphi 0, %s246
      %s250 = sphi 0, %s249
      %s266 = sphi 0, %s250
    $region4: #{tpu_custom_call.1} parent=1 // loop_header_branch
      %24 = sbr.rel (%p22) target = $region8
    $region5: #{tpu_custom_call.1} parent=1 // loop_body
      %s26 = ssub.s32 %s21, 1
      %s27 = ssub.s32 %s21, 2
      %s28 = sadd.s32 %s21, 1
      %s29 = ssub.s32 %s21, %s28
      %p30 = scmp.eq.s32.totalorder %s29, 0
      %s32 = sadd.s32 %s31, 1
      %s33 = scalar_select %p30, %s31, %s32
      %p36 = pneg %p30
      %p37 = scmp.eq.s32.totalorder %s21, 1
      %p38 = por %p36, %p37
      %p39 = scmp.ne.s32.totalorder %s31, %s34
      %p40 = scmp.eq.s32.totalorder %s21, 0
      %p41 = por %p39, %p40
      %p42 = scmp.ne.s32.totalorder %s31, %s34
      %p43 = scmp.eq.s32.totalorder %s26, 1
      %p44 = por %p42, %p43
      %p45 = scmp.ne.s32.totalorder %s34, %s35
      %p46 = scmp.eq.s32.totalorder %s26, 0
      %p47 = por %p45, %p46
      %p48 = scmp.ne.s32.totalorder %s34, %s35
      %p49 = scmp.eq.s32.totalorder %s27, 1
      %p50 = por %p48, %p49
      %p52 = scmp.ne.s32.totalorder %s35, %s51
      %p53 = scmp.eq.s32.totalorder %s27, 0
      %p54 = por %p52, %p53
      %s56 = sadd.s32 %s55, 1
      %p59 = scmp.eq.s32.totalorder %s21, 1
      %p60 = scmp.ne.s32.totalorder %s55, %s57
      %p61 = scmp.eq.s32.totalorder %s21, 0
      %p62 = por %p60, %p61
      %p63 = scmp.ne.s32.totalorder %s55, %s57
      %p64 = scmp.eq.s32.totalorder %s26, 1
      %p65 = por %p63, %p64
      %p66 = scmp.ne.s32.totalorder %s57, %s58
      %p67 = scmp.eq.s32.totalorder %s26, 0
      %p68 = por %p66, %p67
      %p69 = scmp.ne.s32.totalorder %s57, %s58
      %p70 = scmp.eq.s32.totalorder %s27, 1
      %p71 = por %p69, %p70
      %p73 = scmp.ne.s32.totalorder %s58, %s72
      %p74 = scmp.eq.s32.totalorder %s27, 0
      %p75 = por %p73, %p74
      %s77 = sadd.s32 %s76, 1
      %p80 = scmp.eq.s32.totalorder %s21, 1
      %p81 = scmp.ne.s32.totalorder %s76, %s78
      %p82 = scmp.eq.s32.totalorder %s21, 0
      %p83 = por %p81, %p82
      %p84 = scmp.ne.s32.totalorder %s76, %s78
      %p85 = scmp.eq.s32.totalorder %s26, 1
      %p86 = por %p84, %p85
      %p87 = scmp.ne.s32.totalorder %s78, %s79
      %p88 = scmp.eq.s32.totalorder %s26, 0
      %p89 = por %p87, %p88
      %p90 = scmp.ne.s32.totalorder %s78, %s79
      %p91 = scmp.eq.s32.totalorder %s27, 1
      %p92 = por %p90, %p91
      %p94 = scmp.ne.s32.totalorder %s79, %s93
      %p95 = scmp.eq.s32.totalorder %s27, 0
      %p96 = por %p94, %p95
      %s98 = sadd.s32 %s97, 1
      %p101 = scmp.eq.s32.totalorder %s21, 1
      %p102 = scmp.ne.s32.totalorder %s97, %s99
      %p103 = scmp.eq.s32.totalorder %s21, 0
      %p104 = por %p102, %p103
      %p105 = scmp.ne.s32.totalorder %s97, %s99
      %p106 = scmp.eq.s32.totalorder %s26, 1
      %p107 = por %p105, %p106
      %p108 = scmp.ne.s32.totalorder %s99, %s100
      %p109 = scmp.eq.s32.totalorder %s26, 0
      %p110 = por %p108, %p109
      %p111 = scmp.ne.s32.totalorder %s99, %s100
      %p112 = scmp.eq.s32.totalorder %s27, 1
      %p113 = por %p111, %p112
      %p115 = scmp.ne.s32.totalorder %s100, %s114
      %p116 = scmp.eq.s32.totalorder %s27, 0
      %p117 = por %p115, %p116
      %s119 = sadd.s32 %s118, 1
      %p122 = scmp.eq.s32.totalorder %s21, 1
      %p123 = scmp.ne.s32.totalorder %s118, %s120
      %p124 = scmp.eq.s32.totalorder %s21, 0
      %p125 = por %p123, %p124
      %p126 = scmp.ne.s32.totalorder %s118, %s120
      %p127 = scmp.eq.s32.totalorder %s26, 1
      %p128 = por %p126, %p127
      %p129 = scmp.ne.s32.totalorder %s120, %s121
      %p130 = scmp.eq.s32.totalorder %s26, 0
      %p131 = por %p129, %p130
      %p132 = scmp.ne.s32.totalorder %s120, %s121
      %p133 = scmp.eq.s32.totalorder %s27, 1
      %p134 = por %p132, %p133
      %p136 = scmp.ne.s32.totalorder %s121, %s135
      %p137 = scmp.eq.s32.totalorder %s27, 0
      %p138 = por %p136, %p137
      %s140 = sadd.s32 %s139, 1
      %p143 = scmp.eq.s32.totalorder %s21, 1
      %p144 = scmp.ne.s32.totalorder %s139, %s141
      %p145 = scmp.eq.s32.totalorder %s21, 0
      %p146 = por %p144, %p145
      %p147 = scmp.ne.s32.totalorder %s139, %s141
      %p148 = scmp.eq.s32.totalorder %s26, 1
      %p149 = por %p147, %p148
      %p150 = scmp.ne.s32.totalorder %s141, %s142
      %p151 = scmp.eq.s32.totalorder %s26, 0
      %p152 = por %p150, %p151
      %p153 = scmp.ne.s32.totalorder %s141, %s142
      %p154 = scmp.eq.s32.totalorder %s27, 1
      %p155 = por %p153, %p154
      %p157 = scmp.ne.s32.totalorder %s142, %s156
      %p158 = scmp.eq.s32.totalorder %s27, 0
      %p159 = por %p157, %p158
      %s161 = sadd.s32 %s160, 1
      %p164 = scmp.eq.s32.totalorder %s21, 1
      %p165 = scmp.ne.s32.totalorder %s160, %s162
      %p166 = scmp.eq.s32.totalorder %s21, 0
      %p167 = por %p165, %p166
      %p168 = scmp.ne.s32.totalorder %s160, %s162
      %p169 = scmp.eq.s32.totalorder %s26, 1
      %p170 = por %p168, %p169
      %p171 = scmp.ne.s32.totalorder %s162, %s163
      %p172 = scmp.eq.s32.totalorder %s26, 0
      %p173 = por %p171, %p172
      %p174 = scmp.ne.s32.totalorder %s162, %s163
      %p175 = scmp.eq.s32.totalorder %s27, 1
      %p176 = por %p174, %p175
      %p178 = scmp.ne.s32.totalorder %s163, %s177
      %p179 = scmp.eq.s32.totalorder %s27, 0
      %p180 = por %p178, %p179
      %s182 = sadd.s32 %s181, 1
      %p185 = scmp.eq.s32.totalorder %s21, 1
      %p186 = scmp.ne.s32.totalorder %s181, %s183
      %p187 = scmp.eq.s32.totalorder %s21, 0
      %p188 = por %p186, %p187
      %p189 = scmp.ne.s32.totalorder %s181, %s183
      %p190 = scmp.eq.s32.totalorder %s26, 1
      %p191 = por %p189, %p190
      %p192 = scmp.ne.s32.totalorder %s183, %s184
      %p193 = scmp.eq.s32.totalorder %s26, 0
      %p194 = por %p192, %p193
      %p195 = scmp.ne.s32.totalorder %s183, %s184
      %p196 = scmp.eq.s32.totalorder %s27, 1
      %p197 = por %p195, %p196
      %p199 = scmp.ne.s32.totalorder %s184, %s198
      %p200 = scmp.eq.s32.totalorder %s27, 0
      %p201 = por %p199, %p200
      %s203 = sadd.s32 %s202, 1
      %p206 = scmp.eq.s32.totalorder %s21, 1
      %p207 = scmp.ne.s32.totalorder %s202, %s204
      %p208 = scmp.eq.s32.totalorder %s21, 0
      %p209 = por %p207, %p208
      %p210 = scmp.ne.s32.totalorder %s202, %s204
      %p211 = scmp.eq.s32.totalorder %s26, 1
      %p212 = por %p210, %p211
      %p213 = scmp.ne.s32.totalorder %s204, %s205
      %p214 = scmp.eq.s32.totalorder %s26, 0
      %p215 = por %p213, %p214
      %p216 = scmp.ne.s32.totalorder %s204, %s205
      %p217 = scmp.eq.s32.totalorder %s27, 1
      %p218 = por %p216, %p217
      %p220 = scmp.ne.s32.totalorder %s205, %s219
      %p221 = scmp.eq.s32.totalorder %s27, 0
      %p222 = por %p220, %p221
      %s224 = sadd.s32 %s223, 1
      %p227 = scmp.eq.s32.totalorder %s21, 1
      %p228 = scmp.ne.s32.totalorder %s223, %s225
      %p229 = scmp.eq.s32.totalorder %s21, 0
      %p230 = por %p228, %p229
      %p231 = scmp.ne.s32.totalorder %s223, %s225
      %p232 = scmp.eq.s32.totalorder %s26, 1
      %p233 = por %p231, %p232
      %p234 = scmp.ne.s32.totalorder %s225, %s226
      %p235 = scmp.eq.s32.totalorder %s26, 0
      %p236 = por %p234, %p235
      %p237 = scmp.ne.s32.totalorder %s225, %s226
      %p238 = scmp.eq.s32.totalorder %s27, 1
      %p239 = por %p237, %p238
      %p241 = scmp.ne.s32.totalorder %s226, %s240
      %p242 = scmp.eq.s32.totalorder %s27, 0
      %p243 = por %p241, %p242
      %s244 = ssub.s32 %s21, %s28
      %p245 = scmp.eq.s32.totalorder %s244, 0
      %s247 = sadd.s32 %s246, 1
      %s248 = scalar_select %p245, %s246, %s247
      %p251 = pneg %p245
      %p252 = scmp.eq.s32.totalorder %s21, 1
      %p253 = por %p251, %p252
      %p254 = scmp.ne.s32.totalorder %s246, %s249
      %p255 = scmp.eq.s32.totalorder %s21, 0
      %p256 = por %p254, %p255
      %p257 = scmp.ne.s32.totalorder %s246, %s249
      %p258 = scmp.eq.s32.totalorder %s26, 1
      %p259 = por %p257, %p258
      %p260 = scmp.ne.s32.totalorder %s249, %s250
      %p261 = scmp.eq.s32.totalorder %s26, 0
      %p262 = por %p260, %p261
      %p263 = scmp.ne.s32.totalorder %s249, %s250
      %p264 = scmp.eq.s32.totalorder %s27, 1
      %p265 = por %p263, %p264
      %p267 = scmp.ne.s32.totalorder %s250, %s266
      %p268 = scmp.eq.s32.totalorder %s27, 0
      %p269 = por %p267, %p268
      %p270 = scmp.le.s32.totalorder 1, %s21
      %p271 = scmp.lt.s32.totalorder %s21, 3
      %p272 = pnand %p270, %p271
      %p273 = pneg %p272
      // Predicated region
      $region9: #{tpu_custom_call.1} parent=5 // pred_check
        _
      $region10: #{tpu_custom_call.1} parent=5 // pred_check_branch
        %275 = sbr.rel (%p272) target = $region12
      $region11: #{tpu_custom_call.1} parent=5 // pred_region
        %s276 = ssub.s32 %s21, 1
        // Predicated region
        $region13: #{tpu_custom_call.1} parent=11 // pred_check
          %p277 = pneg %p68
        $region14: #{tpu_custom_call.1} parent=11 // pred_check_branch
          %279 = sbr.rel (%p277) target = $region16
        $region15: #{tpu_custom_call.1} parent=11 // pred_region
          %s281 = ssub.s32 256, 256
          %282 = vsyncadd [#allocation5], %s281
          %s283 = sshll.u32 [#allocation4], 4
          %s284 = int_to_ptr.vmem [resolvable:$true] %s283
          %289 = dma.hbm_to_vmem [thread:$0]  %s1, 256, %s284, [#allocation5], 128, 128, 8
        $region16: #{tpu_custom_call.1} parent=11 // pred_fallthru
          _
        // Predicated region
        $region17: #{tpu_custom_call.1} parent=11 // pred_check
          %p290 = pneg %p89
        $region18: #{tpu_custom_call.1} parent=11 // pred_check_branch
          %292 = sbr.rel (%p290) target = $region20
        $region19: #{tpu_custom_call.1} parent=11 // pred_region
          _
        $region20: #{tpu_custom_call.1} parent=11 // pred_fallthru
          _
        // Predicated region
        $region21: #{tpu_custom_call.1} parent=11 // pred_check
          %p293 = pneg %p110
        $region22: #{tpu_custom_call.1} parent=11 // pred_check_branch
          %295 = sbr.rel (%p293) target = $region24
        $region23: #{tpu_custom_call.1} parent=11 // pred_region
          _
        $region24: #{tpu_custom_call.1} parent=11 // pred_fallthru
          _
        // Predicated region
        $region25: #{tpu_custom_call.1} parent=11 // pred_check
          %p296 = pneg %p131
        $region26: #{tpu_custom_call.1} parent=11 // pred_check_branch
          %298 = sbr.rel (%p296) target = $region28
        $region27: #{tpu_custom_call.1} parent=11 // pred_region
          _
        $region28: #{tpu_custom_call.1} parent=11 // pred_fallthru
          _
        // Predicated region
        $region29: #{tpu_custom_call.1} parent=11 // pred_check
          %p299 = pneg %p152
        $region30: #{tpu_custom_call.1} parent=11 // pred_check_branch
          %301 = sbr.rel (%p299) target = $region32
        $region31: #{tpu_custom_call.1} parent=11 // pred_region
          _
        $region32: #{tpu_custom_call.1} parent=11 // pred_fallthru
          _
        // Predicated region
        $region33: #{tpu_custom_call.1} parent=11 // pred_check
          %p302 = pneg %p173
        $region34: #{tpu_custom_call.1} parent=11 // pred_check_branch
          %304 = sbr.rel (%p302) target = $region36
        $region35: #{tpu_custom_call.1} parent=11 // pred_region
          %s306 = ssub.s32 128, 128
          %307 = vsyncadd [#allocation8], %s306
          %s309 = sshll.u32 [#allocation7], 4
          %s310 = int_to_ptr.vmem [resolvable:$true] %s309
          %312 = dma.hbm_to_vmem [thread:$0]  %s6, 128, %s310, [#allocation8]
        $region36: #{tpu_custom_call.1} parent=11 // pred_fallthru
          _
        // Predicated region
        $region37: #{tpu_custom_call.1} parent=11 // pred_check
          %p313 = pneg %p194
        $region38: #{tpu_custom_call.1} parent=11 // pred_check_branch
          %315 = sbr.rel (%p313) target = $region40
        $region39: #{tpu_custom_call.1} parent=11 // pred_region
          %s317 = ssub.s32 16, 16
          %318 = vsyncadd [#allocation8], %s317
          %s320 = sshll.u32 [#allocation9], 4
          %s321 = int_to_ptr.vmem [resolvable:$true] %s320
          %323 = dma.hbm_to_vmem [thread:$0]  %s7, 16, %s321, [#allocation8]
        $region40: #{tpu_custom_call.1} parent=11 // pred_fallthru
          _
        // Predicated region
        $region41: #{tpu_custom_call.1} parent=11 // pred_check
          %p324 = pneg %p215
        $region42: #{tpu_custom_call.1} parent=11 // pred_check_branch
          %326 = sbr.rel (%p324) target = $region44
        $region43: #{tpu_custom_call.1} parent=11 // pred_region
          _
        $region44: #{tpu_custom_call.1} parent=11 // pred_fallthru
          _
        // Predicated region
        $region45: #{tpu_custom_call.1} parent=11 // pred_check
          %p327 = pneg %p236
        $region46: #{tpu_custom_call.1} parent=11 // pred_check_branch
          %329 = sbr.rel (%p327) target = $region48
        $region47: #{tpu_custom_call.1} parent=11 // pred_region
          _
        $region48: #{tpu_custom_call.1} parent=11 // pred_fallthru
          _
      $region12: #{tpu_custom_call.1} parent=5 // pred_fallthru
        _
      %p330 = scmp.lt.s32.totalorder %s21, 2
      // Predicated region
      $region49: #{tpu_custom_call.1} parent=5 // pred_check
        %p331 = pneg %p330
      $region50: #{tpu_custom_call.1} parent=5 // pred_check_branch
        %333 = sbr.rel (%p331) target = $region52
      $region51: #{tpu_custom_call.1} parent=5 // pred_region
        // Predicated region
        $region53: #{tpu_custom_call.1} parent=51 // pred_check
          %p334 = pneg %p41
        $region54: #{tpu_custom_call.1} parent=51 // pred_check_branch
          %336 = sbr.rel (%p334) target = $region56
        $region55: #{tpu_custom_call.1} parent=51 // pred_region
          %p337 = scmp.lt.s32.totalorder %s21, 1
          %s338 = scalar_select %p337, %s21, 1
          %s339 = smul.addr %s338, 8
          %s340 = scalar_lea.vmem %s0, %s339
        $region56: #{tpu_custom_call.1} parent=51 // pred_fallthru
          _
      $region52: #{tpu_custom_call.1} parent=5 // pred_fallthru
        _
      %p341 = scmp.le.s32.totalorder 1, %s21
      %p342 = scmp.lt.s32.totalorder %s21, 3
      %p343 = pnand %p341, %p342
      %p344 = pneg %p343
      // Predicated region
      $region57: #{tpu_custom_call.1} parent=5 // pred_check
        _
      $region58: #{tpu_custom_call.1} parent=5 // pred_check_branch
        %346 = sbr.rel (%p343) target = $region60
      $region59: #{tpu_custom_call.1} parent=5 // pred_region
        %s347 = ssub.s32 %s21, 1
        // Predicated region
        $region61: #{tpu_custom_call.1} parent=59 // pred_check
          %p348 = pneg %p68
        $region62: #{tpu_custom_call.1} parent=59 // pred_check_branch
          %350 = sbr.rel (%p348) target = $region64
        $region63: #{tpu_custom_call.1} parent=59 // pred_region
          %351 = dma.done [#allocation5], 256
        $region64: #{tpu_custom_call.1} parent=59 // pred_fallthru
          _
        // Predicated region
        $region65: #{tpu_custom_call.1} parent=59 // pred_check
          %p352 = pneg %p173
        $region66: #{tpu_custom_call.1} parent=59 // pred_check_branch
          %354 = sbr.rel (%p352) target = $region68
        $region67: #{tpu_custom_call.1} parent=59 // pred_region
          %355 = dma.done [#allocation8], 128
        $region68: #{tpu_custom_call.1} parent=59 // pred_fallthru
          _
        // Predicated region
        $region69: #{tpu_custom_call.1} parent=59 // pred_check
          %p356 = pneg %p194
        $region70: #{tpu_custom_call.1} parent=59 // pred_check_branch
          %358 = sbr.rel (%p356) target = $region72
        $region71: #{tpu_custom_call.1} parent=59 // pred_region
          %359 = dma.done [#allocation8], 16
        $region72: #{tpu_custom_call.1} parent=59 // pred_fallthru
          _
        %p360 = scmp.lt.s32.totalorder %s26, 1
        %s361 = scalar_select %p360, %s26, 1
        %s362 = smul.addr %s361, 8
        %s363 = scalar_lea.vmem %s0, %s362
        %p364 = pneg %p47
        %p365 = pneg %p44
        %p366 = pneg %p68
        %p367 = pneg %p65
        %p368 = pneg %p89
        %p369 = pneg %p86
        %p370 = pneg %p110
        %p371 = pneg %p107
        %p372 = pneg %p131
        %p373 = pneg %p128
        %p374 = pneg %p152
        %p375 = pneg %p149
        %p376 = pneg %p173
        %p377 = pneg %p170
        %p378 = pneg %p194
        %p379 = pneg %p191
        %p380 = pneg %p215
        %p381 = pneg %p212
        %p382 = pneg %p236
        %p383 = pneg %p233
        %p384 = pneg %p262
        %p385 = pneg %p259
        %s386 = sand.u32 %s249, 1
        %s387 = scalar_lea.sflag [#allocation6], %s386
        %s388 = sand.u32 %s249, 1
        %s389 = smul.addr %s388, 8
        %s390 = scalar_lea.vmem [#allocation10], %s389
        %p391 = scmp.lt.s32.totalorder %s26, 1
        %s392 = scalar_select %p391, %s26, 1
        %s393 = smul.addr %s392, 8
        %s394 = scalar_lea.vmem %s0, %s393
        %v395 = vld [vmem:[%s394] sm:$0xff]
        %v396 = vld [vmem:[#allocation4] sm:$0xff]
        %v397 = vld [vmem:[#allocation4 + $0x8] sm:$0xff]
        %v398 = vld [vmem:[%s2] sm:$0x1]
        %v400 = vlaneseq
        %v401 = vshrl.u32 %v400, 7
        %v402 = vsub.s32 0, %v401
        %v403 = vrot.slane %v398, %v402
        %vm405 = vcmask 130048
        %v407 = vsel %vm405, %v395, 0
        %409 = vmatprep.subr.mxu0 0.0
        %410 = vmatpush1.msra.mxu0 %v396
        %411 = vmatprep.subr.mxu0 0.0
        %412 = vmatpush1.msra.mxu0 %v397
        %413 = vmatprep.subr.mxu0 0.0
        %414 = vmatpush1.msra.mxu0 0.0
        %415 = vmatprep.subr.mxu0 0.0
        %416 = vmatpush1.msra.mxu0 0.0
        %417 = vmatprep.subr.mxu0 0.0
        %418 = vmatpush1.msra.mxu0 0.0
        %419 = vmatprep.subr.mxu0 0.0
        %420 = vmatpush1.msra.mxu0 0.0
        %421 = vmatprep.subr.mxu0 0.0
        %422 = vmatpush1.msra.mxu0 0.0
        %423 = vmatprep.subr.mxu0 0.0
        %424 = vmatpush1.msra.mxu0 0.0
        %425 = vmatprep.subr.mxu0 0.0
        %426 = vmatpush1.msra.mxu0 0.0
        %427 = vmatprep.subr.mxu0 0.0
        %428 = vmatpush1.msra.mxu0 0.0
        %429 = vmatprep.subr.mxu0 0.0
        %430 = vmatpush1.msra.mxu0 0.0
        %431 = vmatprep.subr.mxu0 0.0
        %432 = vmatpush1.msra.mxu0 0.0
        %433 = vmatprep.subr.mxu0 0.0
        %434 = vmatpush1.msra.mxu0 0.0
        %435 = vmatprep.subr.mxu0 0.0
        %436 = vmatpush1.msra.mxu0 0.0
        %437 = vmatprep.subr.mxu0 0.0
        %438 = vmatpush1.msra.mxu0 0.0
        %439 = vmatprep.subr.mxu0 0.0
        %440 = vmatpush1.msra.mxu0 0.0
        %441 = vmatprep.subr.mxu0 0.0
        %442 = vmatpush1.msra.mxu0 0.0
        %443 = vmatprep.subr.mxu0 0.0
        %444 = vmatpush1.msra.mxu0 0.0
        %445 = vmatprep.subr.mxu0 0.0
        %446 = vmatpush1.msra.mxu0 0.0
        %447 = vmatprep.subr.mxu0 0.0
        %448 = vmatpush1.msra.mxu0 0.0
        %449 = vmatprep.subr.mxu0 0.0
        %450 = vmatpush1.msra.mxu0 0.0
        %451 = vmatprep.subr.mxu0 0.0
        %452 = vmatpush1.msra.mxu0 0.0
        %453 = vmatprep.subr.mxu0 0.0
        %454 = vmatpush1.msra.mxu0 0.0
        %455 = vmatprep.subr.mxu0 0.0
        %456 = vmatpush1.msra.mxu0 0.0
        %457 = vmatprep.subr.mxu0 0.0
        %458 = vmatpush1.msra.mxu0 0.0
        %459 = vmatprep.subr.mxu0 0.0
        %460 = vmatpush1.msra.mxu0 0.0
        %461 = vmatprep.subr.mxu0 0.0
        %462 = vmatpush1.msra.mxu0 0.0
        %463 = vmatprep.subr.mxu0 0.0
        %464 = vmatpush1.msra.mxu0 0.0
        %465 = vmatprep.subr.mxu0 0.0
        %466 = vmatpush1.msra.mxu0 0.0
        %467 = vmatprep.subr.mxu0 0.0
        %468 = vmatpush1.msra.mxu0 0.0
        %469 = vmatprep.subr.mxu0 0.0
        %470 = vmatpush1.msra.mxu0 0.0
        %471 = vmatprep.subr.mxu0 0.0
        %472 = vmatpush1.msra.mxu0 0.0
        %473 = vmatprep.mubr.f32.mxu0 0.0
        %474 = vmatmul.mubr.f32.gmra.mrb[0].mxu0 %v407
        %v475 = vpop.f32.mrb[0].mxu0
        %v476 = vadd.f32 %v403, %v475
        %v477 = vpop.f32.mrb[0].mxu0
        %478 = vdwg.mxu0
        %v479 = vmul.f32 %v476, 0.5
        %v480 = vmul.f32 %v476, 0.70710677
        %v481 = verf.f32.pop %v480
        %v482 = vadd.f32 %v481, 1.0
        %v483 = vmul.f32 %v479, %v482
        %v484 = vld [vmem:[%s3] sm:$0xff]
        %v485 = vld [vmem:[%s3 + $0x8] sm:$0xff]
        %v486 = vld [vmem:[%s4] sm:$0x1]
        %v488 = vlaneseq
        %v489 = vshrl.u32 %v488, 7
        %v490 = vsub.s32 0, %v489
        %v491 = vrot.slane %v486, %v490
        %v494 = vsel %vm405, %v483, 0
        %496 = vmatprep.subr.mxu0 0.0
        %497 = vmatpush1.msra.mxu0 %v484
        %498 = vmatprep.subr.mxu0 0.0
        %499 = vmatpush1.msra.mxu0 %v485
        %500 = vmatprep.subr.mxu0 0.0
        %501 = vmatpush1.msra.mxu0 0.0
        %502 = vmatprep.subr.mxu0 0.0
        %503 = vmatpush1.msra.mxu0 0.0
        %504 = vmatprep.subr.mxu0 0.0
        %505 = vmatpush1.msra.mxu0 0.0
        %506 = vmatprep.subr.mxu0 0.0
        %507 = vmatpush1.msra.mxu0 0.0
        %508 = vmatprep.subr.mxu0 0.0
        %509 = vmatpush1.msra.mxu0 0.0
        %510 = vmatprep.subr.mxu0 0.0
        %511 = vmatpush1.msra.mxu0 0.0
        %512 = vmatprep.subr.mxu0 0.0
        %513 = vmatpush1.msra.mxu0 0.0
        %514 = vmatprep.subr.mxu0 0.0
        %515 = vmatpush1.msra.mxu0 0.0
        %516 = vmatprep.subr.mxu0 0.0
        %517 = vmatpush1.msra.mxu0 0.0
        %518 = vmatprep.subr.mxu0 0.0
        %519 = vmatpush1.msra.mxu0 0.0
        %520 = vmatprep.subr.mxu0 0.0
        %521 = vmatpush1.msra.mxu0 0.0
        %522 = vmatprep.subr.mxu0 0.0
        %523 = vmatpush1.msra.mxu0 0.0
        %524 = vmatprep.subr.mxu0 0.0
        %525 = vmatpush1.msra.mxu0 0.0
        %526 = vmatprep.subr.mxu0 0.0
        %527 = vmatpush1.msra.mxu0 0.0
        %528 = vmatprep.subr.mxu0 0.0
        %529 = vmatpush1.msra.mxu0 0.0
        %530 = vmatprep.subr.mxu0 0.0
        %531 = vmatpush1.msra.mxu0 0.0
        %532 = vmatprep.subr.mxu0 0.0
        %533 = vmatpush1.msra.mxu0 0.0
        %534 = vmatprep.subr.mxu0 0.0
        %535 = vmatpush1.msra.mxu0 0.0
        %536 = vmatprep.subr.mxu0 0.0
        %537 = vmatpush1.msra.mxu0 0.0
        %538 = vmatprep.subr.mxu0 0.0
        %539 = vmatpush1.msra.mxu0 0.0
        %540 = vmatprep.subr.mxu0 0.0
        %541 = vmatpush1.msra.mxu0 0.0
        %542 = vmatprep.subr.mxu0 0.0
        %543 = vmatpush1.msra.mxu0 0.0
        %544 = vmatprep.subr.mxu0 0.0
        %545 = vmatpush1.msra.mxu0 0.0
        %546 = vmatprep.subr.mxu0 0.0
        %547 = vmatpush1.msra.mxu0 0.0
        %548 = vmatprep.subr.mxu0 0.0
        %549 = vmatpush1.msra.mxu0 0.0
        %550 = vmatprep.subr.mxu0 0.0
        %551 = vmatpush1.msra.mxu0 0.0
        %552 = vmatprep.subr.mxu0 0.0
        %553 = vmatpush1.msra.mxu0 0.0
        %554 = vmatprep.subr.mxu0 0.0
        %555 = vmatpush1.msra.mxu0 0.0
        %556 = vmatprep.subr.mxu0 0.0
        %557 = vmatpush1.msra.mxu0 0.0
        %558 = vmatprep.subr.mxu0 0.0
        %559 = vmatpush1.msra.mxu0 0.0
        %560 = vmatprep.mubr.f32.mxu0 0.0
        %561 = vmatmul.mubr.f32.gmra.mrb[0].mxu0 %v494
        %v562 = vpop.f32.mrb[0].mxu0
        %v563 = vadd.f32 %v491, %v562
        %v564 = vpop.f32.mrb[0].mxu0
        %565 = vdwg.mxu0
        %vm566 = vcmask 64512
        %567 = vst.msk [vmem:[#allocation2] sm:$0xff] %vm566, %v563
        %v568 = vld [vmem:[#allocation2] sm:$0xf]
        %vm569 = vcmask 60416
        %v570 = vsel %vm569, %v568, -inf
        %v571 = vrot.slane %v570, 4
        %v572 = vmax.f32 %v570, %v571
        %v573 = vrot.slane %v572, 2
        %v574 = vmax.f32 %v572, %v573
        %v575 = vrot.slane %v574, 1
        %v576 = vmax.f32 %v574, %v575
        %v577 = vsub.f32 %v568, %v576
        %v578 = vmul.f32 %v577, 1.442695
        %v579 = vpow.pop %v578
        %v580 = vmul.f32 %v568, %v579
        %v581 = vsel %vm569, %v580, 0.0
        %v582 = vrot.slane %v581, 4
        %v583 = vadd.f32 %v581, %v582
        %v584 = vrot.slane %v583, 2
        %v585 = vadd.f32 %v583, %v584
        %v586 = vrot.slane %v585, 1
        %v587 = vadd.f32 %v585, %v586
        %v588 = vsel %vm569, %v579, 0.0
        %v589 = vrot.slane %v588, 4
        %v590 = vadd.f32 %v588, %v589
        %v591 = vrot.slane %v590, 2
        %v592 = vadd.f32 %v590, %v591
        %v593 = vrot.slane %v592, 1
        %v594 = vadd.f32 %v592, %v593
        %v595 = vrcp.pop %v594
        %v596 = vmul.f32 %v587, %v595
        %597 = vst.msk [vmem:[#allocation3] sm:$0xff] %vm566, %v596
        %v598 = vld [vmem:[%s5] sm:$0xff]
        %v599 = vld [vmem:[%s5 + $0x8] sm:$0xff]
        %v600 = vld [vmem:[#allocation3] sm:$0xff]
        %v601 = vld [vmem:[#allocation7] sm:$0xff]
        %v603 = vsel %vm566, %v600, 0
        %605 = vmatprep.subr.mxu0 0.0
        %606 = vmatpush1.msra.mxu0 %v601
        %607 = vmatprep.subr.mxu0 0.0
        %608 = vmatpush1.msra.mxu0 0.0
        %609 = vmatprep.subr.mxu0 0.0
        %610 = vmatpush1.msra.mxu0 0.0
        %611 = vmatprep.subr.mxu0 0.0
        %612 = vmatpush1.msra.mxu0 0.0
        %613 = vmatprep.subr.mxu0 0.0
        %614 = vmatpush1.msra.mxu0 0.0
        %615 = vmatprep.subr.mxu0 0.0
        %616 = vmatpush1.msra.mxu0 0.0
        %617 = vmatprep.subr.mxu0 0.0
        %618 = vmatpush1.msra.mxu0 0.0
        %619 = vmatprep.subr.mxu0 0.0
        %620 = vmatpush1.msra.mxu0 0.0
        %621 = vmatprep.subr.mxu0 0.0
        %622 = vmatpush1.msra.mxu0 0.0
        %623 = vmatprep.subr.mxu0 0.0
        %624 = vmatpush1.msra.mxu0 0.0
        %625 = vmatprep.subr.mxu0 0.0
        %626 = vmatpush1.msra.mxu0 0.0
        %627 = vmatprep.subr.mxu0 0.0
        %628 = vmatpush1.msra.mxu0 0.0
        %629 = vmatprep.subr.mxu0 0.0
        %630 = vmatpush1.msra.mxu0 0.0
        %631 = vmatprep.subr.mxu0 0.0
        %632 = vmatpush1.msra.mxu0 0.0
        %633 = vmatprep.subr.mxu0 0.0
        %634 = vmatpush1.msra.mxu0 0.0
        %635 = vmatprep.subr.mxu0 0.0
        %636 = vmatpush1.msra.mxu0 0.0
        %637 = vmatprep.subr.mxu0 0.0
        %638 = vmatpush1.msra.mxu0 0.0
        %639 = vmatprep.subr.mxu0 0.0
        %640 = vmatpush1.msra.mxu0 0.0
        %641 = vmatprep.subr.mxu0 0.0
        %642 = vmatpush1.msra.mxu0 0.0
        %643 = vmatprep.subr.mxu0 0.0
        %644 = vmatpush1.msra.mxu0 0.0
        %645 = vmatprep.subr.mxu0 0.0
        %646 = vmatpush1.msra.mxu0 0.0
        %647 = vmatprep.subr.mxu0 0.0
        %648 = vmatpush1.msra.mxu0 0.0
        %649 = vmatprep.subr.mxu0 0.0
        %650 = vmatpush1.msra.mxu0 0.0
        %651 = vmatprep.subr.mxu0 0.0
        %652 = vmatpush1.msra.mxu0 0.0
        %653 = vmatprep.subr.mxu0 0.0
        %654 = vmatpush1.msra.mxu0 0.0
        %655 = vmatprep.subr.mxu0 0.0
        %656 = vmatpush1.msra.mxu0 0.0
        %657 = vmatprep.subr.mxu0 0.0
        %658 = vmatpush1.msra.mxu0 0.0
        %659 = vmatprep.subr.mxu0 0.0
        %660 = vmatpush1.msra.mxu0 0.0
        %661 = vmatprep.subr.mxu0 0.0
        %662 = vmatpush1.msra.mxu0 0.0
        %663 = vmatprep.subr.mxu0 0.0
        %664 = vmatpush1.msra.mxu0 0.0
        %665 = vmatprep.subr.mxu0 0.0
        %666 = vmatpush1.msra.mxu0 0.0
        %667 = vmatprep.subr.mxu0 0.0
        %668 = vmatpush1.msra.mxu0 0.0
        %669 = vmatprep.mubr.f32.mxu0 0.0
        %670 = vmatmul.mubr.f32.gmra.mrb[0].mxu0 %v603
        %v671 = vpop.f32.mrb[0].mxu0
        %v672 = vadd.f32 0.0, %v671
        %v673 = vpop.f32.mrb[0].mxu0
        %674 = vdwg.mxu0
        %675 = vmatprep.subr.mxu0 0.0
        %676 = vmatpush1.msra.mxu0 %v598
        %677 = vmatprep.subr.mxu0 0.0
        %678 = vmatpush1.msra.mxu0 %v599
        %679 = vmatprep.subr.mxu0 0.0
        %680 = vmatpush1.msra.mxu0 0.0
        %681 = vmatprep.subr.mxu0 0.0
        %682 = vmatpush1.msra.mxu0 0.0
        %683 = vmatprep.subr.mxu0 0.0
        %684 = vmatpush1.msra.mxu0 0.0
        %685 = vmatprep.subr.mxu0 0.0
        %686 = vmatpush1.msra.mxu0 0.0
        %687 = vmatprep.subr.mxu0 0.0
        %688 = vmatpush1.msra.mxu0 0.0
        %689 = vmatprep.subr.mxu0 0.0
        %690 = vmatpush1.msra.mxu0 0.0
        %691 = vmatprep.subr.mxu0 0.0
        %692 = vmatpush1.msra.mxu0 0.0
        %693 = vmatprep.subr.mxu0 0.0
        %694 = vmatpush1.msra.mxu0 0.0
        %695 = vmatprep.subr.mxu0 0.0
        %696 = vmatpush1.msra.mxu0 0.0
        %697 = vmatprep.subr.mxu0 0.0
        %698 = vmatpush1.msra.mxu0 0.0
        %699 = vmatprep.subr.mxu0 0.0
        %700 = vmatpush1.msra.mxu0 0.0
        %701 = vmatprep.subr.mxu0 0.0
        %702 = vmatpush1.msra.mxu0 0.0
        %703 = vmatprep.subr.mxu0 0.0
        %704 = vmatpush1.msra.mxu0 0.0
        %705 = vmatprep.subr.mxu0 0.0
        %706 = vmatpush1.msra.mxu0 0.0
        %707 = vmatprep.subr.mxu0 0.0
        %708 = vmatpush1.msra.mxu0 0.0
        %709 = vmatprep.subr.mxu0 0.0
        %710 = vmatpush1.msra.mxu0 0.0
        %711 = vmatprep.subr.mxu0 0.0
        %712 = vmatpush1.msra.mxu0 0.0
        %713 = vmatprep.subr.mxu0 0.0
        %714 = vmatpush1.msra.mxu0 0.0
        %715 = vmatprep.subr.mxu0 0.0
        %716 = vmatpush1.msra.mxu0 0.0
        %717 = vmatprep.subr.mxu0 0.0
        %718 = vmatpush1.msra.mxu0 0.0
        %719 = vmatprep.subr.mxu0 0.0
        %720 = vmatpush1.msra.mxu0 0.0
        %721 = vmatprep.subr.mxu0 0.0
        %722 = vmatpush1.msra.mxu0 0.0
        %723 = vmatprep.subr.mxu0 0.0
        %724 = vmatpush1.msra.mxu0 0.0
        %725 = vmatprep.subr.mxu0 0.0
        %726 = vmatpush1.msra.mxu0 0.0
        %727 = vmatprep.subr.mxu0 0.0
        %728 = vmatpush1.msra.mxu0 0.0
        %729 = vmatprep.subr.mxu0 0.0
        %730 = vmatpush1.msra.mxu0 0.0
        %731 = vmatprep.subr.mxu0 0.0
        %732 = vmatpush1.msra.mxu0 0.0
        %733 = vmatprep.subr.mxu0 0.0
        %734 = vmatpush1.msra.mxu0 0.0
        %735 = vmatprep.subr.mxu0 0.0
        %736 = vmatpush1.msra.mxu0 0.0
        %737 = vmatprep.subr.mxu0 0.0
        %738 = vmatpush1.msra.mxu0 0.0
        %739 = vmatprep.mubr.f32.mxu0 0.0
        %740 = vmatmul.mubr.f32.gmra.mrb[0].mxu0 %v407
        %v741 = vpop.f32.mrb[0].mxu0
        %v742 = vadd.f32 %v672, %v741
        %v743 = vpop.f32.mrb[0].mxu0
        %744 = vdwg.mxu0
        %v745 = vld [vmem:[#allocation9] sm:$0x1]
        %v747 = vlaneseq
        %v748 = vshrl.u32 %v747, 7
        %v749 = vsub.s32 0, %v748
        %v750 = vrot.slane %v745, %v749
        %v752 = vadd.f32 %v742, %v750
        %v753 = vmul.f32 %v752, 0.5
        %v754 = vmul.f32 %v752, 0.70710677
        %v755 = verf.f32.pop %v754
        %v756 = vadd.f32 %v755, 1.0
        %v757 = vmul.f32 %v753, %v756
        %v758 = vld [vmem:[%s8] sm:$0xff]
        %v759 = vld [vmem:[%s8 + $0x8] sm:$0xff]
        %v760 = vld [vmem:[%s9] sm:$0x1]
        %v762 = vlaneseq
        %v763 = vshrl.u32 %v762, 7
        %v764 = vsub.s32 0, %v763
        %v765 = vrot.slane %v760, %v764
        %v768 = vsel %vm405, %v757, 0
        %770 = vmatprep.subr.mxu0 0.0
        %771 = vmatpush1.msra.mxu0 %v758
        %772 = vmatprep.subr.mxu0 0.0
        %773 = vmatpush1.msra.mxu0 %v759
        %774 = vmatprep.subr.mxu0 0.0
        %775 = vmatpush1.msra.mxu0 0.0
        %776 = vmatprep.subr.mxu0 0.0
        %777 = vmatpush1.msra.mxu0 0.0
        %778 = vmatprep.subr.mxu0 0.0
        %779 = vmatpush1.msra.mxu0 0.0
        %780 = vmatprep.subr.mxu0 0.0
        %781 = vmatpush1.msra.mxu0 0.0
        %782 = vmatprep.subr.mxu0 0.0
        %783 = vmatpush1.msra.mxu0 0.0
        %784 = vmatprep.subr.mxu0 0.0
        %785 = vmatpush1.msra.mxu0 0.0
        %786 = vmatprep.subr.mxu0 0.0
        %787 = vmatpush1.msra.mxu0 0.0
        %788 = vmatprep.subr.mxu0 0.0
        %789 = vmatpush1.msra.mxu0 0.0
        %790 = vmatprep.subr.mxu0 0.0
        %791 = vmatpush1.msra.mxu0 0.0
        %792 = vmatprep.subr.mxu0 0.0
        %793 = vmatpush1.msra.mxu0 0.0
        %794 = vmatprep.subr.mxu0 0.0
        %795 = vmatpush1.msra.mxu0 0.0
        %796 = vmatprep.subr.mxu0 0.0
        %797 = vmatpush1.msra.mxu0 0.0
        %798 = vmatprep.subr.mxu0 0.0
        %799 = vmatpush1.msra.mxu0 0.0
        %800 = vmatprep.subr.mxu0 0.0
        %801 = vmatpush1.msra.mxu0 0.0
        %802 = vmatprep.subr.mxu0 0.0
        %803 = vmatpush1.msra.mxu0 0.0
        %804 = vmatprep.subr.mxu0 0.0
        %805 = vmatpush1.msra.mxu0 0.0
        %806 = vmatprep.subr.mxu0 0.0
        %807 = vmatpush1.msra.mxu0 0.0
        %808 = vmatprep.subr.mxu0 0.0
        %809 = vmatpush1.msra.mxu0 0.0
        %810 = vmatprep.subr.mxu0 0.0
        %811 = vmatpush1.msra.mxu0 0.0
        %812 = vmatprep.subr.mxu0 0.0
        %813 = vmatpush1.msra.mxu0 0.0
        %814 = vmatprep.subr.mxu0 0.0
        %815 = vmatpush1.msra.mxu0 0.0
        %816 = vmatprep.subr.mxu0 0.0
        %817 = vmatpush1.msra.mxu0 0.0
        %818 = vmatprep.subr.mxu0 0.0
        %819 = vmatpush1.msra.mxu0 0.0
        %820 = vmatprep.subr.mxu0 0.0
        %821 = vmatpush1.msra.mxu0 0.0
        %822 = vmatprep.subr.mxu0 0.0
        %823 = vmatpush1.msra.mxu0 0.0
        %824 = vmatprep.subr.mxu0 0.0
        %825 = vmatpush1.msra.mxu0 0.0
        %826 = vmatprep.subr.mxu0 0.0
        %827 = vmatpush1.msra.mxu0 0.0
        %828 = vmatprep.subr.mxu0 0.0
        %829 = vmatpush1.msra.mxu0 0.0
        %830 = vmatprep.subr.mxu0 0.0
        %831 = vmatpush1.msra.mxu0 0.0
        %832 = vmatprep.subr.mxu0 0.0
        %833 = vmatpush1.msra.mxu0 0.0
        %834 = vmatprep.mubr.f32.mxu0 0.0
        %835 = vmatmul.mubr.f32.gmra.mrb[0].mxu0 %v768
        %v836 = vpop.f32.mrb[0].mxu0
        %v837 = vadd.f32 %v765, %v836
        %v838 = vpop.f32.mrb[0].mxu0
        %839 = vdwg.mxu0
        %840 = vst.msk [vmem:[%s390] sm:$0xff] %vm405, %v837
        %s841 = sand.u32 %s249, 1
        %s842 = scalar_lea.sflag [#allocation6], %s841
        %s843 = sand.u32 %s249, 1
        %s844 = smul.addr %s843, 8
        %s845 = scalar_lea.vmem [#allocation10], %s844
        // Predicated region
        $region73: #{tpu_custom_call.1} parent=59 // pred_check
          %p846 = pneg %p259
        $region74: #{tpu_custom_call.1} parent=59 // pred_check_branch
          %848 = sbr.rel (%p846) target = $region76
        $region75: #{tpu_custom_call.1} parent=59 // pred_region
          %s850 = ssub.s32 128, 128
          %851 = vsyncadd %s842, %s850
          %s852 = smul.addr %s26, 128
          %s853 = scalar_lea.hbm %s10, %s852
          %s855 = sshll.u32 %s845, 4
          %s856 = int_to_ptr.vmem [resolvable:$true] %s855
          %858 = dma.vmem_to_hbm [thread:$0]  %s856, 128, %s853, %s842
        $region76: #{tpu_custom_call.1} parent=59 // pred_fallthru
          _
      $region60: #{tpu_custom_call.1} parent=5 // pred_fallthru
        _
      %p859 = scmp.le.s32.totalorder 2, %s21
      // Predicated region
      $region77: #{tpu_custom_call.1} parent=5 // pred_check
        %p860 = pneg %p859
      $region78: #{tpu_custom_call.1} parent=5 // pred_check_branch
        %862 = sbr.rel (%p860) target = $region80
      $region79: #{tpu_custom_call.1} parent=5 // pred_region
        %s863 = ssub.s32 %s21, 2
        // Predicated region
        $region81: #{tpu_custom_call.1} parent=79 // pred_check
          %p864 = pneg %p265
        $region82: #{tpu_custom_call.1} parent=79 // pred_check_branch
          %866 = sbr.rel (%p864) target = $region84
        $region83: #{tpu_custom_call.1} parent=79 // pred_region
          %s867 = sand.u32 %s250, 1
          %s868 = scalar_lea.sflag [#allocation6], %s867
          %s869 = sand.u32 %s250, 1
          %s870 = smul.addr %s869, 8
          %s871 = scalar_lea.vmem [#allocation10], %s870
          %872 = dma.done %s868, 128
        $region84: #{tpu_custom_call.1} parent=79 // pred_fallthru
          _
      $region80: #{tpu_custom_call.1} parent=5 // pred_fallthru
        _
    $region6: #{tpu_custom_call.1} parent=1 // loop_footer
      %s25 = sadd.s32 1, %s21
    $region7: #{tpu_custom_call.1} parent=1 // loop_footer_branch
      %20 = sbr.rel target = $region3
    $region8: #{tpu_custom_call.1} parent=1 // loop_exit
      _
    %873 = vsyncpa [#allocation5], 1
    %s874 = scalar_lea.sflag [#allocation5], 1
    %875 = vsyncpa %s874, 1
    %876 = vsyncpa [#allocation8], 1
    %877 = vsyncpa [#allocation6], 1
    %s878 = scalar_lea.sflag [#allocation6], 1
    %879 = vsyncpa %s878, 1

</llo_original>
